<compile_context>
chip_gen: v7x
topology: tpu7x:2x2x1
jax: 0.10.0
libtpu: 0.0.40
codegen_flags: <defaults>
</compile_context>

<pallas_src>
import math
import numpy as np
import jax
import jax.numpy as jnp
from jax import lax
from jax.experimental import pallas as pl
from jax.experimental.pallas import tpu as pltpu

NUM_HEADS = 4       # SelfAttention default num_heads
HIDDEN_DIM = 16     # SelfAttention default hidden_dim
LN_EPS = 1e-5


# -------------------- shared numerics (kernel AND reference) --------------------
def _mm(a, b):
    """Matmul with bf16 operands, f32 accumulation (MXU-native)."""
    return jnp.dot(a.astype(jnp.bfloat16), b.astype(jnp.bfloat16),
                   preferred_element_type=jnp.float32)


def _bmm(eq, a, b):
    """Single-leading-batch-dim einsum with bf16 operands, f32 accumulation."""
    return jnp.einsum(eq, a.astype(jnp.bfloat16), b.astype(jnp.bfloat16),
                      preferred_element_type=jnp.float32)


def _softplus(x):
    return jnp.maximum(x, 0.0) + jnp.log(1.0 + jnp.exp(-jnp.abs(x)))


def _mish(x):
    return x * jnp.tanh(_softplus(x))


# -------------------- host-side parameter packing --------------------
def _pack_slab(blocks, dtype, row_align):
    """Pack named 2-D arrays into one (rows, 128) slab of `dtype`.

    Each block starts on a `row_align`-aligned row (8 for f32, 16 for bf16) so
    in-kernel slices stay sublane-tile aligned.
    """
    offs, chunks, row = {}, [], 0
    for name, a in blocks.items():
        a = np.asarray(a, np.float32)
        assert a.ndim == 2 and a.shape[1] <= 128, (name, a.shape)
        nr, nc = a.shape
        nr_pad = ((nr + row_align - 1) // row_align) * row_align
        buf = np.zeros((nr_pad, 128), np.float32)
        buf[:nr, :nc] = a
        offs[name] = (row, nr, nc)
        chunks.append(buf)
        row += nr_pad
    slab = np.concatenate(chunks, axis=0).astype(dtype)
    return jnp.asarray(slab), offs


def _prepare(p, B, L):
    """Pack raw (PyTorch-layout) params into the two kernel slabs. Runs once."""
    n_sc, n_in, k_main = np.asarray(p['w_pre']).shape
    n_out = np.asarray(p['w_res']).shape[0]
    k_down = np.asarray(p['w_down']).shape[2]
    E = np.asarray(p['out_proj_w']).shape[0]
    assert E == L and E % NUM_HEADS == 0
    hdh = E // NUM_HEADS
    S = HIDDEN_DIM
    BL = B * L
    outL = (L - 1) // 2 + 1
    maxpad = max((k_main - 1) // 2, (k_down - 1) // 2)
    CPAD = ((max(n_in, n_sc, n_out) + 7) // 8) * 8   # per-tap sublane padding

    def flat_conv(w):                       # (Cout, Cin, K) -> (Cout, K*CPAD)
        w = np.asarray(w, np.float32)
        co, ci, k = w.shape
        wt = np.zeros((co, k, CPAD), np.float32)
        wt[:, :, :ci] = np.transpose(w, (0, 2, 1))
        return wt.reshape(co, k * CPAD)

    def col(v):
        return np.asarray(v, np.float32).reshape(-1, 1)

    def ln_rows(g, bt):                     # gamma/beta tiled over batch -> (2, B*L)
        g = np.tile(np.asarray(g, np.float32).reshape(1, -1), (1, B))
        bt = np.tile(np.asarray(bt, np.float32).reshape(1, -1), (1, B))
        return np.concatenate([g, bt], axis=0)

    # static masks (precomputed once)
    loc = np.arange(BL) % L
    tapmask = np.zeros((2 * maxpad + 1, BL), np.float32)
    for d in range(-maxpad, maxpad + 1):
        tapmask[d + maxpad] = ((loc + d >= 0) & (loc + d < L)).astype(np.float32)
    segmask = np.zeros((B, BL), np.float32)
    for b in range(B):
        segmask[b, b * L:(b + 1) * L] = 1.0
    R = B * S                                # attention rows (batch-stacked seq)
    assert R <= 128, "for larger B, grid over batch instead (see TODO above)"
    rowseg = np.arange(R) // S
    pairmask = (rowseg[:, None] == rowseg[None, :]).astype(np.float32)  # (R, R)

    w_in = np.asarray(p['in_proj_w'], np.float32)
    b_in = np.asarray(p['in_proj_b'], np.float32)

    wblocks = {   # bf16 weight slab (matmul operands)
        'w_pre': flat_conv(p['w_pre']),
        'w_sc': np.asarray(p['w_sc'], np.float32),
        'w_qkv': np.asarray(p['w_qkv'], np.float32),
        'wq_t': w_in[:E].T, 'wk_t': w_in[E:2 * E].T, 'wv_t': w_in[2 * E:].T,
        'wo_t': np.asarray(p['out_proj_w'], np.float32).T,
        'w_toout': np.asarray(p['w_toout'], np.float32),
        'w_post': flat_conv(p['w_post']),
        'w_res': np.asarray(p['w_res'], np.float32),
        'w_down': flat_conv(p['w_down']),
    }
    fblocks = {   # f32 slab (biases, LN params, masks)
        'b_pre': col(p['b_pre']), 'b_sc': col(p['b_sc']),
        'b_toout': col(p['b_toout']), 'b_post': col(p['b_post']),
        'b_res': col(p['b_res']), 'b_down': col(p['b_down']),
        'ln1': ln_rows(p['ln1_w'], p['ln1_b']),
        'ln_a': ln_rows(p['ln_a_w'], p['ln_a_b']),
        'ln2': ln_rows(p['ln2_w'], p['ln2_b']),
        'attn_b': np.stack([b_in[:E], b_in[E:2 * E], b_in[2 * E:],
                            np.asarray(p['out_proj_b'], np.float32)], axis=0),
        'tapmask': tapmask,
        'segmask': segmask,            # (B, BL)
        'segmask_t': segmask.T,        # (BL, B)
        'pairmask': pairmask,          # (R, R) block-diag attention mask
    }
    wslab, woffs = _pack_slab(wblocks, jnp.bfloat16, 16)
    fslab, foffs = _pack_slab(fblocks, np.float32, 8)
    dims = dict(n_in=n_in, n_sc=n_sc, n_out=n_out, E=E, hdh=hdh, S=S, BL=BL,
                outL=outL, maxpad=maxpad, k_main=k_main, k_down=k_down,
                CPAD=CPAD)
    return wslab, woffs, fslab, foffs, dims


# -------------------- kernel --------------------
def _build_kernel(woffs, foffs, dims, B, L):
    n_sc, n_out = dims['n_sc'], dims['n_out']
    E, hdh, S = dims['E'], dims['hdh'], dims['S']
    BL, maxpad = dims['BL'], dims['maxpad']
    k_main, k_down, CPAD = dims['k_main'], dims['k_down'], dims['CPAD']
    NH = NUM_HEADS
    scale = 1.0 / math.sqrt(hdh)
    inv_l = 1.0 / L

    def kernel(x_ref, w_ref, f_ref, h_ref, d_ref):
        def getw(name):
            r0, nr, nc = woffs[name]
            return w_ref[pl.ds(r0, nr), pl.ds(0, nc)]

        def getf(name):
            r0, nr, nc = foffs[name]
            return f_ref[pl.ds(r0, nr), pl.ds(0, nc)]

        x = x_ref[...]                                   # (n_in, B*L) f32
        tapm = getf('tapmask')
        segm = getf('segmask')                           # (B, BL)
        segmt = getf('segmask_t')                        # (BL, B)
        pairm = getf('pairmask')                         # (R, R)

        def pad_rows(v):
            c = v.shape[0]
            if c == CPAD:
                return v
            return jnp.concatenate(
                [v, jnp.zeros((CPAD - c, v.shape[1]), v.dtype)], axis=0)

        # fused im2col 'same' conv: one (Cout, K*CPAD) @ (K*CPAD, B*L) matmul.
        # Each tap block is padded to CPAD(=8) rows so the sublane concat stays
        # (8,128)-tile aligned; tapmask stops shifts at batch/sequence edges.
        def conv_same(v, wname, bname, K):
            pad = (K - 1) // 2
            vp = pad_rows(v)
            cols = []
            for t in range(K):
                d = t - pad
                if d == 0:
                    cols.append(vp)
                else:
                    sh = pltpu.roll(vp, (-d) % BL, 1)
                    cols.append(sh * tapm[d + maxpad:d + maxpad + 1, :])
            xcat = jnp.concatenate(cols, axis=0)
            return _mm(getw(wname), xcat) + getf(bname)

        # per-batch-segment mean over the lane axis via two small f32 matmuls
        # (kept in f32 on purpose: exact LayerNorm statistics).
        def seg_mean(v):
            sums = jnp.dot(v, segmt, preferred_element_type=jnp.float32)    # (rows, B)
            return jnp.dot(sums, segm, preferred_element_type=jnp.float32) * inv_l

        def layernorm(v, name):
            ln = getf(name)                              # rows: gamma, beta (tiled)
            mu = seg_mean(v)
            c = v - mu
            var = seg_mean(c * c)
            return c * lax.rsqrt(var + LN_EPS) * ln[0:1, :] + ln[1:2, :]

        # ---------------- pre-shortcut path ----------------
        s = conv_same(x, 'w_pre', 'b_pre', k_main)
        s = _mish(layernorm(s, 'ln1'))
        s = _mm(getw('w_sc'), s) + getf('b_sc')

        # ---------------- SelfAttention (batch + head folded) ----------------
        xa = layernorm(s, 'ln_a')
        qkv = _mm(getw('w_qkv'), xa)                     # (3*S, B*E)

        # gather per-batch lane blocks into row-stacked (B*S, E); rows = (b, s)
        def gather_batch(r0):
            return jnp.concatenate(
                [qkv[r0:r0 + S, b * E:(b + 1) * E] for b in range(B)], axis=0)

        attb = getf('attn_b')                            # rows: bq, bk, bv, bo
        Qp = _mm(gather_batch(0), getw('wq_t')) + attb[0:1, :]       # (B*S, E)
        Kp = _mm(gather_batch(S), getw('wk_t')) + attb[1:2, :]
        Vp = _mm(gather_batch(2 * S), getw('wv_t')) + attb[2:3, :]

        def split_heads(M):                              # (B*S, E) -> (NH, B*S, hdh)
            return jnp.stack([M[:, n * hdh:(n + 1) * hdh] for n in range(NH)],
                             axis=0)

        Qh, Kh, Vh = split_heads(Qp), split_heads(Kp), split_heads(Vp)
        # all-batch scores per head (one fat MXU push per head); cross-batch
        # pairs are suppressed with a block-diagonal mask -> exact semantics.
        neg = (1.0 - pairm) * 1e9
        sc = _bmm('nrd,npd->nrp', Qh, Kh) * scale - neg[None, :, :]  # (NH, R, R)
        sc = sc - jnp.max(sc, axis=-1, keepdims=True)
        pr = jnp.exp(sc) * pairm[None, :, :]
        pr = pr / jnp.sum(pr, axis=-1, keepdims=True)                # exact softmax
        ctx = _bmm('nrp,npd->nrd', pr, Vh)                           # (NH, R, hdh)
        O = jnp.concatenate([ctx[n] for n in range(NH)], axis=1)     # (R, E)
        att = _mm(O, getw('wo_t')) + attb[3:4, :]                    # (R, E)
        # back to channel-major lane-folded layout (S, B*E)
        att_cm = jnp.concatenate(
            [att[b * S:(b + 1) * S, :] for b in range(B)], axis=1)
        s = _mm(getw('w_toout'), att_cm) + getf('b_toout') + s

        # ---------------- post-shortcut + residual ----------------
        t = layernorm(conv_same(s, 'w_post', 'b_post', k_main), 'ln2')
        h = _mish(t) + _mm(getw('w_res'), x) + getf('b_res')
        h_ref[...] = h

        # ---------------- down conv (full length, lane-dense store) ----------
        # stride-2 subsample happens in the wrapper (near-free strided slice).
        d_ref[...] = conv_same(h, 'w_down', 'b_down', k_down)

    return kernel


# -------------------- builder / wrapper (packing hoisted + cached) --------------------
def make_downsampling_block(params, B, L):
    wslab, woffs, fslab, foffs, dims = _prepare(params, B, L)
    n_in, n_out, BL = dims['n_in'], dims['n_out'], dims['BL']
    kernel = _build_kernel(woffs, foffs, dims, B, L)

    call = pl.pallas_call(
        kernel,
        out_shape=(jax.ShapeDtypeStruct((n_out, BL), jnp.float32),
                   jax.ShapeDtypeStruct((n_out, BL), jnp.float32)),
    )
    # TODO(synk): on v7x, add a batch grid + dimension_semantics=("parallel",)
    # so both TensorCores are used once B*L grows beyond a single-tile problem.

    @jax.jit
    def forward(x):
        # fold batch into the lane axis: (B, C, L) -> (C, B*L)
        x2 = jnp.transpose(x, (1, 0, 2)).reshape(n_in, BL)
        h_slab, d_slab = call(x2, wslab, fslab)
        h = jnp.transpose(h_slab.reshape(n_out, B, L), (1, 0, 2))
        d = jnp.transpose(d_slab.reshape(n_out, B, L)[:, :, ::2], (1, 0, 2))
        return h, d

    return forward


# -------------------- pure-JAX reference (independent code path) --------------------
def reference_forward(x, p):
    B, n_in, L = x.shape
    E = p['out_proj_w'].shape[0]
    hdh = E // NUM_HEADS
    HID = HIDDEN_DIM

    def conv_same(xb, w, b):                 # w: (Cout, Cin, K) torch layout
        Cout, Cin, K = w.shape
        pad = (K - 1) // 2
        xpad = jnp.pad(xb, ((0, 0), (pad, pad)))
        cols = [xpad[:, t:t + xb.shape[1]] for t in range(K)]
        xcat = jnp.concatenate(cols, axis=0)
        wflat = jnp.transpose(w, (0, 2, 1)).reshape(Cout, K * Cin)
        return _mm(wflat, xcat) + b[:, None]

    def ln(v, g, be):
        m = jnp.mean(v, axis=-1, keepdims=True)
        var = jnp.mean((v - m) ** 2, axis=-1, keepdims=True)
        return (v - m) * lax.rsqrt(var + LN_EPS) * g[None, :] + be[None, :]

    def mha(q, k, v):
        Wq, Wk, Wv = p['in_proj_w'][:E], p['in_proj_w'][E:2 * E], p['in_proj_w'][2 * E:]
        bq, bk, bv = p['in_proj_b'][:E], p['in_proj_b'][E:2 * E], p['in_proj_b'][2 * E:]
        Q = _mm(q, Wq.T) + bq[None, :]
        K_ = _mm(k, Wk.T) + bk[None, :]
        V = _mm(v, Wv.T) + bv[None, :]
        heads = []
        for hh in range(NUM_HEADS):
            sl = slice(hh * hdh, (hh + 1) * hdh)
            sc = _mm(Q[:, sl], K_[:, sl].T) / math.sqrt(hdh)
            sc = sc - jnp.max(sc, axis=-1, keepdims=True)
            pr = jnp.exp(sc)
            pr = pr / jnp.sum(pr, axis=-1, keepdims=True)
            heads.append(_mm(pr, V[:, sl]))
        O = jnp.concatenate(heads, axis=1)
        return _mm(O, p['out_proj_w'].T) + p['out_proj_b'][None, :]

    def one(xb):
        s = conv_same(xb, p['w_pre'], p['b_pre'])
        s = _mish(ln(s, p['ln1_w'], p['ln1_b']))
        s = _mm(p['w_sc'], s) + p['b_sc'][:, None]
        xa = ln(s, p['ln_a_w'], p['ln_a_b'])
        qkv = _mm(p['w_qkv'], xa)
        att = mha(qkv[:HID], qkv[HID:2 * HID], qkv[2 * HID:])
        s = _mm(p['w_toout'], att) + p['b_toout'][:, None] + s
        t = ln(conv_same(s, p['w_post'], p['b_post']), p['ln2_w'], p['ln2_b'])
        h = _mish(t) + _mm(p['w_res'], xb) + p['b_res'][:, None]
        d = conv_same(h, p['w_down'], p['b_down'])[:, ::2]
        return h, d

    return jax.vmap(one)(x)


# -------------------- parameter construction (torch-native layouts) --------------------
def make_params(key, n_in, n_out, dim):
    n_sc = (n_in + n_out) // 2 + 1
    E = dim
    keys = iter(jax.random.split(key, 40))

    def nrm(shape, scale=0.2):
        return jax.random.normal(next(keys), shape, jnp.float32) * scale

    p = {}
    p['w_pre'] = nrm((n_sc, n_in, 5));        p['b_pre'] = nrm((n_sc,))
    p['ln1_w'] = 1.0 + nrm((dim,));           p['ln1_b'] = nrm((dim,))
    p['w_sc'] = nrm((n_sc, n_sc));            p['b_sc'] = nrm((n_sc,))
    p['ln_a_w'] = 1.0 + nrm((dim,));          p['ln_a_b'] = nrm((dim,))
    p['w_qkv'] = nrm((3 * HIDDEN_DIM, n_sc))                 # to_qkv, no bias
    p['in_proj_w'] = nrm((3 * E, E));         p['in_proj_b'] = nrm((3 * E,))
    p['out_proj_w'] = nrm((E, E));            p['out_proj_b'] = nrm((E,))
    p['w_toout'] = nrm((n_sc, HIDDEN_DIM));   p['b_toout'] = nrm((n_sc,))
    p['w_post'] = nrm((n_out, n_sc, 5));      p['b_post'] = nrm((n_out,))
    p['ln2_w'] = 1.0 + nrm((dim,));           p['ln2_b'] = nrm((dim,))
    p['w_res'] = nrm((n_out, n_in));          p['b_res'] = nrm((n_out,))
    p['w_down'] = nrm((n_out, n_out, 3));     p['b_down'] = nrm((n_out,))
    return p


# -------------------- main --------------------
if __name__ == "__main__":
    # B * dim = 128 -> the working lane axis is exactly one vreg / MXU tile wide.
    B, n_inputs, n_outputs, dim = 8, 4, 8, 16
    key = jax.random.PRNGKey(0)
    kx, kp = jax.random.split(key)
    x = jax.random.normal(kx, (B, n_inputs, dim), jnp.float32)
    params = make_params(kp, n_inputs, n_outputs, dim)

    fwd = make_downsampling_block(params, B, dim)   # pack params once, reuse
    h, out = fwd(x)
    h = jax.block_until_ready(h)
    out = jax.block_until_ready(out)

    ref_h, ref_out = reference_forward(x, params)
    ref_h = jax.block_until_ready(ref_h)
    ref_out = jax.block_until_ready(ref_out)

    out_len = (dim - 1) // 2 + 1
    assert h.shape == (B, n_outputs, dim)
    assert out.shape == (B, n_outputs, out_len)
    np.testing.assert_allclose(np.asarray(h), np.asarray(ref_h), rtol=2e-2, atol=1e-2)
    np.testing.assert_allclose(np.asarray(out), np.asarray(ref_out), rtol=2e-2, atol=1e-2)
    print("KERNEL_OK")
</pallas_src>

<mosaic_0001>
module attributes {stable_mosaic.version = 11 : i64} {
  func.func @kernel(%arg0: memref<4x128xf32, #tpu.memory_space<vmem>>, %arg1: memref<208x128xbf16, #tpu.memory_space<vmem>>, %arg2: memref<352x128xf32, #tpu.memory_space<vmem>>, %arg3: memref<8x128xf32, #tpu.memory_space<vmem>>, %arg4: memref<8x128xf32, #tpu.memory_space<vmem>>) attributes {dimension_semantics = [], scalar_prefetch = 0 : i64, scratch_operands = 0 : i64, tpu.core_type = #tpu.core_type<tc>} {
    %c0 = arith.constant 0 : index
    %c0_0 = arith.constant 0 : index
    %0 = vector.load %arg0[%c0, %c0_0] : memref<4x128xf32, #tpu.memory_space<vmem>>, vector<4x128xf32>
    %c80 = arith.constant 80 : index
    %c0_1 = arith.constant 0 : index
    %1 = vector.load %arg2[%c80, %c0_1] : memref<352x128xf32, #tpu.memory_space<vmem>>, vector<5x128xf32>
    %c88 = arith.constant 88 : index
    %c0_2 = arith.constant 0 : index
    %2 = vector.load %arg2[%c88, %c0_2] : memref<352x128xf32, #tpu.memory_space<vmem>>, vector<8x128xf32>
    %c96 = arith.constant 96 : index
    %c0_3 = arith.constant 0 : index
    %3 = vector.load %arg2[%c96, %c0_3] : memref<352x128xf32, #tpu.memory_space<vmem>>, vector<128x8xf32>
    %c224 = arith.constant 224 : index
    %c0_4 = arith.constant 0 : index
    %4 = vector.load %arg2[%c224, %c0_4] : memref<352x128xf32, #tpu.memory_space<vmem>>, vector<128x128xf32>
    %cst = arith.constant 0.000000e+00 : f32
    %5 = vector.broadcast %cst : f32 to vector<4x128xf32>
    %6 = tpu.concatenate %0, %5 in 0 : vector<4x128xf32>, vector<4x128xf32> -> vector<8x128xf32>
    %c2_i32 = arith.constant 2 : i32
    %7 = tpu.dynamic_rotate %6 by %c2_i32 dim 1 : vector<8x128xf32>, i32 -> vector<8x128xf32>
    %8 = vector.extract_strided_slice %1 {offsets = [0, 0], sizes = [1, 128], strides = [1, 1]} : vector<5x128xf32> to vector<1x128xf32>
    %9 = vector.broadcast %8 : vector<1x128xf32> to vector<8x128xf32>
    %10 = arith.mulf %7, %9 : vector<8x128xf32>
    %c1_i32 = arith.constant 1 : i32
    %11 = tpu.dynamic_rotate %6 by %c1_i32 dim 1 : vector<8x128xf32>, i32 -> vector<8x128xf32>
    %12 = vector.extract_strided_slice %1 {offsets = [1, 0], sizes = [1, 128], strides = [1, 1]} : vector<5x128xf32> to vector<1x128xf32>
    %13 = vector.broadcast %12 : vector<1x128xf32> to vector<8x128xf32>
    %14 = arith.mulf %11, %13 : vector<8x128xf32>
    %c127_i32 = arith.constant 127 : i32
    %15 = tpu.dynamic_rotate %6 by %c127_i32 dim 1 : vector<8x128xf32>, i32 -> vector<8x128xf32>
    %16 = vector.extract_strided_slice %1 {offsets = [3, 0], sizes = [1, 128], strides = [1, 1]} : vector<5x128xf32> to vector<1x128xf32>
    %17 = vector.broadcast %16 : vector<1x128xf32> to vector<8x128xf32>
    %18 = arith.mulf %15, %17 : vector<8x128xf32>
    %c126_i32 = arith.constant 126 : i32
    %19 = tpu.dynamic_rotate %6 by %c126_i32 dim 1 : vector<8x128xf32>, i32 -> vector<8x128xf32>
    %20 = vector.extract_strided_slice %1 {offsets = [4, 0], sizes = [1, 128], strides = [1, 1]} : vector<5x128xf32> to vector<1x128xf32>
    %21 = vector.broadcast %20 : vector<1x128xf32> to vector<8x128xf32>
    %22 = arith.mulf %19, %21 : vector<8x128xf32>
    %23 = tpu.concatenate %10, %14, %6, %18, %22 in 0 : vector<8x128xf32>, vector<8x128xf32>, vector<8x128xf32>, vector<8x128xf32>, vector<8x128xf32> -> vector<40x128xf32>
    %c0_5 = arith.constant 0 : index
    %c0_6 = arith.constant 0 : index
    %24 = vector.load %arg1[%c0_5, %c0_6] : memref<208x128xbf16, #tpu.memory_space<vmem>>, vector<7x40xbf16>
    %25 = arith.truncf %23 : vector<40x128xf32> to vector<40x128xbf16>
    %cst_7 = arith.constant dense<0.000000e+00> : vector<7x128xf32>
    %26 = tpu.matmul %24, %25, %cst_7 {dimension_numbers = #tpu.dot_dimension_numbers<[1], [0], [0], [1], [0, 0, 1, 1], [], []>} : vector<7x40xbf16>, vector<40x128xbf16>, vector<7x128xf32> -> vector<7x128xf32>
    %c0_8 = arith.constant 0 : index
    %c0_9 = arith.constant 0 : index
    %27 = vector.load %arg2[%c0_8, %c0_9] : memref<352x128xf32, #tpu.memory_space<vmem>>, vector<7x1xf32>
    %28 = vector.broadcast %27 : vector<7x1xf32> to vector<7x128xf32>
    %29 = arith.addf %26, %28 : vector<7x128xf32>
    %c48 = arith.constant 48 : index
    %c0_10 = arith.constant 0 : index
    %30 = vector.load %arg2[%c48, %c0_10] : memref<352x128xf32, #tpu.memory_space<vmem>>, vector<2x128xf32>
    %cst_11 = arith.constant dense<0.000000e+00> : vector<7x8xf32>
    %31 = tpu.matmul %29, %3, %cst_11 {dimension_numbers = #tpu.dot_dimension_numbers<[1], [0], [0], [1], [0, 0, 1, 1], [], []>} : vector<7x128xf32>, vector<128x8xf32>, vector<7x8xf32> -> vector<7x8xf32>
    %cst_12 = arith.constant dense<0.000000e+00> : vector<7x128xf32>
    %32 = tpu.matmul %31, %2, %cst_12 {dimension_numbers = #tpu.dot_dimension_numbers<[1], [0], [0], [1], [0, 0, 1, 1], [], []>} : vector<7x8xf32>, vector<8x128xf32>, vector<7x128xf32> -> vector<7x128xf32>
    %cst_13 = arith.constant 6.250000e-02 : f32
    %33 = vector.broadcast %cst_13 : f32 to vector<7x128xf32>
    %34 = arith.mulf %32, %33 : vector<7x128xf32>
    %35 = arith.subf %29, %34 : vector<7x128xf32>
    %36 = arith.mulf %35, %35 : vector<7x128xf32>
    %cst_14 = arith.constant dense<0.000000e+00> : vector<7x8xf32>
    %37 = tpu.matmul %36, %3, %cst_14 {dimension_numbers = #tpu.dot_dimension_numbers<[1], [0], [0], [1], [0, 0, 1, 1], [], []>} : vector<7x128xf32>, vector<128x8xf32>, vector<7x8xf32> -> vector<7x8xf32>
    %cst_15 = arith.constant dense<0.000000e+00> : vector<7x128xf32>
    %38 = tpu.matmul %37, %2, %cst_15 {dimension_numbers = #tpu.dot_dimension_numbers<[1], [0], [0], [1], [0, 0, 1, 1], [], []>} : vector<7x8xf32>, vector<8x128xf32>, vector<7x128xf32> -> vector<7x128xf32>
    %cst_16 = arith.constant 6.250000e-02 : f32
    %39 = vector.broadcast %cst_16 : f32 to vector<7x128xf32>
    %40 = arith.mulf %38, %39 : vector<7x128xf32>
    %cst_17 = arith.constant 9.99999974E-6 : f32
    %41 = vector.broadcast %cst_17 : f32 to vector<7x128xf32>
    %42 = arith.addf %40, %41 : vector<7x128xf32>
    %43 = math.rsqrt %42 : vector<7x128xf32>
    %44 = arith.mulf %35, %43 : vector<7x128xf32>
    %45 = vector.extract_strided_slice %30 {offsets = [0, 0], sizes = [1, 128], strides = [1, 1]} : vector<2x128xf32> to vector<1x128xf32>
    %46 = vector.broadcast %45 : vector<1x128xf32> to vector<7x128xf32>
    %47 = arith.mulf %44, %46 : vector<7x128xf32>
    %48 = vector.extract_strided_slice %30 {offsets = [1, 0], sizes = [1, 128], strides = [1, 1]} : vector<2x128xf32> to vector<1x128xf32>
    %49 = vector.broadcast %48 : vector<1x128xf32> to vector<7x128xf32>
    %50 = arith.addf %47, %49 : vector<7x128xf32>
    %cst_18 = arith.constant 0.000000e+00 : f32
    %51 = vector.broadcast %cst_18 : f32 to vector<7x128xf32>
    %52 = arith.maximumf %50, %51 : vector<7x128xf32>
    %53 = math.absf %50 : vector<7x128xf32>
    %cst_19 = arith.constant 0.000000e+00 : f32
    %54 = vector.broadcast %cst_19 : f32 to vector<7x128xf32>
    %55 = arith.subf %54, %53 : vector<7x128xf32>
    %56 = math.exp %55 : vector<7x128xf32>
    %cst_20 = arith.constant 1.000000e+00 : f32
    %57 = vector.broadcast %cst_20 : f32 to vector<7x128xf32>
    %58 = arith.addf %57, %56 : vector<7x128xf32>
    %59 = math.log %58 : vector<7x128xf32>
    %60 = arith.addf %52, %59 : vector<7x128xf32>
    %61 = math.tanh %60 : vector<7x128xf32>
    %62 = arith.mulf %50, %61 : vector<7x128xf32>
    %c16 = arith.constant 16 : index
    %c0_21 = arith.constant 0 : index
    %63 = vector.load %arg1[%c16, %c0_21] : memref<208x128xbf16, #tpu.memory_space<vmem>>, vector<7x7xbf16>
    %64 = arith.truncf %62 : vector<7x128xf32> to vector<7x128xbf16>
    %cst_22 = arith.constant dense<0.000000e+00> : vector<7x128xf32>
    %65 = tpu.matmul %63, %64, %cst_22 {dimension_numbers = #tpu.dot_dimension_numbers<[1], [0], [0], [1], [0, 0, 1, 1], [], []>} : vector<7x7xbf16>, vector<7x128xbf16>, vector<7x128xf32> -> vector<7x128xf32>
    %c8 = arith.constant 8 : index
    %c0_23 = arith.constant 0 : index
    %66 = vector.load %arg2[%c8, %c0_23] : memref<352x128xf32, #tpu.memory_space<vmem>>, vector<7x1xf32>
    %67 = vector.broadcast %66 : vector<7x1xf32> to vector<7x128xf32>
    %68 = arith.addf %65, %67 : vector<7x128xf32>
    %c56 = arith.constant 56 : index
    %c0_24 = arith.constant 0 : index
    %69 = vector.load %arg2[%c56, %c0_24] : memref<352x128xf32, #tpu.memory_space<vmem>>, vector<2x128xf32>
    %cst_25 = arith.constant dense<0.000000e+00> : vector<7x8xf32>
    %70 = tpu.matmul %68, %3, %cst_25 {dimension_numbers = #tpu.dot_dimension_numbers<[1], [0], [0], [1], [0, 0, 1, 1], [], []>} : vector<7x128xf32>, vector<128x8xf32>, vector<7x8xf32> -> vector<7x8xf32>
    %cst_26 = arith.constant dense<0.000000e+00> : vector<7x128xf32>
    %71 = tpu.matmul %70, %2, %cst_26 {dimension_numbers = #tpu.dot_dimension_numbers<[1], [0], [0], [1], [0, 0, 1, 1], [], []>} : vector<7x8xf32>, vector<8x128xf32>, vector<7x128xf32> -> vector<7x128xf32>
    %cst_27 = arith.constant 6.250000e-02 : f32
    %72 = vector.broadcast %cst_27 : f32 to vector<7x128xf32>
    %73 = arith.mulf %71, %72 : vector<7x128xf32>
    %74 = arith.subf %68, %73 : vector<7x128xf32>
    %75 = arith.mulf %74, %74 : vector<7x128xf32>
    %cst_28 = arith.constant dense<0.000000e+00> : vector<7x8xf32>
    %76 = tpu.matmul %75, %3, %cst_28 {dimension_numbers = #tpu.dot_dimension_numbers<[1], [0], [0], [1], [0, 0, 1, 1], [], []>} : vector<7x128xf32>, vector<128x8xf32>, vector<7x8xf32> -> vector<7x8xf32>
    %cst_29 = arith.constant dense<0.000000e+00> : vector<7x128xf32>
    %77 = tpu.matmul %76, %2, %cst_29 {dimension_numbers = #tpu.dot_dimension_numbers<[1], [0], [0], [1], [0, 0, 1, 1], [], []>} : vector<7x8xf32>, vector<8x128xf32>, vector<7x128xf32> -> vector<7x128xf32>
    %cst_30 = arith.constant 6.250000e-02 : f32
    %78 = vector.broadcast %cst_30 : f32 to vector<7x128xf32>
    %79 = arith.mulf %77, %78 : vector<7x128xf32>
    %cst_31 = arith.constant 9.99999974E-6 : f32
    %80 = vector.broadcast %cst_31 : f32 to vector<7x128xf32>
    %81 = arith.addf %79, %80 : vector<7x128xf32>
    %82 = math.rsqrt %81 : vector<7x128xf32>
    %83 = arith.mulf %74, %82 : vector<7x128xf32>
    %84 = vector.extract_strided_slice %69 {offsets = [0, 0], sizes = [1, 128], strides = [1, 1]} : vector<2x128xf32> to vector<1x128xf32>
    %85 = vector.broadcast %84 : vector<1x128xf32> to vector<7x128xf32>
    %86 = arith.mulf %83, %85 : vector<7x128xf32>
    %87 = vector.extract_strided_slice %69 {offsets = [1, 0], sizes = [1, 128], strides = [1, 1]} : vector<2x128xf32> to vector<1x128xf32>
    %88 = vector.broadcast %87 : vector<1x128xf32> to vector<7x128xf32>
    %89 = arith.addf %86, %88 : vector<7x128xf32>
    %c32 = arith.constant 32 : index
    %c0_32 = arith.constant 0 : index
    %90 = vector.load %arg1[%c32, %c0_32] : memref<208x128xbf16, #tpu.memory_space<vmem>>, vector<48x7xbf16>
    %91 = arith.truncf %89 : vector<7x128xf32> to vector<7x128xbf16>
    %cst_33 = arith.constant dense<0.000000e+00> : vector<48x128xf32>
    %92 = tpu.matmul %90, %91, %cst_33 {dimension_numbers = #tpu.dot_dimension_numbers<[1], [0], [0], [1], [0, 0, 1, 1], [], []>} : vector<48x7xbf16>, vector<7x128xbf16>, vector<48x128xf32> -> vector<48x128xf32>
    %c72 = arith.constant 72 : index
    %c0_34 = arith.constant 0 : index
    %93 = vector.load %arg2[%c72, %c0_34] : memref<352x128xf32, #tpu.memory_space<vmem>>, vector<4x16xf32>
    %94 = vector.extract_strided_slice %92 {offsets = [0, 0], sizes = [16, 16], strides = [1, 1]} : vector<48x128xf32> to vector<16x16xf32>
    %95 = vector.extract_strided_slice %92 {offsets = [0, 16], sizes = [16, 16], strides = [1, 1]} : vector<48x128xf32> to vector<16x16xf32>
    %96 = vector.extract_strided_slice %92 {offsets = [0, 32], sizes = [16, 16], strides = [1, 1]} : vector<48x128xf32> to vector<16x16xf32>
    %97 = vector.extract_strided_slice %92 {offsets = [0, 48], sizes = [16, 16], strides = [1, 1]} : vector<48x128xf32> to vector<16x16xf32>
    %98 = vector.extract_strided_slice %92 {offsets = [0, 64], sizes = [16, 16], strides = [1, 1]} : vector<48x128xf32> to vector<16x16xf32>
    %99 = vector.extract_strided_slice %92 {offsets = [0, 80], sizes = [16, 16], strides = [1, 1]} : vector<48x128xf32> to vector<16x16xf32>
    %100 = vector.extract_strided_slice %92 {offsets = [0, 96], sizes = [16, 16], strides = [1, 1]} : vector<48x128xf32> to vector<16x16xf32>
    %101 = vector.extract_strided_slice %92 {offsets = [0, 112], sizes = [16, 16], strides = [1, 1]} : vector<48x128xf32> to vector<16x16xf32>
    %102 = tpu.concatenate %94, %95, %96, %97, %98, %99, %100, %101 in 0 : vector<16x16xf32>, vector<16x16xf32>, vector<16x16xf32>, vector<16x16xf32>, vector<16x16xf32>, vector<16x16xf32>, vector<16x16xf32>, vector<16x16xf32> -> vector<128x16xf32>
    %c80_35 = arith.constant 80 : index
    %c0_36 = arith.constant 0 : index
    %103 = vector.load %arg1[%c80_35, %c0_36] : memref<208x128xbf16, #tpu.memory_space<vmem>>, vector<16x16xbf16>
    %104 = arith.truncf %102 : vector<128x16xf32> to vector<128x16xbf16>
    %cst_37 = arith.constant dense<0.000000e+00> : vector<128x16xf32>
    %105 = tpu.matmul %104, %103, %cst_37 {dimension_numbers = #tpu.dot_dimension_numbers<[1], [0], [0], [1], [0, 0, 1, 1], [], []>} : vector<128x16xbf16>, vector<16x16xbf16>, vector<128x16xf32> -> vector<128x16xf32>
    %106 = vector.extract_strided_slice %93 {offsets = [0, 0], sizes = [1, 16], strides = [1, 1]} : vector<4x16xf32> to vector<1x16xf32>
    %107 = vector.broadcast %106 : vector<1x16xf32> to vector<128x16xf32>
    %108 = arith.addf %105, %107 : vector<128x16xf32>
    %109 = vector.extract_strided_slice %92 {offsets = [16, 0], sizes = [16, 16], strides = [1, 1]} : vector<48x128xf32> to vector<16x16xf32>
    %110 = vector.extract_strided_slice %92 {offsets = [16, 16], sizes = [16, 16], strides = [1, 1]} : vector<48x128xf32> to vector<16x16xf32>
    %111 = vector.extract_strided_slice %92 {offsets = [16, 32], sizes = [16, 16], strides = [1, 1]} : vector<48x128xf32> to vector<16x16xf32>
    %112 = vector.extract_strided_slice %92 {offsets = [16, 48], sizes = [16, 16], strides = [1, 1]} : vector<48x128xf32> to vector<16x16xf32>
    %113 = vector.extract_strided_slice %92 {offsets = [16, 64], sizes = [16, 16], strides = [1, 1]} : vector<48x128xf32> to vector<16x16xf32>
    %114 = vector.extract_strided_slice %92 {offsets = [16, 80], sizes = [16, 16], strides = [1, 1]} : vector<48x128xf32> to vector<16x16xf32>
    %115 = vector.extract_strided_slice %92 {offsets = [16, 96], sizes = [16, 16], strides = [1, 1]} : vector<48x128xf32> to vector<16x16xf32>
    %116 = vector.extract_strided_slice %92 {offsets = [16, 112], sizes = [16, 16], strides = [1, 1]} : vector<48x128xf32> to vector<16x16xf32>
    %117 = tpu.concatenate %109, %110, %111, %112, %113, %114, %115, %116 in 0 : vector<16x16xf32>, vector<16x16xf32>, vector<16x16xf32>, vector<16x16xf32>, vector<16x16xf32>, vector<16x16xf32>, vector<16x16xf32>, vector<16x16xf32> -> vector<128x16xf32>
    %c96_38 = arith.constant 96 : index
    %c0_39 = arith.constant 0 : index
    %118 = vector.load %arg1[%c96_38, %c0_39] : memref<208x128xbf16, #tpu.memory_space<vmem>>, vector<16x16xbf16>
    %119 = arith.truncf %117 : vector<128x16xf32> to vector<128x16xbf16>
    %cst_40 = arith.constant dense<0.000000e+00> : vector<128x16xf32>
    %120 = tpu.matmul %119, %118, %cst_40 {dimension_numbers = #tpu.dot_dimension_numbers<[1], [0], [0], [1], [0, 0, 1, 1], [], []>} : vector<128x16xbf16>, vector<16x16xbf16>, vector<128x16xf32> -> vector<128x16xf32>
    %121 = vector.extract_strided_slice %93 {offsets = [1, 0], sizes = [1, 16], strides = [1, 1]} : vector<4x16xf32> to vector<1x16xf32>
    %122 = vector.broadcast %121 : vector<1x16xf32> to vector<128x16xf32>
    %123 = arith.addf %120, %122 : vector<128x16xf32>
    %124 = vector.extract_strided_slice %92 {offsets = [32, 0], sizes = [16, 16], strides = [1, 1]} : vector<48x128xf32> to vector<16x16xf32>
    %125 = vector.extract_strided_slice %92 {offsets = [32, 16], sizes = [16, 16], strides = [1, 1]} : vector<48x128xf32> to vector<16x16xf32>
    %126 = vector.extract_strided_slice %92 {offsets = [32, 32], sizes = [16, 16], strides = [1, 1]} : vector<48x128xf32> to vector<16x16xf32>
    %127 = vector.extract_strided_slice %92 {offsets = [32, 48], sizes = [16, 16], strides = [1, 1]} : vector<48x128xf32> to vector<16x16xf32>
    %128 = vector.extract_strided_slice %92 {offsets = [32, 64], sizes = [16, 16], strides = [1, 1]} : vector<48x128xf32> to vector<16x16xf32>
    %129 = vector.extract_strided_slice %92 {offsets = [32, 80], sizes = [16, 16], strides = [1, 1]} : vector<48x128xf32> to vector<16x16xf32>
    %130 = vector.extract_strided_slice %92 {offsets = [32, 96], sizes = [16, 16], strides = [1, 1]} : vector<48x128xf32> to vector<16x16xf32>
    %131 = vector.extract_strided_slice %92 {offsets = [32, 112], sizes = [16, 16], strides = [1, 1]} : vector<48x128xf32> to vector<16x16xf32>
    %132 = tpu.concatenate %124, %125, %126, %127, %128, %129, %130, %131 in 0 : vector<16x16xf32>, vector<16x16xf32>, vector<16x16xf32>, vector<16x16xf32>, vector<16x16xf32>, vector<16x16xf32>, vector<16x16xf32>, vector<16x16xf32> -> vector<128x16xf32>
    %c112 = arith.constant 112 : index
    %c0_41 = arith.constant 0 : index
    %133 = vector.load %arg1[%c112, %c0_41] : memref<208x128xbf16, #tpu.memory_space<vmem>>, vector<16x16xbf16>
    %134 = arith.truncf %132 : vector<128x16xf32> to vector<128x16xbf16>
    %cst_42 = arith.constant dense<0.000000e+00> : vector<128x16xf32>
    %135 = tpu.matmul %134, %133, %cst_42 {dimension_numbers = #tpu.dot_dimension_numbers<[1], [0], [0], [1], [0, 0, 1, 1], [], []>} : vector<128x16xbf16>, vector<16x16xbf16>, vector<128x16xf32> -> vector<128x16xf32>
    %136 = vector.extract_strided_slice %93 {offsets = [2, 0], sizes = [1, 16], strides = [1, 1]} : vector<4x16xf32> to vector<1x16xf32>
    %137 = vector.broadcast %136 : vector<1x16xf32> to vector<128x16xf32>
    %138 = arith.addf %135, %137 : vector<128x16xf32>
    %139 = vector.extract_strided_slice %108 {offsets = [0, 0], sizes = [128, 4], strides = [1, 1]} : vector<128x16xf32> to vector<128x4xf32>
    %140 = vector.extract_strided_slice %108 {offsets = [0, 4], sizes = [128, 4], strides = [1, 1]} : vector<128x16xf32> to vector<128x4xf32>
    %141 = vector.extract_strided_slice %108 {offsets = [0, 8], sizes = [128, 4], strides = [1, 1]} : vector<128x16xf32> to vector<128x4xf32>
    %142 = vector.extract_strided_slice %108 {offsets = [0, 12], sizes = [128, 4], strides = [1, 1]} : vector<128x16xf32> to vector<128x4xf32>
    %143 = vector.shape_cast %139 : vector<128x4xf32> to vector<1x128x4xf32>
    %144 = vector.shape_cast %140 : vector<128x4xf32> to vector<1x128x4xf32>
    %145 = vector.shape_cast %141 : vector<128x4xf32> to vector<1x128x4xf32>
    %146 = vector.shape_cast %142 : vector<128x4xf32> to vector<1x128x4xf32>
    %147 = tpu.concatenate %143, %144, %145, %146 in 0 : vector<1x128x4xf32>, vector<1x128x4xf32>, vector<1x128x4xf32>, vector<1x128x4xf32> -> vector<4x128x4xf32>
    %148 = vector.extract_strided_slice %123 {offsets = [0, 0], sizes = [128, 4], strides = [1, 1]} : vector<128x16xf32> to vector<128x4xf32>
    %149 = vector.extract_strided_slice %123 {offsets = [0, 4], sizes = [128, 4], strides = [1, 1]} : vector<128x16xf32> to vector<128x4xf32>
    %150 = vector.extract_strided_slice %123 {offsets = [0, 8], sizes = [128, 4], strides = [1, 1]} : vector<128x16xf32> to vector<128x4xf32>
    %151 = vector.extract_strided_slice %123 {offsets = [0, 12], sizes = [128, 4], strides = [1, 1]} : vector<128x16xf32> to vector<128x4xf32>
    %152 = vector.shape_cast %148 : vector<128x4xf32> to vector<1x128x4xf32>
    %153 = vector.shape_cast %149 : vector<128x4xf32> to vector<1x128x4xf32>
    %154 = vector.shape_cast %150 : vector<128x4xf32> to vector<1x128x4xf32>
    %155 = vector.shape_cast %151 : vector<128x4xf32> to vector<1x128x4xf32>
    %156 = tpu.concatenate %152, %153, %154, %155 in 0 : vector<1x128x4xf32>, vector<1x128x4xf32>, vector<1x128x4xf32>, vector<1x128x4xf32> -> vector<4x128x4xf32>
    %157 = vector.extract_strided_slice %138 {offsets = [0, 0], sizes = [128, 4], strides = [1, 1]} : vector<128x16xf32> to vector<128x4xf32>
    %158 = vector.extract_strided_slice %138 {offsets = [0, 4], sizes = [128, 4], strides = [1, 1]} : vector<128x16xf32> to vector<128x4xf32>
    %159 = vector.extract_strided_slice %138 {offsets = [0, 8], sizes = [128, 4], strides = [1, 1]} : vector<128x16xf32> to vector<128x4xf32>
    %160 = vector.extract_strided_slice %138 {offsets = [0, 12], sizes = [128, 4], strides = [1, 1]} : vector<128x16xf32> to vector<128x4xf32>
    %161 = vector.shape_cast %157 : vector<128x4xf32> to vector<1x128x4xf32>
    %162 = vector.shape_cast %158 : vector<128x4xf32> to vector<1x128x4xf32>
    %163 = vector.shape_cast %159 : vector<128x4xf32> to vector<1x128x4xf32>
    %164 = vector.shape_cast %160 : vector<128x4xf32> to vector<1x128x4xf32>
    %165 = tpu.concatenate %161, %162, %163, %164 in 0 : vector<1x128x4xf32>, vector<1x128x4xf32>, vector<1x128x4xf32>, vector<1x128x4xf32> -> vector<4x128x4xf32>
    %cst_43 = arith.constant 1.000000e+00 : f32
    %166 = vector.broadcast %cst_43 : f32 to vector<128x128xf32>
    %167 = arith.subf %166, %4 : vector<128x128xf32>
    %cst_44 = arith.constant 1.000000e+09 : f32
    %168 = vector.broadcast %cst_44 : f32 to vector<128x128xf32>
    %169 = arith.mulf %167, %168 : vector<128x128xf32>
    %170 = arith.truncf %147 : vector<4x128x4xf32> to vector<4x128x4xbf16>
    %171 = arith.truncf %156 : vector<4x128x4xf32> to vector<4x128x4xbf16>
    "tpu.trace_start"() <{level = 10 : i32, message = "nrd,npd->nrp"}> : () -> ()
    %cst_45 = arith.constant dense<0.000000e+00> : vector<4x128x128xf32>
    %172 = tpu.matmul %170, %171, %cst_45 {dimension_numbers = #tpu.dot_dimension_numbers<[2], [2], [1], [1], [0, 0, 0, 1, 1, 1], [0], [0]>} : vector<4x128x4xbf16>, vector<4x128x4xbf16>, vector<4x128x128xf32> -> vector<4x128x128xf32>
    "tpu.trace_stop"() : () -> ()
    %cst_46 = arith.constant 5.000000e-01 : f32
    %173 = vector.broadcast %cst_46 : f32 to vector<4x128x128xf32>
    %174 = arith.mulf %172, %173 : vector<4x128x128xf32>
    %175 = vector.shape_cast %169 : vector<128x128xf32> to vector<1x128x128xf32>
    %176 = vector.broadcast %175 : vector<1x128x128xf32> to vector<4x128x128xf32>
    %177 = arith.subf %174, %176 : vector<4x128x128xf32>
    %cst_47 = arith.constant dense<0xFF800000> : vector<4x128xf32>
    %178 = vector.multi_reduction <maximumf>, %177, %cst_47 [2] : vector<4x128x128xf32> to vector<4x128xf32>
    %179 = vector.shape_cast %178 : vector<4x128xf32> to vector<4x128x1xf32>
    %180 = vector.broadcast %179 : vector<4x128x1xf32> to vector<4x128x128xf32>
    %181 = arith.subf %177, %180 : vector<4x128x128xf32>
    %182 = math.exp %181 : vector<4x128x128xf32>
    %183 = vector.shape_cast %4 : vector<128x128xf32> to vector<1x128x128xf32>
    %184 = vector.broadcast %183 : vector<1x128x128xf32> to vector<4x128x128xf32>
    %185 = arith.mulf %182, %184 : vector<4x128x128xf32>
    %cst_48 = arith.constant dense<0.000000e+00> : vector<4x128xf32>
    %186 = vector.multi_reduction <add>, %185, %cst_48 [2] : vector<4x128x128xf32> to vector<4x128xf32>
    %187 = vector.shape_cast %186 : vector<4x128xf32> to vector<4x128x1xf32>
    %188 = vector.broadcast %187 : vector<4x128x1xf32> to vector<4x128x128xf32>
    %189 = arith.divf %185, %188 : vector<4x128x128xf32>
    %190 = arith.truncf %189 : vector<4x128x128xf32> to vector<4x128x128xbf16>
    %191 = arith.truncf %165 : vector<4x128x4xf32> to vector<4x128x4xbf16>
    "tpu.trace_start"() <{level = 10 : i32, message = "nrp,npd->nrd"}> : () -> ()
    %cst_49 = arith.constant dense<0.000000e+00> : vector<4x128x4xf32>
    %192 = tpu.matmul %190, %191, %cst_49 {dimension_numbers = #tpu.dot_dimension_numbers<[2], [1], [1], [2], [0, 0, 0, 1, 1, 2], [0], [0]>} : vector<4x128x128xbf16>, vector<4x128x4xbf16>, vector<4x128x4xf32> -> vector<4x128x4xf32>
    "tpu.trace_stop"() : () -> ()
    %193 = vector.extract_strided_slice %192 {offsets = [0, 0, 0], sizes = [1, 128, 4], strides = [1, 1, 1]} : vector<4x128x4xf32> to vector<1x128x4xf32>
    %194 = vector.shape_cast %193 : vector<1x128x4xf32> to vector<128x4xf32>
    %195 = vector.extract_strided_slice %192 {offsets = [1, 0, 0], sizes = [1, 128, 4], strides = [1, 1, 1]} : vector<4x128x4xf32> to vector<1x128x4xf32>
    %196 = vector.shape_cast %195 : vector<1x128x4xf32> to vector<128x4xf32>
    %197 = vector.extract_strided_slice %192 {offsets = [2, 0, 0], sizes = [1, 128, 4], strides = [1, 1, 1]} : vector<4x128x4xf32> to vector<1x128x4xf32>
    %198 = vector.shape_cast %197 : vector<1x128x4xf32> to vector<128x4xf32>
    %199 = vector.extract_strided_slice %192 {offsets = [3, 0, 0], sizes = [1, 128, 4], strides = [1, 1, 1]} : vector<4x128x4xf32> to vector<1x128x4xf32>
    %200 = vector.shape_cast %199 : vector<1x128x4xf32> to vector<128x4xf32>
    %201 = tpu.concatenate %194, %196, %198, %200 in 1 : vector<128x4xf32>, vector<128x4xf32>, vector<128x4xf32>, vector<128x4xf32> -> vector<128x16xf32>
    %c128 = arith.constant 128 : index
    %c0_50 = arith.constant 0 : index
    %202 = vector.load %arg1[%c128, %c0_50] : memref<208x128xbf16, #tpu.memory_space<vmem>>, vector<16x16xbf16>
    %203 = arith.truncf %201 : vector<128x16xf32> to vector<128x16xbf16>
    %cst_51 = arith.constant dense<0.000000e+00> : vector<128x16xf32>
    %204 = tpu.matmul %203, %202, %cst_51 {dimension_numbers = #tpu.dot_dimension_numbers<[1], [0], [0], [1], [0, 0, 1, 1], [], []>} : vector<128x16xbf16>, vector<16x16xbf16>, vector<128x16xf32> -> vector<128x16xf32>
    %205 = vector.extract_strided_slice %93 {offsets = [3, 0], sizes = [1, 16], strides = [1, 1]} : vector<4x16xf32> to vector<1x16xf32>
    %206 = vector.broadcast %205 : vector<1x16xf32> to vector<128x16xf32>
    %207 = arith.addf %204, %206 : vector<128x16xf32>
    %208 = vector.extract_strided_slice %207 {offsets = [0, 0], sizes = [16, 16], strides = [1, 1]} : vector<128x16xf32> to vector<16x16xf32>
    %209 = vector.extract_strided_slice %207 {offsets = [16, 0], sizes = [16, 16], strides = [1, 1]} : vector<128x16xf32> to vector<16x16xf32>
    %210 = vector.extract_strided_slice %207 {offsets = [32, 0], sizes = [16, 16], strides = [1, 1]} : vector<128x16xf32> to vector<16x16xf32>
    %211 = vector.extract_strided_slice %207 {offsets = [48, 0], sizes = [16, 16], strides = [1, 1]} : vector<128x16xf32> to vector<16x16xf32>
    %212 = vector.extract_strided_slice %207 {offsets = [64, 0], sizes = [16, 16], strides = [1, 1]} : vector<128x16xf32> to vector<16x16xf32>
    %213 = vector.extract_strided_slice %207 {offsets = [80, 0], sizes = [16, 16], strides = [1, 1]} : vector<128x16xf32> to vector<16x16xf32>
    %214 = vector.extract_strided_slice %207 {offsets = [96, 0], sizes = [16, 16], strides = [1, 1]} : vector<128x16xf32> to vector<16x16xf32>
    %215 = vector.extract_strided_slice %207 {offsets = [112, 0], sizes = [16, 16], strides = [1, 1]} : vector<128x16xf32> to vector<16x16xf32>
    %216 = tpu.concatenate %208, %209, %210, %211, %212, %213, %214, %215 in 1 : vector<16x16xf32>, vector<16x16xf32>, vector<16x16xf32>, vector<16x16xf32>, vector<16x16xf32>, vector<16x16xf32>, vector<16x16xf32>, vector<16x16xf32> -> vector<16x128xf32>
    %c144 = arith.constant 144 : index
    %c0_52 = arith.constant 0 : index
    %217 = vector.load %arg1[%c144, %c0_52] : memref<208x128xbf16, #tpu.memory_space<vmem>>, vector<7x16xbf16>
    %218 = arith.truncf %216 : vector<16x128xf32> to vector<16x128xbf16>
    %cst_53 = arith.constant dense<0.000000e+00> : vector<7x128xf32>
    %219 = tpu.matmul %217, %218, %cst_53 {dimension_numbers = #tpu.dot_dimension_numbers<[1], [0], [0], [1], [0, 0, 1, 1], [], []>} : vector<7x16xbf16>, vector<16x128xbf16>, vector<7x128xf32> -> vector<7x128xf32>
    %c16_54 = arith.constant 16 : index
    %c0_55 = arith.constant 0 : index
    %220 = vector.load %arg2[%c16_54, %c0_55] : memref<352x128xf32, #tpu.memory_space<vmem>>, vector<7x1xf32>
    %221 = vector.broadcast %220 : vector<7x1xf32> to vector<7x128xf32>
    %222 = arith.addf %219, %221 : vector<7x128xf32>
    %223 = arith.addf %222, %68 : vector<7x128xf32>
    %cst_56 = arith.constant 0.000000e+00 : f32
    %224 = vector.broadcast %cst_56 : f32 to vector<1x128xf32>
    %225 = tpu.concatenate %223, %224 in 0 : vector<7x128xf32>, vector<1x128xf32> -> vector<8x128xf32>
    %c2_i32_57 = arith.constant 2 : i32
    %226 = tpu.dynamic_rotate %225 by %c2_i32_57 dim 1 : vector<8x128xf32>, i32 -> vector<8x128xf32>
    %227 = vector.extract_strided_slice %1 {offsets = [0, 0], sizes = [1, 128], strides = [1, 1]} : vector<5x128xf32> to vector<1x128xf32>
    %228 = vector.broadcast %227 : vector<1x128xf32> to vector<8x128xf32>
    %229 = arith.mulf %226, %228 : vector<8x128xf32>
    %c1_i32_58 = arith.constant 1 : i32
    %230 = tpu.dynamic_rotate %225 by %c1_i32_58 dim 1 : vector<8x128xf32>, i32 -> vector<8x128xf32>
    %231 = vector.extract_strided_slice %1 {offsets = [1, 0], sizes = [1, 128], strides = [1, 1]} : vector<5x128xf32> to vector<1x128xf32>
    %232 = vector.broadcast %231 : vector<1x128xf32> to vector<8x128xf32>
    %233 = arith.mulf %230, %232 : vector<8x128xf32>
    %c127_i32_59 = arith.constant 127 : i32
    %234 = tpu.dynamic_rotate %225 by %c127_i32_59 dim 1 : vector<8x128xf32>, i32 -> vector<8x128xf32>
    %235 = vector.extract_strided_slice %1 {offsets = [3, 0], sizes = [1, 128], strides = [1, 1]} : vector<5x128xf32> to vector<1x128xf32>
    %236 = vector.broadcast %235 : vector<1x128xf32> to vector<8x128xf32>
    %237 = arith.mulf %234, %236 : vector<8x128xf32>
    %c126_i32_60 = arith.constant 126 : i32
    %238 = tpu.dynamic_rotate %225 by %c126_i32_60 dim 1 : vector<8x128xf32>, i32 -> vector<8x128xf32>
    %239 = vector.extract_strided_slice %1 {offsets = [4, 0], sizes = [1, 128], strides = [1, 1]} : vector<5x128xf32> to vector<1x128xf32>
    %240 = vector.broadcast %239 : vector<1x128xf32> to vector<8x128xf32>
    %241 = arith.mulf %238, %240 : vector<8x128xf32>
    %242 = tpu.concatenate %229, %233, %225, %237, %241 in 0 : vector<8x128xf32>, vector<8x128xf32>, vector<8x128xf32>, vector<8x128xf32>, vector<8x128xf32> -> vector<40x128xf32>
    %c160 = arith.constant 160 : index
    %c0_61 = arith.constant 0 : index
    %243 = vector.load %arg1[%c160, %c0_61] : memref<208x128xbf16, #tpu.memory_space<vmem>>, vector<8x40xbf16>
    %244 = arith.truncf %242 : vector<40x128xf32> to vector<40x128xbf16>
    %cst_62 = arith.constant dense<0.000000e+00> : vector<8x128xf32>
    %245 = tpu.matmul %243, %244, %cst_62 {dimension_numbers = #tpu.dot_dimension_numbers<[1], [0], [0], [1], [0, 0, 1, 1], [], []>} : vector<8x40xbf16>, vector<40x128xbf16>, vector<8x128xf32> -> vector<8x128xf32>
    %c24 = arith.constant 24 : index
    %c0_63 = arith.constant 0 : index
    %246 = vector.load %arg2[%c24, %c0_63] : memref<352x128xf32, #tpu.memory_space<vmem>>, vector<8x1xf32>
    %247 = vector.broadcast %246 : vector<8x1xf32> to vector<8x128xf32>
    %248 = arith.addf %245, %247 : vector<8x128xf32>
    %c64 = arith.constant 64 : index
    %c0_64 = arith.constant 0 : index
    %249 = vector.load %arg2[%c64, %c0_64] : memref<352x128xf32, #tpu.memory_space<vmem>>, vector<2x128xf32>
    %cst_65 = arith.constant dense<0.000000e+00> : vector<8x8xf32>
    %250 = tpu.matmul %248, %3, %cst_65 {dimension_numbers = #tpu.dot_dimension_numbers<[1], [0], [0], [1], [0, 0, 1, 1], [], []>} : vector<8x128xf32>, vector<128x8xf32>, vector<8x8xf32> -> vector<8x8xf32>
    %cst_66 = arith.constant dense<0.000000e+00> : vector<8x128xf32>
    %251 = tpu.matmul %250, %2, %cst_66 {dimension_numbers = #tpu.dot_dimension_numbers<[1], [0], [0], [1], [0, 0, 1, 1], [], []>} : vector<8x8xf32>, vector<8x128xf32>, vector<8x128xf32> -> vector<8x128xf32>
    %cst_67 = arith.constant 6.250000e-02 : f32
    %252 = vector.broadcast %cst_67 : f32 to vector<8x128xf32>
    %253 = arith.mulf %251, %252 : vector<8x128xf32>
    %254 = arith.subf %248, %253 : vector<8x128xf32>
    %255 = arith.mulf %254, %254 : vector<8x128xf32>
    %cst_68 = arith.constant dense<0.000000e+00> : vector<8x8xf32>
    %256 = tpu.matmul %255, %3, %cst_68 {dimension_numbers = #tpu.dot_dimension_numbers<[1], [0], [0], [1], [0, 0, 1, 1], [], []>} : vector<8x128xf32>, vector<128x8xf32>, vector<8x8xf32> -> vector<8x8xf32>
    %cst_69 = arith.constant dense<0.000000e+00> : vector<8x128xf32>
    %257 = tpu.matmul %256, %2, %cst_69 {dimension_numbers = #tpu.dot_dimension_numbers<[1], [0], [0], [1], [0, 0, 1, 1], [], []>} : vector<8x8xf32>, vector<8x128xf32>, vector<8x128xf32> -> vector<8x128xf32>
    %cst_70 = arith.constant 6.250000e-02 : f32
    %258 = vector.broadcast %cst_70 : f32 to vector<8x128xf32>
    %259 = arith.mulf %257, %258 : vector<8x128xf32>
    %cst_71 = arith.constant 9.99999974E-6 : f32
    %260 = vector.broadcast %cst_71 : f32 to vector<8x128xf32>
    %261 = arith.addf %259, %260 : vector<8x128xf32>
    %262 = math.rsqrt %261 : vector<8x128xf32>
    %263 = arith.mulf %254, %262 : vector<8x128xf32>
    %264 = vector.extract_strided_slice %249 {offsets = [0, 0], sizes = [1, 128], strides = [1, 1]} : vector<2x128xf32> to vector<1x128xf32>
    %265 = vector.broadcast %264 : vector<1x128xf32> to vector<8x128xf32>
    %266 = arith.mulf %263, %265 : vector<8x128xf32>
    %267 = vector.extract_strided_slice %249 {offsets = [1, 0], sizes = [1, 128], strides = [1, 1]} : vector<2x128xf32> to vector<1x128xf32>
    %268 = vector.broadcast %267 : vector<1x128xf32> to vector<8x128xf32>
    %269 = arith.addf %266, %268 : vector<8x128xf32>
    %cst_72 = arith.constant 0.000000e+00 : f32
    %270 = vector.broadcast %cst_72 : f32 to vector<8x128xf32>
    %271 = arith.maximumf %269, %270 : vector<8x128xf32>
    %272 = math.absf %269 : vector<8x128xf32>
    %cst_73 = arith.constant 0.000000e+00 : f32
    %273 = vector.broadcast %cst_73 : f32 to vector<8x128xf32>
    %274 = arith.subf %273, %272 : vector<8x128xf32>
    %275 = math.exp %274 : vector<8x128xf32>
    %cst_74 = arith.constant 1.000000e+00 : f32
    %276 = vector.broadcast %cst_74 : f32 to vector<8x128xf32>
    %277 = arith.addf %276, %275 : vector<8x128xf32>
    %278 = math.log %277 : vector<8x128xf32>
    %279 = arith.addf %271, %278 : vector<8x128xf32>
    %280 = math.tanh %279 : vector<8x128xf32>
    %281 = arith.mulf %269, %280 : vector<8x128xf32>
    %c176 = arith.constant 176 : index
    %c0_75 = arith.constant 0 : index
    %282 = vector.load %arg1[%c176, %c0_75] : memref<208x128xbf16, #tpu.memory_space<vmem>>, vector<8x4xbf16>
    %283 = arith.truncf %0 : vector<4x128xf32> to vector<4x128xbf16>
    %cst_76 = arith.constant dense<0.000000e+00> : vector<8x128xf32>
    %284 = tpu.matmul %282, %283, %cst_76 {dimension_numbers = #tpu.dot_dimension_numbers<[1], [0], [0], [1], [0, 0, 1, 1], [], []>} : vector<8x4xbf16>, vector<4x128xbf16>, vector<8x128xf32> -> vector<8x128xf32>
    %285 = arith.addf %281, %284 : vector<8x128xf32>
    %c32_77 = arith.constant 32 : index
    %c0_78 = arith.constant 0 : index
    %286 = vector.load %arg2[%c32_77, %c0_78] : memref<352x128xf32, #tpu.memory_space<vmem>>, vector<8x1xf32>
    %287 = vector.broadcast %286 : vector<8x1xf32> to vector<8x128xf32>
    %288 = arith.addf %285, %287 : vector<8x128xf32>
    %c0_79 = arith.constant 0 : index
    %c0_80 = arith.constant 0 : index
    %289 = vector.load %arg3[%c0_79, %c0_80] : memref<8x128xf32, #tpu.memory_space<vmem>>, vector<8x128xf32>
    tpu.vector_store %arg3[%c0_79, %c0_80], %288 {strides = array<i32>} : memref<8x128xf32, #tpu.memory_space<vmem>>, vector<8x128xf32>,
    %c1_i32_81 = arith.constant 1 : i32
    %290 = tpu.dynamic_rotate %288 by %c1_i32_81 dim 1 : vector<8x128xf32>, i32 -> vector<8x128xf32>
    %291 = vector.extract_strided_slice %1 {offsets = [1, 0], sizes = [1, 128], strides = [1, 1]} : vector<5x128xf32> to vector<1x128xf32>
    %292 = vector.broadcast %291 : vector<1x128xf32> to vector<8x128xf32>
    %293 = arith.mulf %290, %292 : vector<8x128xf32>
    %c127_i32_82 = arith.constant 127 : i32
    %294 = tpu.dynamic_rotate %288 by %c127_i32_82 dim 1 : vector<8x128xf32>, i32 -> vector<8x128xf32>
    %295 = vector.extract_strided_slice %1 {offsets = [3, 0], sizes = [1, 128], strides = [1, 1]} : vector<5x128xf32> to vector<1x128xf32>
    %296 = vector.broadcast %295 : vector<1x128xf32> to vector<8x128xf32>
    %297 = arith.mulf %294, %296 : vector<8x128xf32>
    %298 = tpu.concatenate %293, %288, %297 in 0 : vector<8x128xf32>, vector<8x128xf32>, vector<8x128xf32> -> vector<24x128xf32>
    %c192 = arith.constant 192 : index
    %c0_83 = arith.constant 0 : index
    %299 = vector.load %arg1[%c192, %c0_83] : memref<208x128xbf16, #tpu.memory_space<vmem>>, vector<8x24xbf16>
    %300 = arith.truncf %298 : vector<24x128xf32> to vector<24x128xbf16>
    %cst_84 = arith.constant dense<0.000000e+00> : vector<8x128xf32>
    %301 = tpu.matmul %299, %300, %cst_84 {dimension_numbers = #tpu.dot_dimension_numbers<[1], [0], [0], [1], [0, 0, 1, 1], [], []>} : vector<8x24xbf16>, vector<24x128xbf16>, vector<8x128xf32> -> vector<8x128xf32>
    %c40 = arith.constant 40 : index
    %c0_85 = arith.constant 0 : index
    %302 = vector.load %arg2[%c40, %c0_85] : memref<352x128xf32, #tpu.memory_space<vmem>>, vector<8x1xf32>
    %303 = vector.broadcast %302 : vector<8x1xf32> to vector<8x128xf32>
    %304 = arith.addf %301, %303 : vector<8x128xf32>
    %c0_86 = arith.constant 0 : index
    %c0_87 = arith.constant 0 : index
    %305 = vector.load %arg4[%c0_86, %c0_87] : memref<8x128xf32, #tpu.memory_space<vmem>>, vector<8x128xf32>
    tpu.vector_store %arg4[%c0_86, %c0_87], %304 {strides = array<i32>} : memref<8x128xf32, #tpu.memory_space<vmem>>, vector<8x128xf32>,
    return
  }
}

</mosaic_0001>

<llo_original>
// kernel: forward.1
$region0: #{forward.1}
  #allocation0 [shape = 'u32[]', space=smem, size = 0x4, offset = 0x4, fixed_abs, tag = 'smem constant byte address 0x4 - core index']
  #allocation1 [shape = 'u32[144,128]{1,0:T(1,128)}', space=vmem, size = 0x12000, scoped, tag = 'internal scratch']
  %s0 = inlined_call_operand.vmem [shape: f32[4,128], index: 0, kind: input, shape index: {}]
  %s1 = inlined_call_operand.vmem [shape: bf16[208,128], index: 1, kind: input, shape index: {}]
  %s2 = inlined_call_operand.hbm [shape: f32[352,128], index: 2, kind: input, shape index: {}]
  %s3 = inlined_call_operand.vmem [shape: f32[8,128], index: 3, kind: output, shape index: {0}]
  %s4 = inlined_call_operand.vmem [shape: f32[8,128], index: 4, kind: output, shape index: {1}]
  %5 = xla_tuple %s3, %s4
  %s6 = sld [smem:[#allocation0]]
  $region34: #{forward.1} parent=0
    _
  %s8 = ssub.s32 1, %s6
  %s9 = scalar_select 0, %s8, %s6
  $region1: #{forward.1} parent=0
    #allocation2 [shape = 'u8[180224]{0}', space=vmem, size = 0x2c000, scoped, tag = 'input window, operand 2, single buffered']
    #allocation3 [shape = 's32[1]{0}', space=sflag, size = 0x4, scoped, tag = 'scoped memory for forward.1']
    %10 = vsyncpa [#allocation3], 0
    // Predicated region
    $region2: #{forward.1} parent=1 // pred_check
      _
    $region3: #{forward.1} parent=1 // pred_check_branch
      %12 = sbr.rel (0) target = $region5
    $region4: #{forward.1} parent=1 // pred_region
      _
    $region5: #{forward.1} parent=1 // pred_fallthru
      _
    // Predicated region
    $region6: #{forward.1} parent=1 // pred_check
      _
    $region7: #{forward.1} parent=1 // pred_check_branch
      %14 = sbr.rel (0) target = $region9
    $region8: #{forward.1} parent=1 // pred_region
      _
    $region9: #{forward.1} parent=1 // pred_fallthru
      _
    // Predicated region
    $region10: #{forward.1} parent=1 // pred_check
      _
    $region11: #{forward.1} parent=1 // pred_check_branch
      %16 = sbr.rel (0) target = $region13
    $region12: #{forward.1} parent=1 // pred_region
      %s18 = ssub.s32 5632, 5632
      %19 = vsyncadd [#allocation3], %s18
      %s20 = sshll.u32 [#allocation2], 4
      %s21 = int_to_ptr.vmem [resolvable:$true] %s20
      %26 = dma.hbm_to_vmem [thread:$0]  %s2, 5632, %s21, [#allocation3], 128, 128, 8
    $region13: #{forward.1} parent=1 // pred_fallthru
      _
    // Predicated region
    $region14: #{forward.1} parent=1 // pred_check
      _
    $region15: #{forward.1} parent=1 // pred_check_branch
      %28 = sbr.rel (0) target = $region17
    $region16: #{forward.1} parent=1 // pred_region
      %29 = dma.done [#allocation3], 5632
    $region17: #{forward.1} parent=1 // pred_fallthru
      _
    %v31 = vld [vmem:[%s0] sm:$0xf]
    %v32 = vld [vmem:[#allocation2 + $0x50] sm:$0x1f]
    %v33 = vld [vmem:[#allocation2 + $0x58] sm:$0xff]
    %v34 = vld [vmem:[#allocation2 + $0x60] sm:$0xff]
    %v35 = vld [vmem:[#allocation2 + $0x68] sm:$0xff]
    %v36 = vld [vmem:[#allocation2 + $0x70] sm:$0xff]
    %v37 = vld [vmem:[#allocation2 + $0x78] sm:$0xff]
    %v38 = vld [vmem:[#allocation2 + $0x80] sm:$0xff]
    %v39 = vld [vmem:[#allocation2 + $0x88] sm:$0xff]
    %v40 = vld [vmem:[#allocation2 + $0x90] sm:$0xff]
    %v41 = vld [vmem:[#allocation2 + $0x98] sm:$0xff]
    %v42 = vld [vmem:[#allocation2 + $0xa0] sm:$0xff]
    %v43 = vld [vmem:[#allocation2 + $0xa8] sm:$0xff]
    %v44 = vld [vmem:[#allocation2 + $0xb0] sm:$0xff]
    %v45 = vld [vmem:[#allocation2 + $0xb8] sm:$0xff]
    %v46 = vld [vmem:[#allocation2 + $0xc0] sm:$0xff]
    %v47 = vld [vmem:[#allocation2 + $0xc8] sm:$0xff]
    %v48 = vld [vmem:[#allocation2 + $0xd0] sm:$0xff]
    %v49 = vld [vmem:[#allocation2 + $0xd8] sm:$0xff]
    %v50 = vld [vmem:[#allocation2 + $0xe0] sm:$0xff]
    %v51 = vld [vmem:[#allocation2 + $0xe8] sm:$0xff]
    %v52 = vld [vmem:[#allocation2 + $0xf0] sm:$0xff]
    %v53 = vld [vmem:[#allocation2 + $0xf8] sm:$0xff]
    %v54 = vld [vmem:[#allocation2 + $0x100] sm:$0xff]
    %v55 = vld [vmem:[#allocation2 + $0x108] sm:$0xff]
    %v56 = vld [vmem:[#allocation2 + $0x110] sm:$0xff]
    %v57 = vld [vmem:[#allocation2 + $0x118] sm:$0xff]
    %v58 = vld [vmem:[#allocation2 + $0x120] sm:$0xff]
    %v59 = vld [vmem:[#allocation2 + $0x128] sm:$0xff]
    %v60 = vld [vmem:[#allocation2 + $0x130] sm:$0xff]
    %v61 = vld [vmem:[#allocation2 + $0x138] sm:$0xff]
    %v62 = vld [vmem:[#allocation2 + $0x140] sm:$0xff]
    %v63 = vld [vmem:[#allocation2 + $0x148] sm:$0xff]
    %v64 = vld [vmem:[#allocation2 + $0x150] sm:$0xff]
    %v65 = vld [vmem:[#allocation2 + $0x158] sm:$0xff]
    %vm66 = vcmask 1043456
    %v67 = vsel %vm66, %v31, 0.0
    %68 = vrot.lane.b32.xlu0 %v67, 2
    %v69 = vpop.permute.xlu0 %68
    %v70 = vlaneseq
    %v71 = vshrl.u32 %v70, 7
    %v72 = vsub.s32 0, %v71
    %v73 = vrot.slane %v32, %v72
    %v74 = vmul.f32 %v69, %v73
    %75 = vrot.lane.b32.xlu0 %v67, 1
    %v76 = vpop.permute.xlu0 %75
    %v77 = vlaneseq
    %v78 = vshrl.u32 %v77, 7
    %v79 = vsub.s32 1, %v78
    %v80 = vrot.slane %v32, %v79
    %v81 = vmul.f32 %v76, %v80
    %82 = vrot.lane.b32.xlu0 %v67, 127
    %v83 = vpop.permute.xlu0 %82
    %v84 = vlaneseq
    %v85 = vshrl.u32 %v84, 7
    %v86 = vsub.s32 3, %v85
    %v87 = vrot.slane %v32, %v86
    %v88 = vmul.f32 %v83, %v87
    %89 = vrot.lane.b32.xlu0 %v67, 126
    %v90 = vpop.permute.xlu0 %89
    %v91 = vlaneseq
    %v92 = vshrl.u32 %v91, 7
    %v93 = vsub.s32 4, %v92
    %v94 = vrot.slane %v32, %v93
    %v95 = vmul.f32 %v90, %v94
    %v96 = vld [vmem:[%s1] sm:$0xf]
    %v97 = vpack.c.bf16 %v81, %v74
    %v98 = vpack.c.bf16 %v88, %v67
    %v99 = vpack.c.bf16 %v95, %v95
    %v100 = vld [vmem:[#allocation2] sm:$0x7f]
    %102 = vset.pattern.permute.xlu0 0
    %103 = vperm.xlu0 %102, %v100
    %v104 = vpop.permute.xlu0 %103
    %vm106 = vcmask 326656
    %v108 = vsel %vm106, %v96, 0
    %v111 = vsel %vm66, %v99, 0
    %113 = vmatprep.subr.bf16.mxu0 0
    %114 = vmatpush1.bf16.msra.mxu0 %v97
    %115 = vmatprep.subr.bf16.mxu0 0
    %116 = vmatpush1.bf16.msra.mxu0 %v98
    %117 = vmatprep.subr.bf16.mxu0 0
    %118 = vmatpush1.bf16.msra.mxu0 %v111
    %119 = vmatprep.subr.bf16.mxu0 0
    %120 = vmatpush1.bf16.msra.mxu0 0
    %121 = vmatprep.subr.bf16.mxu0 0
    %122 = vmatpush1.bf16.msra.mxu0 0
    %123 = vmatprep.subr.bf16.mxu0 0
    %124 = vmatpush1.bf16.msra.mxu0 0
    %125 = vmatprep.subr.bf16.mxu0 0
    %126 = vmatpush1.bf16.msra.mxu0 0
    %127 = vmatprep.subr.bf16.mxu0 0
    %128 = vmatpush1.bf16.msra.mxu0 0
    %129 = vmatprep.subr.bf16.mxu0 0
    %130 = vmatpush1.bf16.msra.mxu0 0
    %131 = vmatprep.subr.bf16.mxu0 0
    %132 = vmatpush1.bf16.msra.mxu0 0
    %133 = vmatprep.subr.bf16.mxu0 0
    %134 = vmatpush1.bf16.msra.mxu0 0
    %135 = vmatprep.subr.bf16.mxu0 0
    %136 = vmatpush1.bf16.msra.mxu0 0
    %137 = vmatprep.subr.bf16.mxu0 0
    %138 = vmatpush1.bf16.msra.mxu0 0
    %139 = vmatprep.subr.bf16.mxu0 0
    %140 = vmatpush1.bf16.msra.mxu0 0
    %141 = vmatprep.subr.bf16.mxu0 0
    %142 = vmatpush1.bf16.msra.mxu0 0
    %143 = vmatprep.subr.bf16.mxu0 0
    %144 = vmatpush1.bf16.msra.mxu0 0
    %145 = vmatprep.mubr.bf16.mxu0 0
    %146 = vmatmul.mubr.bf16.gmra.mrb[0].mxu0 %v108
    %v147 = vpop.f32.mrb[0].mxu0
    %v148 = vadd.f32 %v104, %v147
    %v149 = vpop.f32.mrb[0].mxu0
    %v150 = vpop.f32.mrb[0].mxu0
    %v151 = vpop.f32.mrb[0].mxu0
    %152 = vdwg.mxu0
    %v153 = vld [vmem:[#allocation2 + $0x30] sm:$0x3]
    %154 = vmatprep.subr.mxu0 0.0
    %155 = vmatpush1.msra.mxu0 %v34
    %156 = vmatprep.subr.mxu0 0.0
    %157 = vmatpush1.msra.mxu0 %v35
    %158 = vmatprep.subr.mxu0 0.0
    %159 = vmatpush1.msra.mxu0 %v36
    %160 = vmatprep.subr.mxu0 0.0
    %161 = vmatpush1.msra.mxu0 %v37
    %162 = vmatprep.subr.mxu0 0.0
    %163 = vmatpush1.msra.mxu0 %v38
    %164 = vmatprep.subr.mxu0 0.0
    %165 = vmatpush1.msra.mxu0 %v39
    %166 = vmatprep.subr.mxu0 0.0
    %167 = vmatpush1.msra.mxu0 %v40
    %168 = vmatprep.subr.mxu0 0.0
    %169 = vmatpush1.msra.mxu0 %v41
    %170 = vmatprep.subr.mxu0 0.0
    %171 = vmatpush1.msra.mxu0 %v42
    %172 = vmatprep.subr.mxu0 0.0
    %173 = vmatpush1.msra.mxu0 %v43
    %174 = vmatprep.subr.mxu0 0.0
    %175 = vmatpush1.msra.mxu0 %v44
    %176 = vmatprep.subr.mxu0 0.0
    %177 = vmatpush1.msra.mxu0 %v45
    %178 = vmatprep.subr.mxu0 0.0
    %179 = vmatpush1.msra.mxu0 %v46
    %180 = vmatprep.subr.mxu0 0.0
    %181 = vmatpush1.msra.mxu0 %v47
    %182 = vmatprep.subr.mxu0 0.0
    %183 = vmatpush1.msra.mxu0 %v48
    %184 = vmatprep.subr.mxu0 0.0
    %185 = vmatpush1.msra.mxu0 %v49
    %186 = vmatprep.subr.mxu0 0.0
    %187 = vmatpush1.msra.mxu0 0.0
    %188 = vmatprep.subr.mxu0 0.0
    %189 = vmatpush1.msra.mxu0 0.0
    %190 = vmatprep.subr.mxu0 0.0
    %191 = vmatpush1.msra.mxu0 0.0
    %192 = vmatprep.subr.mxu0 0.0
    %193 = vmatpush1.msra.mxu0 0.0
    %194 = vmatprep.subr.mxu0 0.0
    %195 = vmatpush1.msra.mxu0 0.0
    %196 = vmatprep.subr.mxu0 0.0
    %197 = vmatpush1.msra.mxu0 0.0
    %198 = vmatprep.subr.mxu0 0.0
    %199 = vmatpush1.msra.mxu0 0.0
    %200 = vmatprep.subr.mxu0 0.0
    %201 = vmatpush1.msra.mxu0 0.0
    %202 = vmatprep.subr.mxu0 0.0
    %203 = vmatpush1.msra.mxu0 0.0
    %204 = vmatprep.subr.mxu0 0.0
    %205 = vmatpush1.msra.mxu0 0.0
    %206 = vmatprep.subr.mxu0 0.0
    %207 = vmatpush1.msra.mxu0 0.0
    %208 = vmatprep.subr.mxu0 0.0
    %209 = vmatpush1.msra.mxu0 0.0
    %210 = vmatprep.subr.mxu0 0.0
    %211 = vmatpush1.msra.mxu0 0.0
    %212 = vmatprep.subr.mxu0 0.0
    %213 = vmatpush1.msra.mxu0 0.0
    %214 = vmatprep.subr.mxu0 0.0
    %215 = vmatpush1.msra.mxu0 0.0
    %216 = vmatprep.subr.mxu0 0.0
    %217 = vmatpush1.msra.mxu0 0.0
    %218 = vmatprep.mubr.f32.mxu0 0.0
    %219 = vmatmul.mubr.f32.gmra.mrb[0].mxu0 %v148
    %v220 = vpop.f32.mrb[0].mxu0
    %v221 = vadd.f32 0.0, %v220
    %v222 = vpop.f32.mrb[0].mxu0
    %223 = vdwg.mxu0
    %vm224 = vcmask 64512
    %v226 = vsel %vm224, %v221, 0
    %228 = vmatprep.subr.mxu0 0.0
    %229 = vmatpush1.msra.mxu0 %v33
    %230 = vmatprep.subr.mxu0 0.0
    %231 = vmatpush1.msra.mxu0 0.0
    %232 = vmatprep.subr.mxu0 0.0
    %233 = vmatpush1.msra.mxu0 0.0
    %234 = vmatprep.subr.mxu0 0.0
    %235 = vmatpush1.msra.mxu0 0.0
    %236 = vmatprep.subr.mxu0 0.0
    %237 = vmatpush1.msra.mxu0 0.0
    %238 = vmatprep.subr.mxu0 0.0
    %239 = vmatpush1.msra.mxu0 0.0
    %240 = vmatprep.subr.mxu0 0.0
    %241 = vmatpush1.msra.mxu0 0.0
    %242 = vmatprep.subr.mxu0 0.0
    %243 = vmatpush1.msra.mxu0 0.0
    %244 = vmatprep.subr.mxu0 0.0
    %245 = vmatpush1.msra.mxu0 0.0
    %246 = vmatprep.subr.mxu0 0.0
    %247 = vmatpush1.msra.mxu0 0.0
    %248 = vmatprep.subr.mxu0 0.0
    %249 = vmatpush1.msra.mxu0 0.0
    %250 = vmatprep.subr.mxu0 0.0
    %251 = vmatpush1.msra.mxu0 0.0
    %252 = vmatprep.subr.mxu0 0.0
    %253 = vmatpush1.msra.mxu0 0.0
    %254 = vmatprep.subr.mxu0 0.0
    %255 = vmatpush1.msra.mxu0 0.0
    %256 = vmatprep.subr.mxu0 0.0
    %257 = vmatpush1.msra.mxu0 0.0
    %258 = vmatprep.subr.mxu0 0.0
    %259 = vmatpush1.msra.mxu0 0.0
    %260 = vmatprep.subr.mxu0 0.0
    %261 = vmatpush1.msra.mxu0 0.0
    %262 = vmatprep.subr.mxu0 0.0
    %263 = vmatpush1.msra.mxu0 0.0
    %264 = vmatprep.subr.mxu0 0.0
    %265 = vmatpush1.msra.mxu0 0.0
    %266 = vmatprep.subr.mxu0 0.0
    %267 = vmatpush1.msra.mxu0 0.0
    %268 = vmatprep.subr.mxu0 0.0
    %269 = vmatpush1.msra.mxu0 0.0
    %270 = vmatprep.subr.mxu0 0.0
    %271 = vmatpush1.msra.mxu0 0.0
    %272 = vmatprep.subr.mxu0 0.0
    %273 = vmatpush1.msra.mxu0 0.0
    %274 = vmatprep.subr.mxu0 0.0
    %275 = vmatpush1.msra.mxu0 0.0
    %276 = vmatprep.subr.mxu0 0.0
    %277 = vmatpush1.msra.mxu0 0.0
    %278 = vmatprep.subr.mxu0 0.0
    %279 = vmatpush1.msra.mxu0 0.0
    %280 = vmatprep.subr.mxu0 0.0
    %281 = vmatpush1.msra.mxu0 0.0
    %282 = vmatprep.subr.mxu0 0.0
    %283 = vmatpush1.msra.mxu0 0.0
    %284 = vmatprep.subr.mxu0 0.0
    %285 = vmatpush1.msra.mxu0 0.0
    %286 = vmatprep.subr.mxu0 0.0
    %287 = vmatpush1.msra.mxu0 0.0
    %288 = vmatprep.subr.mxu0 0.0
    %289 = vmatpush1.msra.mxu0 0.0
    %290 = vmatprep.subr.mxu0 0.0
    %291 = vmatpush1.msra.mxu0 0.0
    %292 = vmatprep.mubr.f32.mxu0 0.0
    %293 = vmatmul.mubr.f32.gmra.mrb[0].mxu0 %v226
    %v294 = vpop.f32.mrb[0].mxu0
    %v295 = vadd.f32 0.0, %v294
    %v296 = vpop.f32.mrb[0].mxu0
    %297 = vdwg.mxu0
    %v298 = vmul.f32 %v295, 0.0625
    %v299 = vsub.f32 %v148, %v298
    %v300 = vmul.f32 %v299, %v299
    %301 = vmatprep.subr.mxu0 0.0
    %302 = vmatpush1.msra.mxu0 %v34
    %303 = vmatprep.subr.mxu0 0.0
    %304 = vmatpush1.msra.mxu0 %v35
    %305 = vmatprep.subr.mxu0 0.0
    %306 = vmatpush1.msra.mxu0 %v36
    %307 = vmatprep.subr.mxu0 0.0
    %308 = vmatpush1.msra.mxu0 %v37
    %309 = vmatprep.subr.mxu0 0.0
    %310 = vmatpush1.msra.mxu0 %v38
    %311 = vmatprep.subr.mxu0 0.0
    %312 = vmatpush1.msra.mxu0 %v39
    %313 = vmatprep.subr.mxu0 0.0
    %314 = vmatpush1.msra.mxu0 %v40
    %315 = vmatprep.subr.mxu0 0.0
    %316 = vmatpush1.msra.mxu0 %v41
    %317 = vmatprep.subr.mxu0 0.0
    %318 = vmatpush1.msra.mxu0 %v42
    %319 = vmatprep.subr.mxu0 0.0
    %320 = vmatpush1.msra.mxu0 %v43
    %321 = vmatprep.subr.mxu0 0.0
    %322 = vmatpush1.msra.mxu0 %v44
    %323 = vmatprep.subr.mxu0 0.0
    %324 = vmatpush1.msra.mxu0 %v45
    %325 = vmatprep.subr.mxu0 0.0
    %326 = vmatpush1.msra.mxu0 %v46
    %327 = vmatprep.subr.mxu0 0.0
    %328 = vmatpush1.msra.mxu0 %v47
    %329 = vmatprep.subr.mxu0 0.0
    %330 = vmatpush1.msra.mxu0 %v48
    %331 = vmatprep.subr.mxu0 0.0
    %332 = vmatpush1.msra.mxu0 %v49
    %333 = vmatprep.subr.mxu0 0.0
    %334 = vmatpush1.msra.mxu0 0.0
    %335 = vmatprep.subr.mxu0 0.0
    %336 = vmatpush1.msra.mxu0 0.0
    %337 = vmatprep.subr.mxu0 0.0
    %338 = vmatpush1.msra.mxu0 0.0
    %339 = vmatprep.subr.mxu0 0.0
    %340 = vmatpush1.msra.mxu0 0.0
    %341 = vmatprep.subr.mxu0 0.0
    %342 = vmatpush1.msra.mxu0 0.0
    %343 = vmatprep.subr.mxu0 0.0
    %344 = vmatpush1.msra.mxu0 0.0
    %345 = vmatprep.subr.mxu0 0.0
    %346 = vmatpush1.msra.mxu0 0.0
    %347 = vmatprep.subr.mxu0 0.0
    %348 = vmatpush1.msra.mxu0 0.0
    %349 = vmatprep.subr.mxu0 0.0
    %350 = vmatpush1.msra.mxu0 0.0
    %351 = vmatprep.subr.mxu0 0.0
    %352 = vmatpush1.msra.mxu0 0.0
    %353 = vmatprep.subr.mxu0 0.0
    %354 = vmatpush1.msra.mxu0 0.0
    %355 = vmatprep.subr.mxu0 0.0
    %356 = vmatpush1.msra.mxu0 0.0
    %357 = vmatprep.subr.mxu0 0.0
    %358 = vmatpush1.msra.mxu0 0.0
    %359 = vmatprep.subr.mxu0 0.0
    %360 = vmatpush1.msra.mxu0 0.0
    %361 = vmatprep.subr.mxu0 0.0
    %362 = vmatpush1.msra.mxu0 0.0
    %363 = vmatprep.subr.mxu0 0.0
    %364 = vmatpush1.msra.mxu0 0.0
    %365 = vmatprep.mubr.f32.mxu0 0.0
    %366 = vmatmul.mubr.f32.gmra.mrb[0].mxu0 %v300
    %v367 = vpop.f32.mrb[0].mxu0
    %v368 = vadd.f32 0.0, %v367
    %v369 = vpop.f32.mrb[0].mxu0
    %370 = vdwg.mxu0
    %v372 = vsel %vm224, %v368, 0
    %374 = vmatprep.subr.mxu0 0.0
    %375 = vmatpush1.msra.mxu0 %v33
    %376 = vmatprep.subr.mxu0 0.0
    %377 = vmatpush1.msra.mxu0 0.0
    %378 = vmatprep.subr.mxu0 0.0
    %379 = vmatpush1.msra.mxu0 0.0
    %380 = vmatprep.subr.mxu0 0.0
    %381 = vmatpush1.msra.mxu0 0.0
    %382 = vmatprep.subr.mxu0 0.0
    %383 = vmatpush1.msra.mxu0 0.0
    %384 = vmatprep.subr.mxu0 0.0
    %385 = vmatpush1.msra.mxu0 0.0
    %386 = vmatprep.subr.mxu0 0.0
    %387 = vmatpush1.msra.mxu0 0.0
    %388 = vmatprep.subr.mxu0 0.0
    %389 = vmatpush1.msra.mxu0 0.0
    %390 = vmatprep.subr.mxu0 0.0
    %391 = vmatpush1.msra.mxu0 0.0
    %392 = vmatprep.subr.mxu0 0.0
    %393 = vmatpush1.msra.mxu0 0.0
    %394 = vmatprep.subr.mxu0 0.0
    %395 = vmatpush1.msra.mxu0 0.0
    %396 = vmatprep.subr.mxu0 0.0
    %397 = vmatpush1.msra.mxu0 0.0
    %398 = vmatprep.subr.mxu0 0.0
    %399 = vmatpush1.msra.mxu0 0.0
    %400 = vmatprep.subr.mxu0 0.0
    %401 = vmatpush1.msra.mxu0 0.0
    %402 = vmatprep.subr.mxu0 0.0
    %403 = vmatpush1.msra.mxu0 0.0
    %404 = vmatprep.subr.mxu0 0.0
    %405 = vmatpush1.msra.mxu0 0.0
    %406 = vmatprep.subr.mxu0 0.0
    %407 = vmatpush1.msra.mxu0 0.0
    %408 = vmatprep.subr.mxu0 0.0
    %409 = vmatpush1.msra.mxu0 0.0
    %410 = vmatprep.subr.mxu0 0.0
    %411 = vmatpush1.msra.mxu0 0.0
    %412 = vmatprep.subr.mxu0 0.0
    %413 = vmatpush1.msra.mxu0 0.0
    %414 = vmatprep.subr.mxu0 0.0
    %415 = vmatpush1.msra.mxu0 0.0
    %416 = vmatprep.subr.mxu0 0.0
    %417 = vmatpush1.msra.mxu0 0.0
    %418 = vmatprep.subr.mxu0 0.0
    %419 = vmatpush1.msra.mxu0 0.0
    %420 = vmatprep.subr.mxu0 0.0
    %421 = vmatpush1.msra.mxu0 0.0
    %422 = vmatprep.subr.mxu0 0.0
    %423 = vmatpush1.msra.mxu0 0.0
    %424 = vmatprep.subr.mxu0 0.0
    %425 = vmatpush1.msra.mxu0 0.0
    %426 = vmatprep.subr.mxu0 0.0
    %427 = vmatpush1.msra.mxu0 0.0
    %428 = vmatprep.subr.mxu0 0.0
    %429 = vmatpush1.msra.mxu0 0.0
    %430 = vmatprep.subr.mxu0 0.0
    %431 = vmatpush1.msra.mxu0 0.0
    %432 = vmatprep.subr.mxu0 0.0
    %433 = vmatpush1.msra.mxu0 0.0
    %434 = vmatprep.subr.mxu0 0.0
    %435 = vmatpush1.msra.mxu0 0.0
    %436 = vmatprep.subr.mxu0 0.0
    %437 = vmatpush1.msra.mxu0 0.0
    %438 = vmatprep.mubr.f32.mxu0 0.0
    %439 = vmatmul.mubr.f32.gmra.mrb[0].mxu0 %v372
    %v440 = vpop.f32.mrb[0].mxu0
    %v441 = vadd.f32 0.0, %v440
    %v442 = vpop.f32.mrb[0].mxu0
    %443 = vdwg.mxu0
    %v444 = vmul.f32 %v441, 0.0625
    %v445 = vadd.f32 %v444, 1e-05
    %v446 = vrsqrt.pop %v445
    %v447 = vmul.f32 %v299, %v446
    %v448 = vlaneseq
    %v449 = vshrl.u32 %v448, 7
    %v450 = vsub.s32 0, %v449
    %v451 = vrot.slane %v153, %v450
    %v452 = vmul.f32 %v447, %v451
    %v453 = vlaneseq
    %v454 = vshrl.u32 %v453, 7
    %v455 = vsub.s32 1, %v454
    %v456 = vrot.slane %v153, %v455
    %v457 = vadd.f32 %v452, %v456
    %v458 = vmax.f32 %v457, 0.0
    %v459 = vand.u32 2147483647, %v457
    %v460 = vsub.f32 0.0, %v459
    %v461 = vmul.f32 %v460, 1.442695
    %v462 = vpow.pop %v461
    %v463 = vadd.f32 %v462, 1.0
    %v464 = vlog2.pop %v463
    %v465 = vmul.f32 %v464, 0.6931472
    %v466 = vadd.f32 %v458, %v465
    %v467 = vtanh.pop %v466
    %v468 = vmul.f32 %v457, %v467
    %v469 = vld [vmem:[%s1 + $0x8] sm:$0xf]
    %v470 = vpack.c.bf16 %v468, %v468
    %v471 = vld [vmem:[#allocation2 + $0x8] sm:$0x7f]
    %473 = vset.pattern.permute.xlu0 0
    %474 = vperm.xlu0 %473, %v471
    %v475 = vpop.permute.xlu0 %474
    %vm477 = vcmask 56320
    %v479 = vsel %vm477, %v469, 0
    %vm481 = vcmask 1042432
    %v482 = vsel %vm481, 4294967295, 65535
    %v483 = vsel %vm66, %v482, 0
    %v485 = vand.u32 %v470, %v483
    %487 = vmatprep.subr.bf16.mxu0 0
    %488 = vmatpush1.bf16.msra.mxu0 %v485
    %489 = vmatprep.subr.bf16.mxu0 0
    %490 = vmatpush1.bf16.msra.mxu0 0
    %491 = vmatprep.subr.bf16.mxu0 0
    %492 = vmatpush1.bf16.msra.mxu0 0
    %493 = vmatprep.subr.bf16.mxu0 0
    %494 = vmatpush1.bf16.msra.mxu0 0
    %495 = vmatprep.subr.bf16.mxu0 0
    %496 = vmatpush1.bf16.msra.mxu0 0
    %497 = vmatprep.subr.bf16.mxu0 0
    %498 = vmatpush1.bf16.msra.mxu0 0
    %499 = vmatprep.subr.bf16.mxu0 0
    %500 = vmatpush1.bf16.msra.mxu0 0
    %501 = vmatprep.subr.bf16.mxu0 0
    %502 = vmatpush1.bf16.msra.mxu0 0
    %503 = vmatprep.subr.bf16.mxu0 0
    %504 = vmatpush1.bf16.msra.mxu0 0
    %505 = vmatprep.subr.bf16.mxu0 0
    %506 = vmatpush1.bf16.msra.mxu0 0
    %507 = vmatprep.subr.bf16.mxu0 0
    %508 = vmatpush1.bf16.msra.mxu0 0
    %509 = vmatprep.subr.bf16.mxu0 0
    %510 = vmatpush1.bf16.msra.mxu0 0
    %511 = vmatprep.subr.bf16.mxu0 0
    %512 = vmatpush1.bf16.msra.mxu0 0
    %513 = vmatprep.subr.bf16.mxu0 0
    %514 = vmatpush1.bf16.msra.mxu0 0
    %515 = vmatprep.subr.bf16.mxu0 0
    %516 = vmatpush1.bf16.msra.mxu0 0
    %517 = vmatprep.subr.bf16.mxu0 0
    %518 = vmatpush1.bf16.msra.mxu0 0
    %519 = vmatprep.mubr.bf16.mxu0 0
    %520 = vmatmul.mubr.bf16.gmra.mrb[0].mxu0 %v479
    %v521 = vpop.f32.mrb[0].mxu0
    %v522 = vadd.f32 %v475, %v521
    %v523 = vpop.f32.mrb[0].mxu0
    %v524 = vpop.f32.mrb[0].mxu0
    %v525 = vpop.f32.mrb[0].mxu0
    %526 = vdwg.mxu0
    %v527 = vld [vmem:[#allocation2 + $0x38] sm:$0x3]
    %528 = vmatprep.subr.mxu0 0.0
    %529 = vmatpush1.msra.mxu0 %v34
    %530 = vmatprep.subr.mxu0 0.0
    %531 = vmatpush1.msra.mxu0 %v35
    %532 = vmatprep.subr.mxu0 0.0
    %533 = vmatpush1.msra.mxu0 %v36
    %534 = vmatprep.subr.mxu0 0.0
    %535 = vmatpush1.msra.mxu0 %v37
    %536 = vmatprep.subr.mxu0 0.0
    %537 = vmatpush1.msra.mxu0 %v38
    %538 = vmatprep.subr.mxu0 0.0
    %539 = vmatpush1.msra.mxu0 %v39
    %540 = vmatprep.subr.mxu0 0.0
    %541 = vmatpush1.msra.mxu0 %v40
    %542 = vmatprep.subr.mxu0 0.0
    %543 = vmatpush1.msra.mxu0 %v41
    %544 = vmatprep.subr.mxu0 0.0
    %545 = vmatpush1.msra.mxu0 %v42
    %546 = vmatprep.subr.mxu0 0.0
    %547 = vmatpush1.msra.mxu0 %v43
    %548 = vmatprep.subr.mxu0 0.0
    %549 = vmatpush1.msra.mxu0 %v44
    %550 = vmatprep.subr.mxu0 0.0
    %551 = vmatpush1.msra.mxu0 %v45
    %552 = vmatprep.subr.mxu0 0.0
    %553 = vmatpush1.msra.mxu0 %v46
    %554 = vmatprep.subr.mxu0 0.0
    %555 = vmatpush1.msra.mxu0 %v47
    %556 = vmatprep.subr.mxu0 0.0
    %557 = vmatpush1.msra.mxu0 %v48
    %558 = vmatprep.subr.mxu0 0.0
    %559 = vmatpush1.msra.mxu0 %v49
    %560 = vmatprep.subr.mxu0 0.0
    %561 = vmatpush1.msra.mxu0 0.0
    %562 = vmatprep.subr.mxu0 0.0
    %563 = vmatpush1.msra.mxu0 0.0
    %564 = vmatprep.subr.mxu0 0.0
    %565 = vmatpush1.msra.mxu0 0.0
    %566 = vmatprep.subr.mxu0 0.0
    %567 = vmatpush1.msra.mxu0 0.0
    %568 = vmatprep.subr.mxu0 0.0
    %569 = vmatpush1.msra.mxu0 0.0
    %570 = vmatprep.subr.mxu0 0.0
    %571 = vmatpush1.msra.mxu0 0.0
    %572 = vmatprep.subr.mxu0 0.0
    %573 = vmatpush1.msra.mxu0 0.0
    %574 = vmatprep.subr.mxu0 0.0
    %575 = vmatpush1.msra.mxu0 0.0
    %576 = vmatprep.subr.mxu0 0.0
    %577 = vmatpush1.msra.mxu0 0.0
    %578 = vmatprep.subr.mxu0 0.0
    %579 = vmatpush1.msra.mxu0 0.0
    %580 = vmatprep.subr.mxu0 0.0
    %581 = vmatpush1.msra.mxu0 0.0
    %582 = vmatprep.subr.mxu0 0.0
    %583 = vmatpush1.msra.mxu0 0.0
    %584 = vmatprep.subr.mxu0 0.0
    %585 = vmatpush1.msra.mxu0 0.0
    %586 = vmatprep.subr.mxu0 0.0
    %587 = vmatpush1.msra.mxu0 0.0
    %588 = vmatprep.subr.mxu0 0.0
    %589 = vmatpush1.msra.mxu0 0.0
    %590 = vmatprep.subr.mxu0 0.0
    %591 = vmatpush1.msra.mxu0 0.0
    %592 = vmatprep.mubr.f32.mxu0 0.0
    %593 = vmatmul.mubr.f32.gmra.mrb[0].mxu0 %v522
    %v594 = vpop.f32.mrb[0].mxu0
    %v595 = vadd.f32 0.0, %v594
    %v596 = vpop.f32.mrb[0].mxu0
    %597 = vdwg.mxu0
    %v599 = vsel %vm224, %v595, 0
    %601 = vmatprep.subr.mxu0 0.0
    %602 = vmatpush1.msra.mxu0 %v33
    %603 = vmatprep.subr.mxu0 0.0
    %604 = vmatpush1.msra.mxu0 0.0
    %605 = vmatprep.subr.mxu0 0.0
    %606 = vmatpush1.msra.mxu0 0.0
    %607 = vmatprep.subr.mxu0 0.0
    %608 = vmatpush1.msra.mxu0 0.0
    %609 = vmatprep.subr.mxu0 0.0
    %610 = vmatpush1.msra.mxu0 0.0
    %611 = vmatprep.subr.mxu0 0.0
    %612 = vmatpush1.msra.mxu0 0.0
    %613 = vmatprep.subr.mxu0 0.0
    %614 = vmatpush1.msra.mxu0 0.0
    %615 = vmatprep.subr.mxu0 0.0
    %616 = vmatpush1.msra.mxu0 0.0
    %617 = vmatprep.subr.mxu0 0.0
    %618 = vmatpush1.msra.mxu0 0.0
    %619 = vmatprep.subr.mxu0 0.0
    %620 = vmatpush1.msra.mxu0 0.0
    %621 = vmatprep.subr.mxu0 0.0
    %622 = vmatpush1.msra.mxu0 0.0
    %623 = vmatprep.subr.mxu0 0.0
    %624 = vmatpush1.msra.mxu0 0.0
    %625 = vmatprep.subr.mxu0 0.0
    %626 = vmatpush1.msra.mxu0 0.0
    %627 = vmatprep.subr.mxu0 0.0
    %628 = vmatpush1.msra.mxu0 0.0
    %629 = vmatprep.subr.mxu0 0.0
    %630 = vmatpush1.msra.mxu0 0.0
    %631 = vmatprep.subr.mxu0 0.0
    %632 = vmatpush1.msra.mxu0 0.0
    %633 = vmatprep.subr.mxu0 0.0
    %634 = vmatpush1.msra.mxu0 0.0
    %635 = vmatprep.subr.mxu0 0.0
    %636 = vmatpush1.msra.mxu0 0.0
    %637 = vmatprep.subr.mxu0 0.0
    %638 = vmatpush1.msra.mxu0 0.0
    %639 = vmatprep.subr.mxu0 0.0
    %640 = vmatpush1.msra.mxu0 0.0
    %641 = vmatprep.subr.mxu0 0.0
    %642 = vmatpush1.msra.mxu0 0.0
    %643 = vmatprep.subr.mxu0 0.0
    %644 = vmatpush1.msra.mxu0 0.0
    %645 = vmatprep.subr.mxu0 0.0
    %646 = vmatpush1.msra.mxu0 0.0
    %647 = vmatprep.subr.mxu0 0.0
    %648 = vmatpush1.msra.mxu0 0.0
    %649 = vmatprep.subr.mxu0 0.0
    %650 = vmatpush1.msra.mxu0 0.0
    %651 = vmatprep.subr.mxu0 0.0
    %652 = vmatpush1.msra.mxu0 0.0
    %653 = vmatprep.subr.mxu0 0.0
    %654 = vmatpush1.msra.mxu0 0.0
    %655 = vmatprep.subr.mxu0 0.0
    %656 = vmatpush1.msra.mxu0 0.0
    %657 = vmatprep.subr.mxu0 0.0
    %658 = vmatpush1.msra.mxu0 0.0
    %659 = vmatprep.subr.mxu0 0.0
    %660 = vmatpush1.msra.mxu0 0.0
    %661 = vmatprep.subr.mxu0 0.0
    %662 = vmatpush1.msra.mxu0 0.0
    %663 = vmatprep.subr.mxu0 0.0
    %664 = vmatpush1.msra.mxu0 0.0
    %665 = vmatprep.mubr.f32.mxu0 0.0
    %666 = vmatmul.mubr.f32.gmra.mrb[0].mxu0 %v599
    %v667 = vpop.f32.mrb[0].mxu0
    %v668 = vadd.f32 0.0, %v667
    %v669 = vpop.f32.mrb[0].mxu0
    %670 = vdwg.mxu0
    %v671 = vmul.f32 %v668, 0.0625
    %v672 = vsub.f32 %v522, %v671
    %v673 = vmul.f32 %v672, %v672
    %674 = vmatprep.subr.mxu0 0.0
    %675 = vmatpush1.msra.mxu0 %v34
    %676 = vmatprep.subr.mxu0 0.0
    %677 = vmatpush1.msra.mxu0 %v35
    %678 = vmatprep.subr.mxu0 0.0
    %679 = vmatpush1.msra.mxu0 %v36
    %680 = vmatprep.subr.mxu0 0.0
    %681 = vmatpush1.msra.mxu0 %v37
    %682 = vmatprep.subr.mxu0 0.0
    %683 = vmatpush1.msra.mxu0 %v38
    %684 = vmatprep.subr.mxu0 0.0
    %685 = vmatpush1.msra.mxu0 %v39
    %686 = vmatprep.subr.mxu0 0.0
    %687 = vmatpush1.msra.mxu0 %v40
    %688 = vmatprep.subr.mxu0 0.0
    %689 = vmatpush1.msra.mxu0 %v41
    %690 = vmatprep.subr.mxu0 0.0
    %691 = vmatpush1.msra.mxu0 %v42
    %692 = vmatprep.subr.mxu0 0.0
    %693 = vmatpush1.msra.mxu0 %v43
    %694 = vmatprep.subr.mxu0 0.0
    %695 = vmatpush1.msra.mxu0 %v44
    %696 = vmatprep.subr.mxu0 0.0
    %697 = vmatpush1.msra.mxu0 %v45
    %698 = vmatprep.subr.mxu0 0.0
    %699 = vmatpush1.msra.mxu0 %v46
    %700 = vmatprep.subr.mxu0 0.0
    %701 = vmatpush1.msra.mxu0 %v47
    %702 = vmatprep.subr.mxu0 0.0
    %703 = vmatpush1.msra.mxu0 %v48
    %704 = vmatprep.subr.mxu0 0.0
    %705 = vmatpush1.msra.mxu0 %v49
    %706 = vmatprep.subr.mxu0 0.0
    %707 = vmatpush1.msra.mxu0 0.0
    %708 = vmatprep.subr.mxu0 0.0
    %709 = vmatpush1.msra.mxu0 0.0
    %710 = vmatprep.subr.mxu0 0.0
    %711 = vmatpush1.msra.mxu0 0.0
    %712 = vmatprep.subr.mxu0 0.0
    %713 = vmatpush1.msra.mxu0 0.0
    %714 = vmatprep.subr.mxu0 0.0
    %715 = vmatpush1.msra.mxu0 0.0
    %716 = vmatprep.subr.mxu0 0.0
    %717 = vmatpush1.msra.mxu0 0.0
    %718 = vmatprep.subr.mxu0 0.0
    %719 = vmatpush1.msra.mxu0 0.0
    %720 = vmatprep.subr.mxu0 0.0
    %721 = vmatpush1.msra.mxu0 0.0
    %722 = vmatprep.subr.mxu0 0.0
    %723 = vmatpush1.msra.mxu0 0.0
    %724 = vmatprep.subr.mxu0 0.0
    %725 = vmatpush1.msra.mxu0 0.0
    %726 = vmatprep.subr.mxu0 0.0
    %727 = vmatpush1.msra.mxu0 0.0
    %728 = vmatprep.subr.mxu0 0.0
    %729 = vmatpush1.msra.mxu0 0.0
    %730 = vmatprep.subr.mxu0 0.0
    %731 = vmatpush1.msra.mxu0 0.0
    %732 = vmatprep.subr.mxu0 0.0
    %733 = vmatpush1.msra.mxu0 0.0
    %734 = vmatprep.subr.mxu0 0.0
    %735 = vmatpush1.msra.mxu0 0.0
    %736 = vmatprep.subr.mxu0 0.0
    %737 = vmatpush1.msra.mxu0 0.0
    %738 = vmatprep.mubr.f32.mxu0 0.0
    %739 = vmatmul.mubr.f32.gmra.mrb[0].mxu0 %v673
    %v740 = vpop.f32.mrb[0].mxu0
    %v741 = vadd.f32 0.0, %v740
    %v742 = vpop.f32.mrb[0].mxu0
    %743 = vdwg.mxu0
    %v745 = vsel %vm224, %v741, 0
    %747 = vmatprep.subr.mxu0 0.0
    %748 = vmatpush1.msra.mxu0 %v33
    %749 = vmatprep.subr.mxu0 0.0
    %750 = vmatpush1.msra.mxu0 0.0
    %751 = vmatprep.subr.mxu0 0.0
    %752 = vmatpush1.msra.mxu0 0.0
    %753 = vmatprep.subr.mxu0 0.0
    %754 = vmatpush1.msra.mxu0 0.0
    %755 = vmatprep.subr.mxu0 0.0
    %756 = vmatpush1.msra.mxu0 0.0
    %757 = vmatprep.subr.mxu0 0.0
    %758 = vmatpush1.msra.mxu0 0.0
    %759 = vmatprep.subr.mxu0 0.0
    %760 = vmatpush1.msra.mxu0 0.0
    %761 = vmatprep.subr.mxu0 0.0
    %762 = vmatpush1.msra.mxu0 0.0
    %763 = vmatprep.subr.mxu0 0.0
    %764 = vmatpush1.msra.mxu0 0.0
    %765 = vmatprep.subr.mxu0 0.0
    %766 = vmatpush1.msra.mxu0 0.0
    %767 = vmatprep.subr.mxu0 0.0
    %768 = vmatpush1.msra.mxu0 0.0
    %769 = vmatprep.subr.mxu0 0.0
    %770 = vmatpush1.msra.mxu0 0.0
    %771 = vmatprep.subr.mxu0 0.0
    %772 = vmatpush1.msra.mxu0 0.0
    %773 = vmatprep.subr.mxu0 0.0
    %774 = vmatpush1.msra.mxu0 0.0
    %775 = vmatprep.subr.mxu0 0.0
    %776 = vmatpush1.msra.mxu0 0.0
    %777 = vmatprep.subr.mxu0 0.0
    %778 = vmatpush1.msra.mxu0 0.0
    %779 = vmatprep.subr.mxu0 0.0
    %780 = vmatpush1.msra.mxu0 0.0
    %781 = vmatprep.subr.mxu0 0.0
    %782 = vmatpush1.msra.mxu0 0.0
    %783 = vmatprep.subr.mxu0 0.0
    %784 = vmatpush1.msra.mxu0 0.0
    %785 = vmatprep.subr.mxu0 0.0
    %786 = vmatpush1.msra.mxu0 0.0
    %787 = vmatprep.subr.mxu0 0.0
    %788 = vmatpush1.msra.mxu0 0.0
    %789 = vmatprep.subr.mxu0 0.0
    %790 = vmatpush1.msra.mxu0 0.0
    %791 = vmatprep.subr.mxu0 0.0
    %792 = vmatpush1.msra.mxu0 0.0
    %793 = vmatprep.subr.mxu0 0.0
    %794 = vmatpush1.msra.mxu0 0.0
    %795 = vmatprep.subr.mxu0 0.0
    %796 = vmatpush1.msra.mxu0 0.0
    %797 = vmatprep.subr.mxu0 0.0
    %798 = vmatpush1.msra.mxu0 0.0
    %799 = vmatprep.subr.mxu0 0.0
    %800 = vmatpush1.msra.mxu0 0.0
    %801 = vmatprep.subr.mxu0 0.0
    %802 = vmatpush1.msra.mxu0 0.0
    %803 = vmatprep.subr.mxu0 0.0
    %804 = vmatpush1.msra.mxu0 0.0
    %805 = vmatprep.subr.mxu0 0.0
    %806 = vmatpush1.msra.mxu0 0.0
    %807 = vmatprep.subr.mxu0 0.0
    %808 = vmatpush1.msra.mxu0 0.0
    %809 = vmatprep.subr.mxu0 0.0
    %810 = vmatpush1.msra.mxu0 0.0
    %811 = vmatprep.mubr.f32.mxu0 0.0
    %812 = vmatmul.mubr.f32.gmra.mrb[0].mxu0 %v745
    %v813 = vpop.f32.mrb[0].mxu0
    %v814 = vadd.f32 0.0, %v813
    %v815 = vpop.f32.mrb[0].mxu0
    %816 = vdwg.mxu0
    %v817 = vmul.f32 %v814, 0.0625
    %v818 = vadd.f32 %v817, 1e-05
    %v819 = vrsqrt.pop %v818
    %v820 = vmul.f32 %v672, %v819
    %v821 = vlaneseq
    %v822 = vshrl.u32 %v821, 7
    %v823 = vsub.s32 0, %v822
    %v824 = vrot.slane %v527, %v823
    %v825 = vmul.f32 %v820, %v824
    %v826 = vlaneseq
    %v827 = vshrl.u32 %v826, 7
    %v828 = vsub.s32 1, %v827
    %v829 = vrot.slane %v527, %v828
    %v830 = vadd.f32 %v825, %v829
    %v831 = vld [vmem:[%s1 + $0x10] sm:$0xf]
    %v832 = vld [vmem:[%s1 + $0x14] sm:$0xf]
    %v833 = vld [vmem:[%s1 + $0x18] sm:$0xf]
    %v834 = vld [vmem:[%s1 + $0x1c] sm:$0xf]
    %v835 = vld [vmem:[%s1 + $0x20] sm:$0xf]
    %v836 = vld [vmem:[%s1 + $0x24] sm:$0xf]
    %v837 = vpack.c.bf16 %v830, %v830
    %v844 = vunpack.c.l.b16 %v831
    %v845 = vunpack.c.l.b16 %v832
    %v846 = vunpack.c.l.b16 %v833
    %v847 = vunpack.c.l.b16 %v834
    %v848 = vunpack.c.l.b16 %v835
    %v849 = vunpack.c.l.b16 %v836
    %v850 = vpack.c.b16 %v845, %v844
    %v851 = vpack.c.b16 %v847, %v846
    %v852 = vpack.c.b16 %v849, %v848
    %v854 = vsel %vm477, %v850, 0
    %v857 = vsel %vm477, %v851, 0
    %v860 = vsel %vm477, %v852, 0
    %v863 = vand.u32 %v837, %v483
    %865 = vmatprep.subr.bf16.mxu0 0
    %866 = vmatpush1.bf16.msra.mxu0 %v863
    %867 = vmatprep.subr.bf16.mxu0 0
    %868 = vmatpush1.bf16.msra.mxu0 0
    %869 = vmatprep.subr.bf16.mxu0 0
    %870 = vmatpush1.bf16.msra.mxu0 0
    %871 = vmatprep.subr.bf16.mxu0 0
    %872 = vmatpush1.bf16.msra.mxu0 0
    %873 = vmatprep.subr.bf16.mxu0 0
    %874 = vmatpush1.bf16.msra.mxu0 0
    %875 = vmatprep.subr.bf16.mxu0 0
    %876 = vmatpush1.bf16.msra.mxu0 0
    %877 = vmatprep.subr.bf16.mxu0 0
    %878 = vmatpush1.bf16.msra.mxu0 0
    %879 = vmatprep.subr.bf16.mxu0 0
    %880 = vmatpush1.bf16.msra.mxu0 0
    %881 = vmatprep.subr.bf16.mxu0 0
    %882 = vmatpush1.bf16.msra.mxu0 0
    %883 = vmatprep.subr.bf16.mxu0 0
    %884 = vmatpush1.bf16.msra.mxu0 0
    %885 = vmatprep.subr.bf16.mxu0 0
    %886 = vmatpush1.bf16.msra.mxu0 0
    %887 = vmatprep.subr.bf16.mxu0 0
    %888 = vmatpush1.bf16.msra.mxu0 0
    %889 = vmatprep.subr.bf16.mxu0 0
    %890 = vmatpush1.bf16.msra.mxu0 0
    %891 = vmatprep.subr.bf16.mxu0 0
    %892 = vmatpush1.bf16.msra.mxu0 0
    %893 = vmatprep.subr.bf16.mxu0 0
    %894 = vmatpush1.bf16.msra.mxu0 0
    %895 = vmatprep.subr.bf16.mxu0 0
    %896 = vmatpush1.bf16.msra.mxu0 0
    %897 = vmatprep.mubr.bf16.mxu0 0
    %898 = vmatmul.mubr.bf16.gmra.mrb[0].mxu0 %v854
    %v899 = vpop.f32.mrb[0].mxu0
    %v900 = vadd.f32 0.0, %v899
    %v901 = vpop.f32.mrb[0].mxu0
    %v902 = vpop.f32.mrb[0].mxu0
    %v903 = vadd.f32 0.0, %v902
    %v904 = vpop.f32.mrb[0].mxu0
    %905 = vmatprep.mubr.bf16.mxu0 0
    %906 = vmatmul.mubr.bf16.gmra.mrb[0].mxu0 %v857
    %v907 = vpop.f32.mrb[0].mxu0
    %v908 = vadd.f32 0.0, %v907
    %v909 = vpop.f32.mrb[0].mxu0
    %v910 = vpop.f32.mrb[0].mxu0
    %v911 = vadd.f32 0.0, %v910
    %v912 = vpop.f32.mrb[0].mxu0
    %913 = vmatprep.mubr.bf16.mxu0 0
    %914 = vmatmul.mubr.bf16.gmra.mrb[0].mxu0 %v860
    %v915 = vpop.f32.mrb[0].mxu0
    %v916 = vadd.f32 0.0, %v915
    %v917 = vpop.f32.mrb[0].mxu0
    %v918 = vpop.f32.mrb[0].mxu0
    %v919 = vadd.f32 0.0, %v918
    %v920 = vpop.f32.mrb[0].mxu0
    %921 = vdwg.mxu0
    %v922 = vld [vmem:[#allocation2 + $0x48] sm:$0xf]
    %925 = vrot.lane.b32.xlu0 %v900, 112
    %v926 = vpop.permute.xlu0 %925
    %927 = vrot.lane.b32.xlu0 %v903, 112
    %v928 = vpop.permute.xlu0 %927
    %931 = vrot.lane.b32.xlu0 %v900, 96
    %v932 = vpop.permute.xlu0 %931
    %933 = vrot.lane.b32.xlu0 %v903, 96
    %v934 = vpop.permute.xlu0 %933
    %937 = vrot.lane.b32.xlu0 %v900, 80
    %v938 = vpop.permute.xlu0 %937
    %939 = vrot.lane.b32.xlu0 %v903, 80
    %v940 = vpop.permute.xlu0 %939
    %943 = vrot.lane.b32.xlu0 %v900, 64
    %v944 = vpop.permute.xlu0 %943
    %945 = vrot.lane.b32.xlu0 %v903, 64
    %v946 = vpop.permute.xlu0 %945
    %949 = vrot.lane.b32.xlu0 %v900, 48
    %v950 = vpop.permute.xlu0 %949
    %951 = vrot.lane.b32.xlu0 %v903, 48
    %v952 = vpop.permute.xlu0 %951
    %955 = vrot.lane.b32.xlu0 %v900, 32
    %v956 = vpop.permute.xlu0 %955
    %957 = vrot.lane.b32.xlu0 %v903, 32
    %v958 = vpop.permute.xlu0 %957
    %961 = vrot.lane.b32.xlu0 %v900, 16
    %v962 = vpop.permute.xlu0 %961
    %963 = vrot.lane.b32.xlu0 %v903, 16
    %v964 = vpop.permute.xlu0 %963
    %v967 = vld [vmem:[%s1 + $0x28] sm:$0xf]
    %v968 = vld [vmem:[%s1 + $0x2c] sm:$0xf]
    %v969 = vpack.c.bf16 %v903, %v900
    %v970 = vpack.c.bf16 %v928, %v926
    %v971 = vpack.c.bf16 %v934, %v932
    %v972 = vpack.c.bf16 %v940, %v938
    %v973 = vpack.c.bf16 %v946, %v944
    %v974 = vpack.c.bf16 %v952, %v950
    %v975 = vpack.c.bf16 %v958, %v956
    %v976 = vpack.c.bf16 %v964, %v962
    %v977 = vlaneseq
    %v978 = vshrl.u32 %v977, 7
    %v979 = vsub.s32 0, %v978
    %v980 = vrot.slane %v922, %v979
    %v983 = vunpack.c.l.b16 %v967
    %v984 = vunpack.c.l.b16 %v968
    %v985 = vpack.c.b16 %v984, %v983
    %vm987 = vcmask 130048
    %v989 = vsel %vm987, %v969, 0
    %v992 = vsel %vm987, %v970, 0
    %v995 = vsel %vm987, %v971, 0
    %v998 = vsel %vm987, %v972, 0
    %v1001 = vsel %vm987, %v973, 0
    %v1004 = vsel %vm987, %v974, 0
    %v1007 = vsel %vm987, %v975, 0
    %v1010 = vsel %vm987, %v976, 0
    %1012 = vmatprep.subr.bf16.mxu0 0
    %1013 = vmatpush1.bf16.msra.mxu0 %v985
    %1014 = vmatprep.subr.bf16.mxu0 0
    %1015 = vmatpush1.bf16.msra.mxu0 0
    %1016 = vmatprep.subr.bf16.mxu0 0
    %1017 = vmatpush1.bf16.msra.mxu0 0
    %1018 = vmatprep.subr.bf16.mxu0 0
    %1019 = vmatpush1.bf16.msra.mxu0 0
    %1020 = vmatprep.subr.bf16.mxu0 0
    %1021 = vmatpush1.bf16.msra.mxu0 0
    %1022 = vmatprep.subr.bf16.mxu0 0
    %1023 = vmatpush1.bf16.msra.mxu0 0
    %1024 = vmatprep.subr.bf16.mxu0 0
    %1025 = vmatpush1.bf16.msra.mxu0 0
    %1026 = vmatprep.subr.bf16.mxu0 0
    %1027 = vmatpush1.bf16.msra.mxu0 0
    %1028 = vmatprep.subr.bf16.mxu0 0
    %1029 = vmatpush1.bf16.msra.mxu0 0
    %1030 = vmatprep.subr.bf16.mxu0 0
    %1031 = vmatpush1.bf16.msra.mxu0 0
    %1032 = vmatprep.subr.bf16.mxu0 0
    %1033 = vmatpush1.bf16.msra.mxu0 0
    %1034 = vmatprep.subr.bf16.mxu0 0
    %1035 = vmatpush1.bf16.msra.mxu0 0
    %1036 = vmatprep.subr.bf16.mxu0 0
    %1037 = vmatpush1.bf16.msra.mxu0 0
    %1038 = vmatprep.subr.bf16.mxu0 0
    %1039 = vmatpush1.bf16.msra.mxu0 0
    %1040 = vmatprep.subr.bf16.mxu0 0
    %1041 = vmatpush1.bf16.msra.mxu0 0
    %1042 = vmatprep.subr.bf16.mxu0 0
    %1043 = vmatpush1.bf16.msra.mxu0 0
    %1044 = vmatprep.mubr.bf16.mxu0 0
    %1045 = vmatmul.mubr.bf16.gmra.mrb[0].mxu0 %v989
    %v1046 = vpop.f32.mrb[0].mxu0
    %v1047 = vadd.f32 %v980, %v1046
    %v1048 = vpop.f32.mrb[0].mxu0
    %v1049 = vpop.f32.mrb[0].mxu0
    %v1050 = vadd.f32 %v980, %v1049
    %v1051 = vpop.f32.mrb[0].mxu0
    %1052 = vmatprep.mubr.bf16.mxu0 0
    %1053 = vmatmul.mubr.bf16.gmra.mrb[0].mxu0 %v992
    %v1054 = vpop.f32.mrb[0].mxu0
    %v1055 = vadd.f32 %v980, %v1054
    %v1056 = vpop.f32.mrb[0].mxu0
    %v1057 = vpop.f32.mrb[0].mxu0
    %v1058 = vadd.f32 %v980, %v1057
    %v1059 = vpop.f32.mrb[0].mxu0
    %1060 = vmatprep.mubr.bf16.mxu0 0
    %1061 = vmatmul.mubr.bf16.gmra.mrb[0].mxu0 %v995
    %v1062 = vpop.f32.mrb[0].mxu0
    %v1063 = vadd.f32 %v980, %v1062
    %v1064 = vpop.f32.mrb[0].mxu0
    %v1065 = vpop.f32.mrb[0].mxu0
    %v1066 = vadd.f32 %v980, %v1065
    %v1067 = vpop.f32.mrb[0].mxu0
    %1068 = vmatprep.mubr.bf16.mxu0 0
    %1069 = vmatmul.mubr.bf16.gmra.mrb[0].mxu0 %v998
    %v1070 = vpop.f32.mrb[0].mxu0
    %v1071 = vadd.f32 %v980, %v1070
    %v1072 = vpop.f32.mrb[0].mxu0
    %v1073 = vpop.f32.mrb[0].mxu0
    %v1074 = vadd.f32 %v980, %v1073
    %v1075 = vpop.f32.mrb[0].mxu0
    %1076 = vmatprep.mubr.bf16.mxu0 0
    %1077 = vmatmul.mubr.bf16.gmra.mrb[0].mxu0 %v1001
    %v1078 = vpop.f32.mrb[0].mxu0
    %v1079 = vadd.f32 %v980, %v1078
    %v1080 = vpop.f32.mrb[0].mxu0
    %v1081 = vpop.f32.mrb[0].mxu0
    %v1082 = vadd.f32 %v980, %v1081
    %v1083 = vpop.f32.mrb[0].mxu0
    %1084 = vmatprep.mubr.bf16.mxu0 0
    %1085 = vmatmul.mubr.bf16.gmra.mrb[0].mxu0 %v1004
    %v1086 = vpop.f32.mrb[0].mxu0
    %v1087 = vadd.f32 %v980, %v1086
    %v1088 = vpop.f32.mrb[0].mxu0
    %v1089 = vpop.f32.mrb[0].mxu0
    %v1090 = vadd.f32 %v980, %v1089
    %v1091 = vpop.f32.mrb[0].mxu0
    %1092 = vmatprep.mubr.bf16.mxu0 0
    %1093 = vmatmul.mubr.bf16.gmra.mrb[0].mxu0 %v1007
    %v1094 = vpop.f32.mrb[0].mxu0
    %v1095 = vadd.f32 %v980, %v1094
    %v1096 = vpop.f32.mrb[0].mxu0
    %v1097 = vpop.f32.mrb[0].mxu0
    %v1098 = vadd.f32 %v980, %v1097
    %v1099 = vpop.f32.mrb[0].mxu0
    %1100 = vmatprep.mubr.bf16.mxu0 0
    %1101 = vmatmul.mubr.bf16.gmra.mrb[0].mxu0 %v1010
    %v1102 = vpop.f32.mrb[0].mxu0
    %v1103 = vadd.f32 %v980, %v1102
    %v1104 = vpop.f32.mrb[0].mxu0
    %v1105 = vpop.f32.mrb[0].mxu0
    %v1106 = vadd.f32 %v980, %v1105
    %v1107 = vpop.f32.mrb[0].mxu0
    %1108 = vdwg.mxu0
    %1111 = vrot.lane.b32.xlu0 %v908, 112
    %v1112 = vpop.permute.xlu0 %1111
    %1113 = vrot.lane.b32.xlu0 %v911, 112
    %v1114 = vpop.permute.xlu0 %1113
    %1117 = vrot.lane.b32.xlu0 %v908, 96
    %v1118 = vpop.permute.xlu0 %1117
    %1119 = vrot.lane.b32.xlu0 %v911, 96
    %v1120 = vpop.permute.xlu0 %1119
    %1123 = vrot.lane.b32.xlu0 %v908, 80
    %v1124 = vpop.permute.xlu0 %1123
    %1125 = vrot.lane.b32.xlu0 %v911, 80
    %v1126 = vpop.permute.xlu0 %1125
    %1129 = vrot.lane.b32.xlu0 %v908, 64
    %v1130 = vpop.permute.xlu0 %1129
    %1131 = vrot.lane.b32.xlu0 %v911, 64
    %v1132 = vpop.permute.xlu0 %1131
    %1135 = vrot.lane.b32.xlu0 %v908, 48
    %v1136 = vpop.permute.xlu0 %1135
    %1137 = vrot.lane.b32.xlu0 %v911, 48
    %v1138 = vpop.permute.xlu0 %1137
    %1141 = vrot.lane.b32.xlu0 %v908, 32
    %v1142 = vpop.permute.xlu0 %1141
    %1143 = vrot.lane.b32.xlu0 %v911, 32
    %v1144 = vpop.permute.xlu0 %1143
    %1147 = vrot.lane.b32.xlu0 %v908, 16
    %v1148 = vpop.permute.xlu0 %1147
    %1149 = vrot.lane.b32.xlu0 %v911, 16
    %v1150 = vpop.permute.xlu0 %1149
    %v1153 = vld [vmem:[%s1 + $0x30] sm:$0xf]
    %v1154 = vld [vmem:[%s1 + $0x34] sm:$0xf]
    %v1155 = vpack.c.bf16 %v911, %v908
    %v1156 = vpack.c.bf16 %v1114, %v1112
    %v1157 = vpack.c.bf16 %v1120, %v1118
    %v1158 = vpack.c.bf16 %v1126, %v1124
    %v1159 = vpack.c.bf16 %v1132, %v1130
    %v1160 = vpack.c.bf16 %v1138, %v1136
    %v1161 = vpack.c.bf16 %v1144, %v1142
    %v1162 = vpack.c.bf16 %v1150, %v1148
    %v1163 = vlaneseq
    %v1164 = vshrl.u32 %v1163, 7
    %v1165 = vsub.s32 1, %v1164
    %v1166 = vrot.slane %v922, %v1165
    %v1169 = vunpack.c.l.b16 %v1153
    %v1170 = vunpack.c.l.b16 %v1154
    %v1171 = vpack.c.b16 %v1170, %v1169
    %v1174 = vsel %vm987, %v1155, 0
    %v1177 = vsel %vm987, %v1156, 0
    %v1180 = vsel %vm987, %v1157, 0
    %v1183 = vsel %vm987, %v1158, 0
    %v1186 = vsel %vm987, %v1159, 0
    %v1189 = vsel %vm987, %v1160, 0
    %v1192 = vsel %vm987, %v1161, 0
    %v1195 = vsel %vm987, %v1162, 0
    %1197 = vmatprep.subr.bf16.mxu0 0
    %1198 = vmatpush1.bf16.msra.mxu0 %v1171
    %1199 = vmatprep.subr.bf16.mxu0 0
    %1200 = vmatpush1.bf16.msra.mxu0 0
    %1201 = vmatprep.subr.bf16.mxu0 0
    %1202 = vmatpush1.bf16.msra.mxu0 0
    %1203 = vmatprep.subr.bf16.mxu0 0
    %1204 = vmatpush1.bf16.msra.mxu0 0
    %1205 = vmatprep.subr.bf16.mxu0 0
    %1206 = vmatpush1.bf16.msra.mxu0 0
    %1207 = vmatprep.subr.bf16.mxu0 0
    %1208 = vmatpush1.bf16.msra.mxu0 0
    %1209 = vmatprep.subr.bf16.mxu0 0
    %1210 = vmatpush1.bf16.msra.mxu0 0
    %1211 = vmatprep.subr.bf16.mxu0 0
    %1212 = vmatpush1.bf16.msra.mxu0 0
    %1213 = vmatprep.subr.bf16.mxu0 0
    %1214 = vmatpush1.bf16.msra.mxu0 0
    %1215 = vmatprep.subr.bf16.mxu0 0
    %1216 = vmatpush1.bf16.msra.mxu0 0
    %1217 = vmatprep.subr.bf16.mxu0 0
    %1218 = vmatpush1.bf16.msra.mxu0 0
    %1219 = vmatprep.subr.bf16.mxu0 0
    %1220 = vmatpush1.bf16.msra.mxu0 0
    %1221 = vmatprep.subr.bf16.mxu0 0
    %1222 = vmatpush1.bf16.msra.mxu0 0
    %1223 = vmatprep.subr.bf16.mxu0 0
    %1224 = vmatpush1.bf16.msra.mxu0 0
    %1225 = vmatprep.subr.bf16.mxu0 0
    %1226 = vmatpush1.bf16.msra.mxu0 0
    %1227 = vmatprep.subr.bf16.mxu0 0
    %1228 = vmatpush1.bf16.msra.mxu0 0
    %1229 = vmatprep.mubr.bf16.mxu0 0
    %1230 = vmatmul.mubr.bf16.gmra.mrb[0].mxu0 %v1174
    %v1231 = vpop.f32.mrb[0].mxu0
    %v1232 = vadd.f32 %v1166, %v1231
    %v1233 = vpop.f32.mrb[0].mxu0
    %v1234 = vpop.f32.mrb[0].mxu0
    %v1235 = vadd.f32 %v1166, %v1234
    %v1236 = vpop.f32.mrb[0].mxu0
    %1237 = vmatprep.mubr.bf16.mxu0 0
    %1238 = vmatmul.mubr.bf16.gmra.mrb[0].mxu0 %v1177
    %v1239 = vpop.f32.mrb[0].mxu0
    %v1240 = vadd.f32 %v1166, %v1239
    %v1241 = vpop.f32.mrb[0].mxu0
    %v1242 = vpop.f32.mrb[0].mxu0
    %v1243 = vadd.f32 %v1166, %v1242
    %v1244 = vpop.f32.mrb[0].mxu0
    %1245 = vmatprep.mubr.bf16.mxu0 0
    %1246 = vmatmul.mubr.bf16.gmra.mrb[0].mxu0 %v1180
    %v1247 = vpop.f32.mrb[0].mxu0
    %v1248 = vadd.f32 %v1166, %v1247
    %v1249 = vpop.f32.mrb[0].mxu0
    %v1250 = vpop.f32.mrb[0].mxu0
    %v1251 = vadd.f32 %v1166, %v1250
    %v1252 = vpop.f32.mrb[0].mxu0
    %1253 = vmatprep.mubr.bf16.mxu0 0
    %1254 = vmatmul.mubr.bf16.gmra.mrb[0].mxu0 %v1183
    %v1255 = vpop.f32.mrb[0].mxu0
    %v1256 = vadd.f32 %v1166, %v1255
    %v1257 = vpop.f32.mrb[0].mxu0
    %v1258 = vpop.f32.mrb[0].mxu0
    %v1259 = vadd.f32 %v1166, %v1258
    %v1260 = vpop.f32.mrb[0].mxu0
    %1261 = vmatprep.mubr.bf16.mxu0 0
    %1262 = vmatmul.mubr.bf16.gmra.mrb[0].mxu0 %v1186
    %v1263 = vpop.f32.mrb[0].mxu0
    %v1264 = vadd.f32 %v1166, %v1263
    %v1265 = vpop.f32.mrb[0].mxu0
    %v1266 = vpop.f32.mrb[0].mxu0
    %v1267 = vadd.f32 %v1166, %v1266
    %v1268 = vpop.f32.mrb[0].mxu0
    %1269 = vmatprep.mubr.bf16.mxu0 0
    %1270 = vmatmul.mubr.bf16.gmra.mrb[0].mxu0 %v1189
    %v1271 = vpop.f32.mrb[0].mxu0
    %v1272 = vadd.f32 %v1166, %v1271
    %v1273 = vpop.f32.mrb[0].mxu0
    %v1274 = vpop.f32.mrb[0].mxu0
    %v1275 = vadd.f32 %v1166, %v1274
    %v1276 = vpop.f32.mrb[0].mxu0
    %1277 = vmatprep.mubr.bf16.mxu0 0
    %1278 = vmatmul.mubr.bf16.gmra.mrb[0].mxu0 %v1192
    %v1279 = vpop.f32.mrb[0].mxu0
    %v1280 = vadd.f32 %v1166, %v1279
    %v1281 = vpop.f32.mrb[0].mxu0
    %v1282 = vpop.f32.mrb[0].mxu0
    %v1283 = vadd.f32 %v1166, %v1282
    %v1284 = vpop.f32.mrb[0].mxu0
    %1285 = vmatprep.mubr.bf16.mxu0 0
    %1286 = vmatmul.mubr.bf16.gmra.mrb[0].mxu0 %v1195
    %v1287 = vpop.f32.mrb[0].mxu0
    %v1288 = vadd.f32 %v1166, %v1287
    %v1289 = vpop.f32.mrb[0].mxu0
    %v1290 = vpop.f32.mrb[0].mxu0
    %v1291 = vadd.f32 %v1166, %v1290
    %v1292 = vpop.f32.mrb[0].mxu0
    %1293 = vdwg.mxu0
    %1296 = vrot.lane.b32.xlu0 %v916, 112
    %v1297 = vpop.permute.xlu0 %1296
    %1298 = vrot.lane.b32.xlu0 %v919, 112
    %v1299 = vpop.permute.xlu0 %1298
    %1302 = vrot.lane.b32.xlu0 %v916, 96
    %v1303 = vpop.permute.xlu0 %1302
    %1304 = vrot.lane.b32.xlu0 %v919, 96
    %v1305 = vpop.permute.xlu0 %1304
    %1308 = vrot.lane.b32.xlu0 %v916, 80
    %v1309 = vpop.permute.xlu0 %1308
    %1310 = vrot.lane.b32.xlu0 %v919, 80
    %v1311 = vpop.permute.xlu0 %1310
    %1314 = vrot.lane.b32.xlu0 %v916, 64
    %v1315 = vpop.permute.xlu0 %1314
    %1316 = vrot.lane.b32.xlu0 %v919, 64
    %v1317 = vpop.permute.xlu0 %1316
    %1320 = vrot.lane.b32.xlu0 %v916, 48
    %v1321 = vpop.permute.xlu0 %1320
    %1322 = vrot.lane.b32.xlu0 %v919, 48
    %v1323 = vpop.permute.xlu0 %1322
    %1326 = vrot.lane.b32.xlu0 %v916, 32
    %v1327 = vpop.permute.xlu0 %1326
    %1328 = vrot.lane.b32.xlu0 %v919, 32
    %v1329 = vpop.permute.xlu0 %1328
    %1332 = vrot.lane.b32.xlu0 %v916, 16
    %v1333 = vpop.permute.xlu0 %1332
    %1334 = vrot.lane.b32.xlu0 %v919, 16
    %v1335 = vpop.permute.xlu0 %1334
    %v1338 = vld [vmem:[%s1 + $0x38] sm:$0xf]
    %v1339 = vld [vmem:[%s1 + $0x3c] sm:$0xf]
    %v1340 = vpack.c.bf16 %v919, %v916
    %v1341 = vpack.c.bf16 %v1299, %v1297
    %v1342 = vpack.c.bf16 %v1305, %v1303
    %v1343 = vpack.c.bf16 %v1311, %v1309
    %v1344 = vpack.c.bf16 %v1317, %v1315
    %v1345 = vpack.c.bf16 %v1323, %v1321
    %v1346 = vpack.c.bf16 %v1329, %v1327
    %v1347 = vpack.c.bf16 %v1335, %v1333
    %v1348 = vlaneseq
    %v1349 = vshrl.u32 %v1348, 7
    %v1350 = vsub.s32 2, %v1349
    %v1351 = vrot.slane %v922, %v1350
    %v1354 = vunpack.c.l.b16 %v1338
    %v1355 = vunpack.c.l.b16 %v1339
    %v1356 = vpack.c.b16 %v1355, %v1354
    %v1359 = vsel %vm987, %v1340, 0
    %v1362 = vsel %vm987, %v1341, 0
    %v1365 = vsel %vm987, %v1342, 0
    %v1368 = vsel %vm987, %v1343, 0
    %v1371 = vsel %vm987, %v1344, 0
    %v1374 = vsel %vm987, %v1345, 0
    %v1377 = vsel %vm987, %v1346, 0
    %v1380 = vsel %vm987, %v1347, 0
    %1382 = vmatprep.subr.bf16.mxu0 0
    %1383 = vmatpush1.bf16.msra.mxu0 %v1356
    %1384 = vmatprep.subr.bf16.mxu0 0
    %1385 = vmatpush1.bf16.msra.mxu0 0
    %1386 = vmatprep.subr.bf16.mxu0 0
    %1387 = vmatpush1.bf16.msra.mxu0 0
    %1388 = vmatprep.subr.bf16.mxu0 0
    %1389 = vmatpush1.bf16.msra.mxu0 0
    %1390 = vmatprep.subr.bf16.mxu0 0
    %1391 = vmatpush1.bf16.msra.mxu0 0
    %1392 = vmatprep.subr.bf16.mxu0 0
    %1393 = vmatpush1.bf16.msra.mxu0 0
    %1394 = vmatprep.subr.bf16.mxu0 0
    %1395 = vmatpush1.bf16.msra.mxu0 0
    %1396 = vmatprep.subr.bf16.mxu0 0
    %1397 = vmatpush1.bf16.msra.mxu0 0
    %1398 = vmatprep.subr.bf16.mxu0 0
    %1399 = vmatpush1.bf16.msra.mxu0 0
    %1400 = vmatprep.subr.bf16.mxu0 0
    %1401 = vmatpush1.bf16.msra.mxu0 0
    %1402 = vmatprep.subr.bf16.mxu0 0
    %1403 = vmatpush1.bf16.msra.mxu0 0
    %1404 = vmatprep.subr.bf16.mxu0 0
    %1405 = vmatpush1.bf16.msra.mxu0 0
    %1406 = vmatprep.subr.bf16.mxu0 0
    %1407 = vmatpush1.bf16.msra.mxu0 0
    %1408 = vmatprep.subr.bf16.mxu0 0
    %1409 = vmatpush1.bf16.msra.mxu0 0
    %1410 = vmatprep.subr.bf16.mxu0 0
    %1411 = vmatpush1.bf16.msra.mxu0 0
    %1412 = vmatprep.subr.bf16.mxu0 0
    %1413 = vmatpush1.bf16.msra.mxu0 0
    %1414 = vmatprep.mubr.bf16.mxu0 0
    %1415 = vmatmul.mubr.bf16.gmra.mrb[0].mxu0 %v1359
    %v1416 = vpop.f32.mrb[0].mxu0
    %v1417 = vadd.f32 %v1351, %v1416
    %v1418 = vpop.f32.mrb[0].mxu0
    %v1419 = vpop.f32.mrb[0].mxu0
    %v1420 = vadd.f32 %v1351, %v1419
    %v1421 = vpop.f32.mrb[0].mxu0
    %1422 = vmatprep.mubr.bf16.mxu0 0
    %1423 = vmatmul.mubr.bf16.gmra.mrb[0].mxu0 %v1362
    %v1424 = vpop.f32.mrb[0].mxu0
    %v1425 = vadd.f32 %v1351, %v1424
    %v1426 = vpop.f32.mrb[0].mxu0
    %v1427 = vpop.f32.mrb[0].mxu0
    %v1428 = vadd.f32 %v1351, %v1427
    %v1429 = vpop.f32.mrb[0].mxu0
    %1430 = vmatprep.mubr.bf16.mxu0 0
    %1431 = vmatmul.mubr.bf16.gmra.mrb[0].mxu0 %v1365
    %v1432 = vpop.f32.mrb[0].mxu0
    %v1433 = vadd.f32 %v1351, %v1432
    %v1434 = vpop.f32.mrb[0].mxu0
    %v1435 = vpop.f32.mrb[0].mxu0
    %v1436 = vadd.f32 %v1351, %v1435
    %v1437 = vpop.f32.mrb[0].mxu0
    %1438 = vmatprep.mubr.bf16.mxu0 0
    %1439 = vmatmul.mubr.bf16.gmra.mrb[0].mxu0 %v1368
    %v1440 = vpop.f32.mrb[0].mxu0
    %v1441 = vadd.f32 %v1351, %v1440
    %v1442 = vpop.f32.mrb[0].mxu0
    %v1443 = vpop.f32.mrb[0].mxu0
    %v1444 = vadd.f32 %v1351, %v1443
    %v1445 = vpop.f32.mrb[0].mxu0
    %1446 = vmatprep.mubr.bf16.mxu0 0
    %1447 = vmatmul.mubr.bf16.gmra.mrb[0].mxu0 %v1371
    %v1448 = vpop.f32.mrb[0].mxu0
    %v1449 = vadd.f32 %v1351, %v1448
    %v1450 = vpop.f32.mrb[0].mxu0
    %v1451 = vpop.f32.mrb[0].mxu0
    %v1452 = vadd.f32 %v1351, %v1451
    %v1453 = vpop.f32.mrb[0].mxu0
    %1454 = vmatprep.mubr.bf16.mxu0 0
    %1455 = vmatmul.mubr.bf16.gmra.mrb[0].mxu0 %v1374
    %v1456 = vpop.f32.mrb[0].mxu0
    %v1457 = vadd.f32 %v1351, %v1456
    %v1458 = vpop.f32.mrb[0].mxu0
    %v1459 = vpop.f32.mrb[0].mxu0
    %v1460 = vadd.f32 %v1351, %v1459
    %v1461 = vpop.f32.mrb[0].mxu0
    %1462 = vmatprep.mubr.bf16.mxu0 0
    %1463 = vmatmul.mubr.bf16.gmra.mrb[0].mxu0 %v1377
    %v1464 = vpop.f32.mrb[0].mxu0
    %v1465 = vadd.f32 %v1351, %v1464
    %v1466 = vpop.f32.mrb[0].mxu0
    %v1467 = vpop.f32.mrb[0].mxu0
    %v1468 = vadd.f32 %v1351, %v1467
    %v1469 = vpop.f32.mrb[0].mxu0
    %1470 = vmatprep.mubr.bf16.mxu0 0
    %1471 = vmatmul.mubr.bf16.gmra.mrb[0].mxu0 %v1380
    %v1472 = vpop.f32.mrb[0].mxu0
    %v1473 = vadd.f32 %v1351, %v1472
    %v1474 = vpop.f32.mrb[0].mxu0
    %v1475 = vpop.f32.mrb[0].mxu0
    %v1476 = vadd.f32 %v1351, %v1475
    %v1477 = vpop.f32.mrb[0].mxu0
    %1478 = vdwg.mxu0
    %1495 = vrot.lane.b32.xlu0 %v1047, 124
    %v1496 = vpop.permute.xlu0 %1495
    %1497 = vrot.lane.b32.xlu0 %v1050, 124
    %v1498 = vpop.permute.xlu0 %1497
    %1499 = vrot.lane.b32.xlu0 %v1055, 124
    %v1500 = vpop.permute.xlu0 %1499
    %1501 = vrot.lane.b32.xlu0 %v1058, 124
    %v1502 = vpop.permute.xlu0 %1501
    %1503 = vrot.lane.b32.xlu0 %v1063, 124
    %v1504 = vpop.permute.xlu0 %1503
    %1505 = vrot.lane.b32.xlu0 %v1066, 124
    %v1506 = vpop.permute.xlu0 %1505
    %1507 = vrot.lane.b32.xlu0 %v1071, 124
    %v1508 = vpop.permute.xlu0 %1507
    %1509 = vrot.lane.b32.xlu0 %v1074, 124
    %v1510 = vpop.permute.xlu0 %1509
    %1511 = vrot.lane.b32.xlu0 %v1079, 124
    %v1512 = vpop.permute.xlu0 %1511
    %1513 = vrot.lane.b32.xlu0 %v1082, 124
    %v1514 = vpop.permute.xlu0 %1513
    %1515 = vrot.lane.b32.xlu0 %v1087, 124
    %v1516 = vpop.permute.xlu0 %1515
    %1517 = vrot.lane.b32.xlu0 %v1090, 124
    %v1518 = vpop.permute.xlu0 %1517
    %1519 = vrot.lane.b32.xlu0 %v1095, 124
    %v1520 = vpop.permute.xlu0 %1519
    %1521 = vrot.lane.b32.xlu0 %v1098, 124
    %v1522 = vpop.permute.xlu0 %1521
    %1523 = vrot.lane.b32.xlu0 %v1103, 124
    %v1524 = vpop.permute.xlu0 %1523
    %1525 = vrot.lane.b32.xlu0 %v1106, 124
    %v1526 = vpop.permute.xlu0 %1525
    %1543 = vrot.lane.b32.xlu0 %v1047, 120
    %v1544 = vpop.permute.xlu0 %1543
    %1545 = vrot.lane.b32.xlu0 %v1050, 120
    %v1546 = vpop.permute.xlu0 %1545
    %1547 = vrot.lane.b32.xlu0 %v1055, 120
    %v1548 = vpop.permute.xlu0 %1547
    %1549 = vrot.lane.b32.xlu0 %v1058, 120
    %v1550 = vpop.permute.xlu0 %1549
    %1551 = vrot.lane.b32.xlu0 %v1063, 120
    %v1552 = vpop.permute.xlu0 %1551
    %1553 = vrot.lane.b32.xlu0 %v1066, 120
    %v1554 = vpop.permute.xlu0 %1553
    %1555 = vrot.lane.b32.xlu0 %v1071, 120
    %v1556 = vpop.permute.xlu0 %1555
    %1557 = vrot.lane.b32.xlu0 %v1074, 120
    %v1558 = vpop.permute.xlu0 %1557
    %1559 = vrot.lane.b32.xlu0 %v1079, 120
    %v1560 = vpop.permute.xlu0 %1559
    %1561 = vrot.lane.b32.xlu0 %v1082, 120
    %v1562 = vpop.permute.xlu0 %1561
    %1563 = vrot.lane.b32.xlu0 %v1087, 120
    %v1564 = vpop.permute.xlu0 %1563
    %1565 = vrot.lane.b32.xlu0 %v1090, 120
    %v1566 = vpop.permute.xlu0 %1565
    %1567 = vrot.lane.b32.xlu0 %v1095, 120
    %v1568 = vpop.permute.xlu0 %1567
    %1569 = vrot.lane.b32.xlu0 %v1098, 120
    %v1570 = vpop.permute.xlu0 %1569
    %1571 = vrot.lane.b32.xlu0 %v1103, 120
    %v1572 = vpop.permute.xlu0 %1571
    %1573 = vrot.lane.b32.xlu0 %v1106, 120
    %v1574 = vpop.permute.xlu0 %1573
    %1591 = vrot.lane.b32.xlu0 %v1047, 116
    %v1592 = vpop.permute.xlu0 %1591
    %1593 = vrot.lane.b32.xlu0 %v1050, 116
    %v1594 = vpop.permute.xlu0 %1593
    %1595 = vrot.lane.b32.xlu0 %v1055, 116
    %v1596 = vpop.permute.xlu0 %1595
    %1597 = vrot.lane.b32.xlu0 %v1058, 116
    %v1598 = vpop.permute.xlu0 %1597
    %1599 = vrot.lane.b32.xlu0 %v1063, 116
    %v1600 = vpop.permute.xlu0 %1599
    %1601 = vrot.lane.b32.xlu0 %v1066, 116
    %v1602 = vpop.permute.xlu0 %1601
    %1603 = vrot.lane.b32.xlu0 %v1071, 116
    %v1604 = vpop.permute.xlu0 %1603
    %1605 = vrot.lane.b32.xlu0 %v1074, 116
    %v1606 = vpop.permute.xlu0 %1605
    %1607 = vrot.lane.b32.xlu0 %v1079, 116
    %v1608 = vpop.permute.xlu0 %1607
    %1609 = vrot.lane.b32.xlu0 %v1082, 116
    %v1610 = vpop.permute.xlu0 %1609
    %1611 = vrot.lane.b32.xlu0 %v1087, 116
    %v1612 = vpop.permute.xlu0 %1611
    %1613 = vrot.lane.b32.xlu0 %v1090, 116
    %v1614 = vpop.permute.xlu0 %1613
    %1615 = vrot.lane.b32.xlu0 %v1095, 116
    %v1616 = vpop.permute.xlu0 %1615
    %1617 = vrot.lane.b32.xlu0 %v1098, 116
    %v1618 = vpop.permute.xlu0 %1617
    %1619 = vrot.lane.b32.xlu0 %v1103, 116
    %v1620 = vpop.permute.xlu0 %1619
    %1621 = vrot.lane.b32.xlu0 %v1106, 116
    %v1622 = vpop.permute.xlu0 %1621
    %1655 = vrot.lane.b32.xlu0 %v1232, 124
    %v1656 = vpop.permute.xlu0 %1655
    %1657 = vrot.lane.b32.xlu0 %v1235, 124
    %v1658 = vpop.permute.xlu0 %1657
    %1659 = vrot.lane.b32.xlu0 %v1240, 124
    %v1660 = vpop.permute.xlu0 %1659
    %1661 = vrot.lane.b32.xlu0 %v1243, 124
    %v1662 = vpop.permute.xlu0 %1661
    %1663 = vrot.lane.b32.xlu0 %v1248, 124
    %v1664 = vpop.permute.xlu0 %1663
    %1665 = vrot.lane.b32.xlu0 %v1251, 124
    %v1666 = vpop.permute.xlu0 %1665
    %1667 = vrot.lane.b32.xlu0 %v1256, 124
    %v1668 = vpop.permute.xlu0 %1667
    %1669 = vrot.lane.b32.xlu0 %v1259, 124
    %v1670 = vpop.permute.xlu0 %1669
    %1671 = vrot.lane.b32.xlu0 %v1264, 124
    %v1672 = vpop.permute.xlu0 %1671
    %1673 = vrot.lane.b32.xlu0 %v1267, 124
    %v1674 = vpop.permute.xlu0 %1673
    %1675 = vrot.lane.b32.xlu0 %v1272, 124
    %v1676 = vpop.permute.xlu0 %1675
    %1677 = vrot.lane.b32.xlu0 %v1275, 124
    %v1678 = vpop.permute.xlu0 %1677
    %1679 = vrot.lane.b32.xlu0 %v1280, 124
    %v1680 = vpop.permute.xlu0 %1679
    %1681 = vrot.lane.b32.xlu0 %v1283, 124
    %v1682 = vpop.permute.xlu0 %1681
    %1683 = vrot.lane.b32.xlu0 %v1288, 124
    %v1684 = vpop.permute.xlu0 %1683
    %1685 = vrot.lane.b32.xlu0 %v1291, 124
    %v1686 = vpop.permute.xlu0 %1685
    %1703 = vrot.lane.b32.xlu0 %v1232, 120
    %v1704 = vpop.permute.xlu0 %1703
    %1705 = vrot.lane.b32.xlu0 %v1235, 120
    %v1706 = vpop.permute.xlu0 %1705
    %1707 = vrot.lane.b32.xlu0 %v1240, 120
    %v1708 = vpop.permute.xlu0 %1707
    %1709 = vrot.lane.b32.xlu0 %v1243, 120
    %v1710 = vpop.permute.xlu0 %1709
    %1711 = vrot.lane.b32.xlu0 %v1248, 120
    %v1712 = vpop.permute.xlu0 %1711
    %1713 = vrot.lane.b32.xlu0 %v1251, 120
    %v1714 = vpop.permute.xlu0 %1713
    %1715 = vrot.lane.b32.xlu0 %v1256, 120
    %v1716 = vpop.permute.xlu0 %1715
    %1717 = vrot.lane.b32.xlu0 %v1259, 120
    %v1718 = vpop.permute.xlu0 %1717
    %1719 = vrot.lane.b32.xlu0 %v1264, 120
    %v1720 = vpop.permute.xlu0 %1719
    %1721 = vrot.lane.b32.xlu0 %v1267, 120
    %v1722 = vpop.permute.xlu0 %1721
    %1723 = vrot.lane.b32.xlu0 %v1272, 120
    %v1724 = vpop.permute.xlu0 %1723
    %1725 = vrot.lane.b32.xlu0 %v1275, 120
    %v1726 = vpop.permute.xlu0 %1725
    %1727 = vrot.lane.b32.xlu0 %v1280, 120
    %v1728 = vpop.permute.xlu0 %1727
    %1729 = vrot.lane.b32.xlu0 %v1283, 120
    %v1730 = vpop.permute.xlu0 %1729
    %1731 = vrot.lane.b32.xlu0 %v1288, 120
    %v1732 = vpop.permute.xlu0 %1731
    %1733 = vrot.lane.b32.xlu0 %v1291, 120
    %v1734 = vpop.permute.xlu0 %1733
    %1751 = vrot.lane.b32.xlu0 %v1232, 116
    %v1752 = vpop.permute.xlu0 %1751
    %1753 = vrot.lane.b32.xlu0 %v1235, 116
    %v1754 = vpop.permute.xlu0 %1753
    %1755 = vrot.lane.b32.xlu0 %v1240, 116
    %v1756 = vpop.permute.xlu0 %1755
    %1757 = vrot.lane.b32.xlu0 %v1243, 116
    %v1758 = vpop.permute.xlu0 %1757
    %1759 = vrot.lane.b32.xlu0 %v1248, 116
    %v1760 = vpop.permute.xlu0 %1759
    %1761 = vrot.lane.b32.xlu0 %v1251, 116
    %v1762 = vpop.permute.xlu0 %1761
    %1763 = vrot.lane.b32.xlu0 %v1256, 116
    %v1764 = vpop.permute.xlu0 %1763
    %1765 = vrot.lane.b32.xlu0 %v1259, 116
    %v1766 = vpop.permute.xlu0 %1765
    %1767 = vrot.lane.b32.xlu0 %v1264, 116
    %v1768 = vpop.permute.xlu0 %1767
    %1769 = vrot.lane.b32.xlu0 %v1267, 116
    %v1770 = vpop.permute.xlu0 %1769
    %1771 = vrot.lane.b32.xlu0 %v1272, 116
    %v1772 = vpop.permute.xlu0 %1771
    %1773 = vrot.lane.b32.xlu0 %v1275, 116
    %v1774 = vpop.permute.xlu0 %1773
    %1775 = vrot.lane.b32.xlu0 %v1280, 116
    %v1776 = vpop.permute.xlu0 %1775
    %1777 = vrot.lane.b32.xlu0 %v1283, 116
    %v1778 = vpop.permute.xlu0 %1777
    %1779 = vrot.lane.b32.xlu0 %v1288, 116
    %v1780 = vpop.permute.xlu0 %1779
    %1781 = vrot.lane.b32.xlu0 %v1291, 116
    %v1782 = vpop.permute.xlu0 %1781
    %1815 = vrot.lane.b32.xlu0 %v1417, 124
    %v1816 = vpop.permute.xlu0 %1815
    %1817 = vrot.lane.b32.xlu0 %v1420, 124
    %v1818 = vpop.permute.xlu0 %1817
    %1819 = vrot.lane.b32.xlu0 %v1425, 124
    %v1820 = vpop.permute.xlu0 %1819
    %1821 = vrot.lane.b32.xlu0 %v1428, 124
    %v1822 = vpop.permute.xlu0 %1821
    %1823 = vrot.lane.b32.xlu0 %v1433, 124
    %v1824 = vpop.permute.xlu0 %1823
    %1825 = vrot.lane.b32.xlu0 %v1436, 124
    %v1826 = vpop.permute.xlu0 %1825
    %1827 = vrot.lane.b32.xlu0 %v1441, 124
    %v1828 = vpop.permute.xlu0 %1827
    %1829 = vrot.lane.b32.xlu0 %v1444, 124
    %v1830 = vpop.permute.xlu0 %1829
    %1831 = vrot.lane.b32.xlu0 %v1449, 124
    %v1832 = vpop.permute.xlu0 %1831
    %1833 = vrot.lane.b32.xlu0 %v1452, 124
    %v1834 = vpop.permute.xlu0 %1833
    %1835 = vrot.lane.b32.xlu0 %v1457, 124
    %v1836 = vpop.permute.xlu0 %1835
    %1837 = vrot.lane.b32.xlu0 %v1460, 124
    %v1838 = vpop.permute.xlu0 %1837
    %1839 = vrot.lane.b32.xlu0 %v1465, 124
    %v1840 = vpop.permute.xlu0 %1839
    %1841 = vrot.lane.b32.xlu0 %v1468, 124
    %v1842 = vpop.permute.xlu0 %1841
    %1843 = vrot.lane.b32.xlu0 %v1473, 124
    %v1844 = vpop.permute.xlu0 %1843
    %1845 = vrot.lane.b32.xlu0 %v1476, 124
    %v1846 = vpop.permute.xlu0 %1845
    %1863 = vrot.lane.b32.xlu0 %v1417, 120
    %v1864 = vpop.permute.xlu0 %1863
    %1865 = vrot.lane.b32.xlu0 %v1420, 120
    %v1866 = vpop.permute.xlu0 %1865
    %1867 = vrot.lane.b32.xlu0 %v1425, 120
    %v1868 = vpop.permute.xlu0 %1867
    %1869 = vrot.lane.b32.xlu0 %v1428, 120
    %v1870 = vpop.permute.xlu0 %1869
    %1871 = vrot.lane.b32.xlu0 %v1433, 120
    %v1872 = vpop.permute.xlu0 %1871
    %1873 = vrot.lane.b32.xlu0 %v1436, 120
    %v1874 = vpop.permute.xlu0 %1873
    %1875 = vrot.lane.b32.xlu0 %v1441, 120
    %v1876 = vpop.permute.xlu0 %1875
    %1877 = vrot.lane.b32.xlu0 %v1444, 120
    %v1878 = vpop.permute.xlu0 %1877
    %1879 = vrot.lane.b32.xlu0 %v1449, 120
    %v1880 = vpop.permute.xlu0 %1879
    %1881 = vrot.lane.b32.xlu0 %v1452, 120
    %v1882 = vpop.permute.xlu0 %1881
    %1883 = vrot.lane.b32.xlu0 %v1457, 120
    %v1884 = vpop.permute.xlu0 %1883
    %1885 = vrot.lane.b32.xlu0 %v1460, 120
    %v1886 = vpop.permute.xlu0 %1885
    %1887 = vrot.lane.b32.xlu0 %v1465, 120
    %v1888 = vpop.permute.xlu0 %1887
    %1889 = vrot.lane.b32.xlu0 %v1468, 120
    %v1890 = vpop.permute.xlu0 %1889
    %1891 = vrot.lane.b32.xlu0 %v1473, 120
    %v1892 = vpop.permute.xlu0 %1891
    %1893 = vrot.lane.b32.xlu0 %v1476, 120
    %v1894 = vpop.permute.xlu0 %1893
    %1911 = vrot.lane.b32.xlu0 %v1417, 116
    %v1912 = vpop.permute.xlu0 %1911
    %1913 = vrot.lane.b32.xlu0 %v1420, 116
    %v1914 = vpop.permute.xlu0 %1913
    %1915 = vrot.lane.b32.xlu0 %v1425, 116
    %v1916 = vpop.permute.xlu0 %1915
    %1917 = vrot.lane.b32.xlu0 %v1428, 116
    %v1918 = vpop.permute.xlu0 %1917
    %1919 = vrot.lane.b32.xlu0 %v1433, 116
    %v1920 = vpop.permute.xlu0 %1919
    %1921 = vrot.lane.b32.xlu0 %v1436, 116
    %v1922 = vpop.permute.xlu0 %1921
    %1923 = vrot.lane.b32.xlu0 %v1441, 116
    %v1924 = vpop.permute.xlu0 %1923
    %1925 = vrot.lane.b32.xlu0 %v1444, 116
    %v1926 = vpop.permute.xlu0 %1925
    %1927 = vrot.lane.b32.xlu0 %v1449, 116
    %v1928 = vpop.permute.xlu0 %1927
    %1929 = vrot.lane.b32.xlu0 %v1452, 116
    %v1930 = vpop.permute.xlu0 %1929
    %1931 = vrot.lane.b32.xlu0 %v1457, 116
    %v1932 = vpop.permute.xlu0 %1931
    %1933 = vrot.lane.b32.xlu0 %v1460, 116
    %v1934 = vpop.permute.xlu0 %1933
    %1935 = vrot.lane.b32.xlu0 %v1465, 116
    %v1936 = vpop.permute.xlu0 %1935
    %1937 = vrot.lane.b32.xlu0 %v1468, 116
    %v1938 = vpop.permute.xlu0 %1937
    %1939 = vrot.lane.b32.xlu0 %v1473, 116
    %v1940 = vpop.permute.xlu0 %1939
    %1941 = vrot.lane.b32.xlu0 %v1476, 116
    %v1942 = vpop.permute.xlu0 %1941
    %v1959 = vsub.f32 1.0, %v50
    %v1960 = vsub.f32 1.0, %v51
    %v1961 = vsub.f32 1.0, %v52
    %v1962 = vsub.f32 1.0, %v53
    %v1963 = vsub.f32 1.0, %v54
    %v1964 = vsub.f32 1.0, %v55
    %v1965 = vsub.f32 1.0, %v56
    %v1966 = vsub.f32 1.0, %v57
    %v1967 = vsub.f32 1.0, %v58
    %v1968 = vsub.f32 1.0, %v59
    %v1969 = vsub.f32 1.0, %v60
    %v1970 = vsub.f32 1.0, %v61
    %v1971 = vsub.f32 1.0, %v62
    %v1972 = vsub.f32 1.0, %v63
    %v1973 = vsub.f32 1.0, %v64
    %v1974 = vsub.f32 1.0, %v65
    %v1975 = vmul.f32 %v1959, 1e+09
    %v1976 = vmul.f32 %v1960, 1e+09
    %v1977 = vmul.f32 %v1961, 1e+09
    %v1978 = vmul.f32 %v1962, 1e+09
    %v1979 = vmul.f32 %v1963, 1e+09
    %v1980 = vmul.f32 %v1964, 1e+09
    %v1981 = vmul.f32 %v1965, 1e+09
    %v1982 = vmul.f32 %v1966, 1e+09
    %v1983 = vmul.f32 %v1967, 1e+09
    %v1984 = vmul.f32 %v1968, 1e+09
    %v1985 = vmul.f32 %v1969, 1e+09
    %v1986 = vmul.f32 %v1970, 1e+09
    %v1987 = vmul.f32 %v1971, 1e+09
    %v1988 = vmul.f32 %v1972, 1e+09
    %v1989 = vmul.f32 %v1973, 1e+09
    %v1990 = vmul.f32 %v1974, 1e+09
    %v1991 = vpack.c.bf16 %v1050, %v1047
    %v1992 = vpack.c.bf16 %v1058, %v1055
    %v1993 = vpack.c.bf16 %v1066, %v1063
    %v1994 = vpack.c.bf16 %v1074, %v1071
    %v1995 = vpack.c.bf16 %v1082, %v1079
    %v1996 = vpack.c.bf16 %v1090, %v1087
    %v1997 = vpack.c.bf16 %v1098, %v1095
    %v1998 = vpack.c.bf16 %v1106, %v1103
    %v1999 = vpack.c.bf16 %v1498, %v1496
    %v2000 = vpack.c.bf16 %v1502, %v1500
    %v2001 = vpack.c.bf16 %v1506, %v1504
    %v2002 = vpack.c.bf16 %v1510, %v1508
    %v2003 = vpack.c.bf16 %v1514, %v1512
    %v2004 = vpack.c.bf16 %v1518, %v1516
    %v2005 = vpack.c.bf16 %v1522, %v1520
    %v2006 = vpack.c.bf16 %v1526, %v1524
    %v2007 = vpack.c.bf16 %v1546, %v1544
    %v2008 = vpack.c.bf16 %v1550, %v1548
    %v2009 = vpack.c.bf16 %v1554, %v1552
    %v2010 = vpack.c.bf16 %v1558, %v1556
    %v2011 = vpack.c.bf16 %v1562, %v1560
    %v2012 = vpack.c.bf16 %v1566, %v1564
    %v2013 = vpack.c.bf16 %v1570, %v1568
    %v2014 = vpack.c.bf16 %v1574, %v1572
    %v2015 = vpack.c.bf16 %v1594, %v1592
    %v2016 = vpack.c.bf16 %v1598, %v1596
    %v2017 = vpack.c.bf16 %v1602, %v1600
    %v2018 = vpack.c.bf16 %v1606, %v1604
    %v2019 = vpack.c.bf16 %v1610, %v1608
    %v2020 = vpack.c.bf16 %v1614, %v1612
    %v2021 = vpack.c.bf16 %v1618, %v1616
    %v2022 = vpack.c.bf16 %v1622, %v1620
    %v2023 = vpack.c.bf16 %v1235, %v1232
    %v2024 = vpack.c.bf16 %v1243, %v1240
    %v2025 = vpack.c.bf16 %v1251, %v1248
    %v2026 = vpack.c.bf16 %v1259, %v1256
    %v2027 = vpack.c.bf16 %v1267, %v1264
    %v2028 = vpack.c.bf16 %v1275, %v1272
    %v2029 = vpack.c.bf16 %v1283, %v1280
    %v2030 = vpack.c.bf16 %v1291, %v1288
    %v2031 = vpack.c.bf16 %v1658, %v1656
    %v2032 = vpack.c.bf16 %v1662, %v1660
    %v2033 = vpack.c.bf16 %v1666, %v1664
    %v2034 = vpack.c.bf16 %v1670, %v1668
    %v2035 = vpack.c.bf16 %v1674, %v1672
    %v2036 = vpack.c.bf16 %v1678, %v1676
    %v2037 = vpack.c.bf16 %v1682, %v1680
    %v2038 = vpack.c.bf16 %v1686, %v1684
    %v2039 = vpack.c.bf16 %v1706, %v1704
    %v2040 = vpack.c.bf16 %v1710, %v1708
    %v2041 = vpack.c.bf16 %v1714, %v1712
    %v2042 = vpack.c.bf16 %v1718, %v1716
    %v2043 = vpack.c.bf16 %v1722, %v1720
    %v2044 = vpack.c.bf16 %v1726, %v1724
    %v2045 = vpack.c.bf16 %v1730, %v1728
    %v2046 = vpack.c.bf16 %v1734, %v1732
    %v2047 = vpack.c.bf16 %v1754, %v1752
    %v2048 = vpack.c.bf16 %v1758, %v1756
    %v2049 = vpack.c.bf16 %v1762, %v1760
    %v2050 = vpack.c.bf16 %v1766, %v1764
    %v2051 = vpack.c.bf16 %v1770, %v1768
    %v2052 = vpack.c.bf16 %v1774, %v1772
    %v2053 = vpack.c.bf16 %v1778, %v1776
    %v2054 = vpack.c.bf16 %v1782, %v1780
    %vm2055 = vcmask 31744
    %v2057 = vsel %vm2055, %v1991, 0
    %v2060 = vsel %vm2055, %v1992, 0
    %v2063 = vsel %vm2055, %v1993, 0
    %v2066 = vsel %vm2055, %v1994, 0
    %v2069 = vsel %vm2055, %v1995, 0
    %v2072 = vsel %vm2055, %v1996, 0
    %v2075 = vsel %vm2055, %v1997, 0
    %v2078 = vsel %vm2055, %v1998, 0
    %v2081 = vsel %vm2055, %v2023, 0
    %v2084 = vsel %vm2055, %v2024, 0
    %v2087 = vsel %vm2055, %v2025, 0
    %v2090 = vsel %vm2055, %v2026, 0
    %v2093 = vsel %vm2055, %v2027, 0
    %v2096 = vsel %vm2055, %v2028, 0
    %v2099 = vsel %vm2055, %v2029, 0
    %v2102 = vsel %vm2055, %v2030, 0
    %2104 = vmatprep.subr.bf16.mxu0 0
    %2105 = vmatpush1.bf16.xpose.msra.mxu0 %v2081
    %2106 = vmatprep.subr.bf16.mxu0 0
    %2107 = vmatpush1.bf16.xpose.msra.mxu0 %v2084
    %2108 = vmatprep.subr.bf16.mxu0 0
    %2109 = vmatpush1.bf16.xpose.msra.mxu0 %v2087
    %2110 = vmatprep.subr.bf16.mxu0 0
    %2111 = vmatpush1.bf16.xpose.msra.mxu0 %v2090
    %2112 = vmatprep.subr.bf16.mxu0 0
    %2113 = vmatpush1.bf16.xpose.msra.mxu0 %v2093
    %2114 = vmatprep.subr.bf16.mxu0 0
    %2115 = vmatpush1.bf16.xpose.msra.mxu0 %v2096
    %2116 = vmatprep.subr.bf16.mxu0 0
    %2117 = vmatpush1.bf16.xpose.msra.mxu0 %v2099
    %2118 = vmatprep.subr.bf16.mxu0 0
    %2119 = vmatpush1.bf16.xpose.msra.mxu0 %v2102
    %2120 = vmatprep.subr.bf16.mxu0 0
    %2121 = vmatpush1.bf16.xpose.msra.mxu0 0
    %2122 = vmatprep.subr.bf16.mxu0 0
    %2123 = vmatpush1.bf16.xpose.msra.mxu0 0
    %2124 = vmatprep.subr.bf16.mxu0 0
    %2125 = vmatpush1.bf16.xpose.msra.mxu0 0
    %2126 = vmatprep.subr.bf16.mxu0 0
    %2127 = vmatpush1.bf16.xpose.msra.mxu0 0
    %2128 = vmatprep.subr.bf16.mxu0 0
    %2129 = vmatpush1.bf16.xpose.msra.mxu0 0
    %2130 = vmatprep.subr.bf16.mxu0 0
    %2131 = vmatpush1.bf16.xpose.msra.mxu0 0
    %2132 = vmatprep.subr.bf16.mxu0 0
    %2133 = vmatpush1.bf16.xpose.msra.mxu0 0
    %2134 = vmatprep.subr.bf16.mxu0 0
    %2135 = vmatpush1.bf16.xpose.msra.mxu0 0
    %2136 = vmatprep.mubr.bf16.mxu0 0
    %2137 = vmatmul.mubr.bf16.gmra.mrb[0].mxu0 %v2057
    %v2138 = vpop.f32.mrb[0].mxu0
    %v2139 = vadd.f32 0.0, %v2138
    %v2140 = vpop.f32.mrb[0].mxu0
    %v2141 = vpop.f32.mrb[0].mxu0
    %v2142 = vadd.f32 0.0, %v2141
    %v2143 = vpop.f32.mrb[0].mxu0
    %2144 = vmatprep.mubr.bf16.mxu0 0
    %2145 = vmatmul.mubr.bf16.gmra.mrb[0].mxu0 %v2060
    %v2146 = vpop.f32.mrb[0].mxu0
    %v2147 = vadd.f32 0.0, %v2146
    %v2148 = vpop.f32.mrb[0].mxu0
    %v2149 = vpop.f32.mrb[0].mxu0
    %v2150 = vadd.f32 0.0, %v2149
    %v2151 = vpop.f32.mrb[0].mxu0
    %2152 = vmatprep.mubr.bf16.mxu0 0
    %2153 = vmatmul.mubr.bf16.gmra.mrb[0].mxu0 %v2063
    %v2154 = vpop.f32.mrb[0].mxu0
    %v2155 = vadd.f32 0.0, %v2154
    %v2156 = vpop.f32.mrb[0].mxu0
    %v2157 = vpop.f32.mrb[0].mxu0
    %v2158 = vadd.f32 0.0, %v2157
    %v2159 = vpop.f32.mrb[0].mxu0
    %2160 = vmatprep.mubr.bf16.mxu0 0
    %2161 = vmatmul.mubr.bf16.gmra.mrb[0].mxu0 %v2066
    %v2162 = vpop.f32.mrb[0].mxu0
    %v2163 = vadd.f32 0.0, %v2162
    %v2164 = vpop.f32.mrb[0].mxu0
    %v2165 = vpop.f32.mrb[0].mxu0
    %v2166 = vadd.f32 0.0, %v2165
    %v2167 = vpop.f32.mrb[0].mxu0
    %2168 = vmatprep.mubr.bf16.mxu0 0
    %2169 = vmatmul.mubr.bf16.gmra.mrb[0].mxu0 %v2069
    %v2170 = vpop.f32.mrb[0].mxu0
    %v2171 = vadd.f32 0.0, %v2170
    %v2172 = vpop.f32.mrb[0].mxu0
    %v2173 = vpop.f32.mrb[0].mxu0
    %v2174 = vadd.f32 0.0, %v2173
    %v2175 = vpop.f32.mrb[0].mxu0
    %2176 = vmatprep.mubr.bf16.mxu0 0
    %2177 = vmatmul.mubr.bf16.gmra.mrb[0].mxu0 %v2072
    %v2178 = vpop.f32.mrb[0].mxu0
    %v2179 = vadd.f32 0.0, %v2178
    %v2180 = vpop.f32.mrb[0].mxu0
    %v2181 = vpop.f32.mrb[0].mxu0
    %v2182 = vadd.f32 0.0, %v2181
    %v2183 = vpop.f32.mrb[0].mxu0
    %2184 = vmatprep.mubr.bf16.mxu0 0
    %2185 = vmatmul.mubr.bf16.gmra.mrb[0].mxu0 %v2075
    %v2186 = vpop.f32.mrb[0].mxu0
    %v2187 = vadd.f32 0.0, %v2186
    %v2188 = vpop.f32.mrb[0].mxu0
    %v2189 = vpop.f32.mrb[0].mxu0
    %v2190 = vadd.f32 0.0, %v2189
    %v2191 = vpop.f32.mrb[0].mxu0
    %2192 = vmatprep.mubr.bf16.mxu0 0
    %2193 = vmatmul.mubr.bf16.gmra.mrb[0].mxu0 %v2078
    %v2194 = vpop.f32.mrb[0].mxu0
    %v2195 = vadd.f32 0.0, %v2194
    %v2196 = vpop.f32.mrb[0].mxu0
    %v2197 = vpop.f32.mrb[0].mxu0
    %v2198 = vadd.f32 0.0, %v2197
    %v2199 = vpop.f32.mrb[0].mxu0
    %2200 = vdwg.mxu0
    %v2202 = vsel %vm2055, %v1999, 0
    %v2205 = vsel %vm2055, %v2000, 0
    %v2208 = vsel %vm2055, %v2001, 0
    %v2211 = vsel %vm2055, %v2002, 0
    %v2214 = vsel %vm2055, %v2003, 0
    %v2217 = vsel %vm2055, %v2004, 0
    %v2220 = vsel %vm2055, %v2005, 0
    %v2223 = vsel %vm2055, %v2006, 0
    %v2226 = vsel %vm2055, %v2031, 0
    %v2229 = vsel %vm2055, %v2032, 0
    %v2232 = vsel %vm2055, %v2033, 0
    %v2235 = vsel %vm2055, %v2034, 0
    %v2238 = vsel %vm2055, %v2035, 0
    %v2241 = vsel %vm2055, %v2036, 0
    %v2244 = vsel %vm2055, %v2037, 0
    %v2247 = vsel %vm2055, %v2038, 0
    %2249 = vmatprep.subr.bf16.mxu0 0
    %2250 = vmatpush1.bf16.xpose.msra.mxu0 %v2226
    %2251 = vmatprep.subr.bf16.mxu0 0
    %2252 = vmatpush1.bf16.xpose.msra.mxu0 %v2229
    %2253 = vmatprep.subr.bf16.mxu0 0
    %2254 = vmatpush1.bf16.xpose.msra.mxu0 %v2232
    %2255 = vmatprep.subr.bf16.mxu0 0
    %2256 = vmatpush1.bf16.xpose.msra.mxu0 %v2235
    %2257 = vmatprep.subr.bf16.mxu0 0
    %2258 = vmatpush1.bf16.xpose.msra.mxu0 %v2238
    %2259 = vmatprep.subr.bf16.mxu0 0
    %2260 = vmatpush1.bf16.xpose.msra.mxu0 %v2241
    %2261 = vmatprep.subr.bf16.mxu0 0
    %2262 = vmatpush1.bf16.xpose.msra.mxu0 %v2244
    %2263 = vmatprep.subr.bf16.mxu0 0
    %2264 = vmatpush1.bf16.xpose.msra.mxu0 %v2247
    %2265 = vmatprep.subr.bf16.mxu0 0
    %2266 = vmatpush1.bf16.xpose.msra.mxu0 0
    %2267 = vmatprep.subr.bf16.mxu0 0
    %2268 = vmatpush1.bf16.xpose.msra.mxu0 0
    %2269 = vmatprep.subr.bf16.mxu0 0
    %2270 = vmatpush1.bf16.xpose.msra.mxu0 0
    %2271 = vmatprep.subr.bf16.mxu0 0
    %2272 = vmatpush1.bf16.xpose.msra.mxu0 0
    %2273 = vmatprep.subr.bf16.mxu0 0
    %2274 = vmatpush1.bf16.xpose.msra.mxu0 0
    %2275 = vmatprep.subr.bf16.mxu0 0
    %2276 = vmatpush1.bf16.xpose.msra.mxu0 0
    %2277 = vmatprep.subr.bf16.mxu0 0
    %2278 = vmatpush1.bf16.xpose.msra.mxu0 0
    %2279 = vmatprep.subr.bf16.mxu0 0
    %2280 = vmatpush1.bf16.xpose.msra.mxu0 0
    %2281 = vmatprep.mubr.bf16.mxu0 0
    %2282 = vmatmul.mubr.bf16.gmra.mrb[0].mxu0 %v2202
    %v2283 = vpop.f32.mrb[0].mxu0
    %v2284 = vadd.f32 0.0, %v2283
    %v2285 = vpop.f32.mrb[0].mxu0
    %v2286 = vpop.f32.mrb[0].mxu0
    %v2287 = vadd.f32 0.0, %v2286
    %v2288 = vpop.f32.mrb[0].mxu0
    %2289 = vmatprep.mubr.bf16.mxu0 0
    %2290 = vmatmul.mubr.bf16.gmra.mrb[0].mxu0 %v2205
    %v2291 = vpop.f32.mrb[0].mxu0
    %v2292 = vadd.f32 0.0, %v2291
    %v2293 = vpop.f32.mrb[0].mxu0
    %v2294 = vpop.f32.mrb[0].mxu0
    %v2295 = vadd.f32 0.0, %v2294
    %v2296 = vpop.f32.mrb[0].mxu0
    %2297 = vmatprep.mubr.bf16.mxu0 0
    %2298 = vmatmul.mubr.bf16.gmra.mrb[0].mxu0 %v2208
    %v2299 = vpop.f32.mrb[0].mxu0
    %v2300 = vadd.f32 0.0, %v2299
    %v2301 = vpop.f32.mrb[0].mxu0
    %v2302 = vpop.f32.mrb[0].mxu0
    %v2303 = vadd.f32 0.0, %v2302
    %v2304 = vpop.f32.mrb[0].mxu0
    %2305 = vmatprep.mubr.bf16.mxu0 0
    %2306 = vmatmul.mubr.bf16.gmra.mrb[0].mxu0 %v2211
    %v2307 = vpop.f32.mrb[0].mxu0
    %v2308 = vadd.f32 0.0, %v2307
    %v2309 = vpop.f32.mrb[0].mxu0
    %v2310 = vpop.f32.mrb[0].mxu0
    %v2311 = vadd.f32 0.0, %v2310
    %v2312 = vpop.f32.mrb[0].mxu0
    %2313 = vmatprep.mubr.bf16.mxu0 0
    %2314 = vmatmul.mubr.bf16.gmra.mrb[0].mxu0 %v2214
    %v2315 = vpop.f32.mrb[0].mxu0
    %v2316 = vadd.f32 0.0, %v2315
    %v2317 = vpop.f32.mrb[0].mxu0
    %v2318 = vpop.f32.mrb[0].mxu0
    %v2319 = vadd.f32 0.0, %v2318
    %v2320 = vpop.f32.mrb[0].mxu0
    %2321 = vmatprep.mubr.bf16.mxu0 0
    %2322 = vmatmul.mubr.bf16.gmra.mrb[0].mxu0 %v2217
    %v2323 = vpop.f32.mrb[0].mxu0
    %v2324 = vadd.f32 0.0, %v2323
    %v2325 = vpop.f32.mrb[0].mxu0
    %v2326 = vpop.f32.mrb[0].mxu0
    %v2327 = vadd.f32 0.0, %v2326
    %v2328 = vpop.f32.mrb[0].mxu0
    %2329 = vmatprep.mubr.bf16.mxu0 0
    %2330 = vmatmul.mubr.bf16.gmra.mrb[0].mxu0 %v2220
    %v2331 = vpop.f32.mrb[0].mxu0
    %v2332 = vadd.f32 0.0, %v2331
    %v2333 = vpop.f32.mrb[0].mxu0
    %v2334 = vpop.f32.mrb[0].mxu0
    %v2335 = vadd.f32 0.0, %v2334
    %v2336 = vpop.f32.mrb[0].mxu0
    %2337 = vmatprep.mubr.bf16.mxu0 0
    %2338 = vmatmul.mubr.bf16.gmra.mrb[0].mxu0 %v2223
    %v2339 = vpop.f32.mrb[0].mxu0
    %v2340 = vadd.f32 0.0, %v2339
    %v2341 = vpop.f32.mrb[0].mxu0
    %v2342 = vpop.f32.mrb[0].mxu0
    %v2343 = vadd.f32 0.0, %v2342
    %v2344 = vpop.f32.mrb[0].mxu0
    %2345 = vdwg.mxu0
    %v2347 = vsel %vm2055, %v2007, 0
    %v2350 = vsel %vm2055, %v2008, 0
    %v2353 = vsel %vm2055, %v2009, 0
    %v2356 = vsel %vm2055, %v2010, 0
    %v2359 = vsel %vm2055, %v2011, 0
    %v2362 = vsel %vm2055, %v2012, 0
    %v2365 = vsel %vm2055, %v2013, 0
    %v2368 = vsel %vm2055, %v2014, 0
    %v2371 = vsel %vm2055, %v2039, 0
    %v2374 = vsel %vm2055, %v2040, 0
    %v2377 = vsel %vm2055, %v2041, 0
    %v2380 = vsel %vm2055, %v2042, 0
    %v2383 = vsel %vm2055, %v2043, 0
    %v2386 = vsel %vm2055, %v2044, 0
    %v2389 = vsel %vm2055, %v2045, 0
    %v2392 = vsel %vm2055, %v2046, 0
    %2394 = vmatprep.subr.bf16.mxu0 0
    %2395 = vmatpush1.bf16.xpose.msra.mxu0 %v2371
    %2396 = vmatprep.subr.bf16.mxu0 0
    %2397 = vmatpush1.bf16.xpose.msra.mxu0 %v2374
    %2398 = vmatprep.subr.bf16.mxu0 0
    %2399 = vmatpush1.bf16.xpose.msra.mxu0 %v2377
    %2400 = vmatprep.subr.bf16.mxu0 0
    %2401 = vmatpush1.bf16.xpose.msra.mxu0 %v2380
    %2402 = vmatprep.subr.bf16.mxu0 0
    %2403 = vmatpush1.bf16.xpose.msra.mxu0 %v2383
    %2404 = vmatprep.subr.bf16.mxu0 0
    %2405 = vmatpush1.bf16.xpose.msra.mxu0 %v2386
    %2406 = vmatprep.subr.bf16.mxu0 0
    %2407 = vmatpush1.bf16.xpose.msra.mxu0 %v2389
    %2408 = vmatprep.subr.bf16.mxu0 0
    %2409 = vmatpush1.bf16.xpose.msra.mxu0 %v2392
    %2410 = vmatprep.subr.bf16.mxu0 0
    %2411 = vmatpush1.bf16.xpose.msra.mxu0 0
    %2412 = vmatprep.subr.bf16.mxu0 0
    %2413 = vmatpush1.bf16.xpose.msra.mxu0 0
    %2414 = vmatprep.subr.bf16.mxu0 0
    %2415 = vmatpush1.bf16.xpose.msra.mxu0 0
    %2416 = vmatprep.subr.bf16.mxu0 0
    %2417 = vmatpush1.bf16.xpose.msra.mxu0 0
    %2418 = vmatprep.subr.bf16.mxu0 0
    %2419 = vmatpush1.bf16.xpose.msra.mxu0 0
    %2420 = vmatprep.subr.bf16.mxu0 0
    %2421 = vmatpush1.bf16.xpose.msra.mxu0 0
    %2422 = vmatprep.subr.bf16.mxu0 0
    %2423 = vmatpush1.bf16.xpose.msra.mxu0 0
    %2424 = vmatprep.subr.bf16.mxu0 0
    %2425 = vmatpush1.bf16.xpose.msra.mxu0 0
    %2426 = vmatprep.mubr.bf16.mxu0 0
    %2427 = vmatmul.mubr.bf16.gmra.mrb[0].mxu0 %v2347
    %v2428 = vpop.f32.mrb[0].mxu0
    %v2429 = vadd.f32 0.0, %v2428
    %v2430 = vpop.f32.mrb[0].mxu0
    %v2431 = vpop.f32.mrb[0].mxu0
    %v2432 = vadd.f32 0.0, %v2431
    %v2433 = vpop.f32.mrb[0].mxu0
    %2434 = vmatprep.mubr.bf16.mxu0 0
    %2435 = vmatmul.mubr.bf16.gmra.mrb[0].mxu0 %v2350
    %v2436 = vpop.f32.mrb[0].mxu0
    %v2437 = vadd.f32 0.0, %v2436
    %v2438 = vpop.f32.mrb[0].mxu0
    %v2439 = vpop.f32.mrb[0].mxu0
    %v2440 = vadd.f32 0.0, %v2439
    %v2441 = vpop.f32.mrb[0].mxu0
    %2442 = vmatprep.mubr.bf16.mxu0 0
    %2443 = vmatmul.mubr.bf16.gmra.mrb[0].mxu0 %v2353
    %v2444 = vpop.f32.mrb[0].mxu0
    %v2445 = vadd.f32 0.0, %v2444
    %v2446 = vpop.f32.mrb[0].mxu0
    %v2447 = vpop.f32.mrb[0].mxu0
    %v2448 = vadd.f32 0.0, %v2447
    %v2449 = vpop.f32.mrb[0].mxu0
    %2450 = vmatprep.mubr.bf16.mxu0 0
    %2451 = vmatmul.mubr.bf16.gmra.mrb[0].mxu0 %v2356
    %v2452 = vpop.f32.mrb[0].mxu0
    %v2453 = vadd.f32 0.0, %v2452
    %v2454 = vpop.f32.mrb[0].mxu0
    %v2455 = vpop.f32.mrb[0].mxu0
    %v2456 = vadd.f32 0.0, %v2455
    %v2457 = vpop.f32.mrb[0].mxu0
    %2458 = vmatprep.mubr.bf16.mxu0 0
    %2459 = vmatmul.mubr.bf16.gmra.mrb[0].mxu0 %v2359
    %v2460 = vpop.f32.mrb[0].mxu0
    %v2461 = vadd.f32 0.0, %v2460
    %v2462 = vpop.f32.mrb[0].mxu0
    %v2463 = vpop.f32.mrb[0].mxu0
    %v2464 = vadd.f32 0.0, %v2463
    %v2465 = vpop.f32.mrb[0].mxu0
    %2466 = vmatprep.mubr.bf16.mxu0 0
    %2467 = vmatmul.mubr.bf16.gmra.mrb[0].mxu0 %v2362
    %v2468 = vpop.f32.mrb[0].mxu0
    %v2469 = vadd.f32 0.0, %v2468
    %v2470 = vpop.f32.mrb[0].mxu0
    %v2471 = vpop.f32.mrb[0].mxu0
    %v2472 = vadd.f32 0.0, %v2471
    %v2473 = vpop.f32.mrb[0].mxu0
    %2474 = vmatprep.mubr.bf16.mxu0 0
    %2475 = vmatmul.mubr.bf16.gmra.mrb[0].mxu0 %v2365
    %v2476 = vpop.f32.mrb[0].mxu0
    %v2477 = vadd.f32 0.0, %v2476
    %v2478 = vpop.f32.mrb[0].mxu0
    %v2479 = vpop.f32.mrb[0].mxu0
    %v2480 = vadd.f32 0.0, %v2479
    %v2481 = vpop.f32.mrb[0].mxu0
    %2482 = vmatprep.mubr.bf16.mxu0 0
    %2483 = vmatmul.mubr.bf16.gmra.mrb[0].mxu0 %v2368
    %v2484 = vpop.f32.mrb[0].mxu0
    %v2485 = vadd.f32 0.0, %v2484
    %v2486 = vpop.f32.mrb[0].mxu0
    %v2487 = vpop.f32.mrb[0].mxu0
    %v2488 = vadd.f32 0.0, %v2487
    %v2489 = vpop.f32.mrb[0].mxu0
    %2490 = vdwg.mxu0
    %v2492 = vsel %vm2055, %v2015, 0
    %v2495 = vsel %vm2055, %v2016, 0
    %v2498 = vsel %vm2055, %v2017, 0
    %v2501 = vsel %vm2055, %v2018, 0
    %v2504 = vsel %vm2055, %v2019, 0
    %v2507 = vsel %vm2055, %v2020, 0
    %v2510 = vsel %vm2055, %v2021, 0
    %v2513 = vsel %vm2055, %v2022, 0
    %v2516 = vsel %vm2055, %v2047, 0
    %v2519 = vsel %vm2055, %v2048, 0
    %v2522 = vsel %vm2055, %v2049, 0
    %v2525 = vsel %vm2055, %v2050, 0
    %v2528 = vsel %vm2055, %v2051, 0
    %v2531 = vsel %vm2055, %v2052, 0
    %v2534 = vsel %vm2055, %v2053, 0
    %v2537 = vsel %vm2055, %v2054, 0
    %2539 = vmatprep.subr.bf16.mxu0 0
    %2540 = vmatpush1.bf16.xpose.msra.mxu0 %v2516
    %2541 = vmatprep.subr.bf16.mxu0 0
    %2542 = vmatpush1.bf16.xpose.msra.mxu0 %v2519
    %2543 = vmatprep.subr.bf16.mxu0 0
    %2544 = vmatpush1.bf16.xpose.msra.mxu0 %v2522
    %2545 = vmatprep.subr.bf16.mxu0 0
    %2546 = vmatpush1.bf16.xpose.msra.mxu0 %v2525
    %2547 = vmatprep.subr.bf16.mxu0 0
    %2548 = vmatpush1.bf16.xpose.msra.mxu0 %v2528
    %2549 = vmatprep.subr.bf16.mxu0 0
    %2550 = vmatpush1.bf16.xpose.msra.mxu0 %v2531
    %2551 = vmatprep.subr.bf16.mxu0 0
    %2552 = vmatpush1.bf16.xpose.msra.mxu0 %v2534
    %2553 = vmatprep.subr.bf16.mxu0 0
    %2554 = vmatpush1.bf16.xpose.msra.mxu0 %v2537
    %2555 = vmatprep.subr.bf16.mxu0 0
    %2556 = vmatpush1.bf16.xpose.msra.mxu0 0
    %2557 = vmatprep.subr.bf16.mxu0 0
    %2558 = vmatpush1.bf16.xpose.msra.mxu0 0
    %2559 = vmatprep.subr.bf16.mxu0 0
    %2560 = vmatpush1.bf16.xpose.msra.mxu0 0
    %2561 = vmatprep.subr.bf16.mxu0 0
    %2562 = vmatpush1.bf16.xpose.msra.mxu0 0
    %2563 = vmatprep.subr.bf16.mxu0 0
    %2564 = vmatpush1.bf16.xpose.msra.mxu0 0
    %2565 = vmatprep.subr.bf16.mxu0 0
    %2566 = vmatpush1.bf16.xpose.msra.mxu0 0
    %2567 = vmatprep.subr.bf16.mxu0 0
    %2568 = vmatpush1.bf16.xpose.msra.mxu0 0
    %2569 = vmatprep.subr.bf16.mxu0 0
    %2570 = vmatpush1.bf16.xpose.msra.mxu0 0
    %2571 = vmatprep.mubr.bf16.mxu0 0
    %2572 = vmatmul.mubr.bf16.gmra.mrb[0].mxu0 %v2492
    %v2573 = vpop.f32.mrb[0].mxu0
    %v2574 = vadd.f32 0.0, %v2573
    %v2575 = vpop.f32.mrb[0].mxu0
    %v2576 = vpop.f32.mrb[0].mxu0
    %v2577 = vadd.f32 0.0, %v2576
    %v2578 = vpop.f32.mrb[0].mxu0
    %2579 = vmatprep.mubr.bf16.mxu0 0
    %2580 = vmatmul.mubr.bf16.gmra.mrb[0].mxu0 %v2495
    %v2581 = vpop.f32.mrb[0].mxu0
    %v2582 = vadd.f32 0.0, %v2581
    %v2583 = vpop.f32.mrb[0].mxu0
    %v2584 = vpop.f32.mrb[0].mxu0
    %v2585 = vadd.f32 0.0, %v2584
    %v2586 = vpop.f32.mrb[0].mxu0
    %2587 = vmatprep.mubr.bf16.mxu0 0
    %2588 = vmatmul.mubr.bf16.gmra.mrb[0].mxu0 %v2498
    %v2589 = vpop.f32.mrb[0].mxu0
    %v2590 = vadd.f32 0.0, %v2589
    %v2591 = vpop.f32.mrb[0].mxu0
    %v2592 = vpop.f32.mrb[0].mxu0
    %v2593 = vadd.f32 0.0, %v2592
    %v2594 = vpop.f32.mrb[0].mxu0
    %2595 = vmatprep.mubr.bf16.mxu0 0
    %2596 = vmatmul.mubr.bf16.gmra.mrb[0].mxu0 %v2501
    %v2597 = vpop.f32.mrb[0].mxu0
    %v2598 = vadd.f32 0.0, %v2597
    %v2599 = vpop.f32.mrb[0].mxu0
    %v2600 = vpop.f32.mrb[0].mxu0
    %v2601 = vadd.f32 0.0, %v2600
    %v2602 = vpop.f32.mrb[0].mxu0
    %2603 = vmatprep.mubr.bf16.mxu0 0
    %2604 = vmatmul.mubr.bf16.gmra.mrb[0].mxu0 %v2504
    %v2605 = vpop.f32.mrb[0].mxu0
    %v2606 = vadd.f32 0.0, %v2605
    %v2607 = vpop.f32.mrb[0].mxu0
    %v2608 = vpop.f32.mrb[0].mxu0
    %v2609 = vadd.f32 0.0, %v2608
    %v2610 = vpop.f32.mrb[0].mxu0
    %2611 = vmatprep.mubr.bf16.mxu0 0
    %2612 = vmatmul.mubr.bf16.gmra.mrb[0].mxu0 %v2507
    %v2613 = vpop.f32.mrb[0].mxu0
    %v2614 = vadd.f32 0.0, %v2613
    %v2615 = vpop.f32.mrb[0].mxu0
    %v2616 = vpop.f32.mrb[0].mxu0
    %v2617 = vadd.f32 0.0, %v2616
    %v2618 = vpop.f32.mrb[0].mxu0
    %2619 = vmatprep.mubr.bf16.mxu0 0
    %2620 = vmatmul.mubr.bf16.gmra.mrb[0].mxu0 %v2510
    %v2621 = vpop.f32.mrb[0].mxu0
    %v2622 = vadd.f32 0.0, %v2621
    %v2623 = vpop.f32.mrb[0].mxu0
    %v2624 = vpop.f32.mrb[0].mxu0
    %v2625 = vadd.f32 0.0, %v2624
    %v2626 = vpop.f32.mrb[0].mxu0
    %2627 = vmatprep.mubr.bf16.mxu0 0
    %2628 = vmatmul.mubr.bf16.gmra.mrb[0].mxu0 %v2513
    %v2629 = vpop.f32.mrb[0].mxu0
    %v2630 = vadd.f32 0.0, %v2629
    %v2631 = vpop.f32.mrb[0].mxu0
    %v2632 = vpop.f32.mrb[0].mxu0
    %v2633 = vadd.f32 0.0, %v2632
    %v2634 = vpop.f32.mrb[0].mxu0
    %2635 = vdwg.mxu0
    %v2636 = vmul.f32 %v2139, 0.5
    %v2637 = vmul.f32 %v2142, 0.5
    %v2638 = vmul.f32 %v2147, 0.5
    %v2639 = vmul.f32 %v2150, 0.5
    %v2640 = vmul.f32 %v2155, 0.5
    %v2641 = vmul.f32 %v2158, 0.5
    %v2642 = vmul.f32 %v2163, 0.5
    %v2643 = vmul.f32 %v2166, 0.5
    %v2644 = vmul.f32 %v2171, 0.5
    %v2645 = vmul.f32 %v2174, 0.5
    %v2646 = vmul.f32 %v2179, 0.5
    %v2647 = vmul.f32 %v2182, 0.5
    %v2648 = vmul.f32 %v2187, 0.5
    %v2649 = vmul.f32 %v2190, 0.5
    %v2650 = vmul.f32 %v2195, 0.5
    %v2651 = vmul.f32 %v2198, 0.5
    %v2652 = vmul.f32 %v2284, 0.5
    %v2653 = vmul.f32 %v2287, 0.5
    %v2654 = vmul.f32 %v2292, 0.5
    %v2655 = vmul.f32 %v2295, 0.5
    %v2656 = vmul.f32 %v2300, 0.5
    %v2657 = vmul.f32 %v2303, 0.5
    %v2658 = vmul.f32 %v2308, 0.5
    %v2659 = vmul.f32 %v2311, 0.5
    %v2660 = vmul.f32 %v2316, 0.5
    %v2661 = vmul.f32 %v2319, 0.5
    %v2662 = vmul.f32 %v2324, 0.5
    %v2663 = vmul.f32 %v2327, 0.5
    %v2664 = vmul.f32 %v2332, 0.5
    %v2665 = vmul.f32 %v2335, 0.5
    %v2666 = vmul.f32 %v2340, 0.5
    %v2667 = vmul.f32 %v2343, 0.5
    %v2668 = vmul.f32 %v2429, 0.5
    %v2669 = vmul.f32 %v2432, 0.5
    %v2670 = vmul.f32 %v2437, 0.5
    %v2671 = vmul.f32 %v2440, 0.5
    %v2672 = vmul.f32 %v2445, 0.5
    %v2673 = vmul.f32 %v2448, 0.5
    %v2674 = vmul.f32 %v2453, 0.5
    %v2675 = vmul.f32 %v2456, 0.5
    %v2676 = vmul.f32 %v2461, 0.5
    %v2677 = vmul.f32 %v2464, 0.5
    %v2678 = vmul.f32 %v2469, 0.5
    %v2679 = vmul.f32 %v2472, 0.5
    %v2680 = vmul.f32 %v2477, 0.5
    %v2681 = vmul.f32 %v2480, 0.5
    %v2682 = vmul.f32 %v2485, 0.5
    %v2683 = vmul.f32 %v2488, 0.5
    %v2684 = vmul.f32 %v2574, 0.5
    %v2685 = vmul.f32 %v2577, 0.5
    %v2686 = vmul.f32 %v2582, 0.5
    %v2687 = vmul.f32 %v2585, 0.5
    %v2688 = vmul.f32 %v2590, 0.5
    %v2689 = vmul.f32 %v2593, 0.5
    %v2690 = vmul.f32 %v2598, 0.5
    %v2691 = vmul.f32 %v2601, 0.5
    %v2692 = vmul.f32 %v2606, 0.5
    %v2693 = vmul.f32 %v2609, 0.5
    %v2694 = vmul.f32 %v2614, 0.5
    %v2695 = vmul.f32 %v2617, 0.5
    %v2696 = vmul.f32 %v2622, 0.5
    %v2697 = vmul.f32 %v2625, 0.5
    %v2698 = vmul.f32 %v2630, 0.5
    %v2699 = vmul.f32 %v2633, 0.5
    %v2700 = vsub.f32 %v2636, %v1975
    %v2701 = vsub.f32 %v2637, %v1976
    %v2702 = vsub.f32 %v2638, %v1977
    %v2703 = vsub.f32 %v2639, %v1978
    %v2704 = vsub.f32 %v2640, %v1979
    %v2705 = vsub.f32 %v2641, %v1980
    %v2706 = vsub.f32 %v2642, %v1981
    %v2707 = vsub.f32 %v2643, %v1982
    %v2708 = vsub.f32 %v2644, %v1983
    %v2709 = vsub.f32 %v2645, %v1984
    %v2710 = vsub.f32 %v2646, %v1985
    %v2711 = vsub.f32 %v2647, %v1986
    %v2712 = vsub.f32 %v2648, %v1987
    %v2713 = vsub.f32 %v2649, %v1988
    %v2714 = vsub.f32 %v2650, %v1989
    %v2715 = vsub.f32 %v2651, %v1990
    %v2716 = vsub.f32 %v2652, %v1975
    %v2717 = vsub.f32 %v2653, %v1976
    %v2718 = vsub.f32 %v2654, %v1977
    %v2719 = vsub.f32 %v2655, %v1978
    %v2720 = vsub.f32 %v2656, %v1979
    %v2721 = vsub.f32 %v2657, %v1980
    %v2722 = vsub.f32 %v2658, %v1981
    %v2723 = vsub.f32 %v2659, %v1982
    %v2724 = vsub.f32 %v2660, %v1983
    %v2725 = vsub.f32 %v2661, %v1984
    %v2726 = vsub.f32 %v2662, %v1985
    %v2727 = vsub.f32 %v2663, %v1986
    %v2728 = vsub.f32 %v2664, %v1987
    %v2729 = vsub.f32 %v2665, %v1988
    %v2730 = vsub.f32 %v2666, %v1989
    %v2731 = vsub.f32 %v2667, %v1990
    %v2732 = vsub.f32 %v2668, %v1975
    %v2733 = vsub.f32 %v2669, %v1976
    %v2734 = vsub.f32 %v2670, %v1977
    %v2735 = vsub.f32 %v2671, %v1978
    %v2736 = vsub.f32 %v2672, %v1979
    %v2737 = vsub.f32 %v2673, %v1980
    %v2738 = vsub.f32 %v2674, %v1981
    %v2739 = vsub.f32 %v2675, %v1982
    %v2740 = vsub.f32 %v2676, %v1983
    %v2741 = vsub.f32 %v2677, %v1984
    %v2742 = vsub.f32 %v2678, %v1985
    %v2743 = vsub.f32 %v2679, %v1986
    %v2744 = vsub.f32 %v2680, %v1987
    %v2745 = vsub.f32 %v2681, %v1988
    %v2746 = vsub.f32 %v2682, %v1989
    %v2747 = vsub.f32 %v2683, %v1990
    %v2748 = vsub.f32 %v2684, %v1975
    %v2749 = vsub.f32 %v2685, %v1976
    %v2750 = vsub.f32 %v2686, %v1977
    %v2751 = vsub.f32 %v2687, %v1978
    %v2752 = vsub.f32 %v2688, %v1979
    %v2753 = vsub.f32 %v2689, %v1980
    %v2754 = vsub.f32 %v2690, %v1981
    %v2755 = vsub.f32 %v2691, %v1982
    %v2756 = vsub.f32 %v2692, %v1983
    %v2757 = vsub.f32 %v2693, %v1984
    %v2758 = vsub.f32 %v2694, %v1985
    %v2759 = vsub.f32 %v2695, %v1986
    %v2760 = vsub.f32 %v2696, %v1987
    %v2761 = vsub.f32 %v2697, %v1988
    %v2762 = vsub.f32 %v2698, %v1989
    %v2763 = vsub.f32 %v2699, %v1990
    %2764 = vmax.xlane.f32.xlu0 %v2700
    %v2765 = vpop.xlane.xlu0 %2764
    %2766 = vmax.xlane.f32.xlu0 %v2701
    %v2767 = vpop.xlane.xlu0 %2766
    %2768 = vmax.xlane.f32.xlu0 %v2702
    %v2769 = vpop.xlane.xlu0 %2768
    %2770 = vmax.xlane.f32.xlu0 %v2703
    %v2771 = vpop.xlane.xlu0 %2770
    %2772 = vmax.xlane.f32.xlu0 %v2704
    %v2773 = vpop.xlane.xlu0 %2772
    %2774 = vmax.xlane.f32.xlu0 %v2705
    %v2775 = vpop.xlane.xlu0 %2774
    %2776 = vmax.xlane.f32.xlu0 %v2706
    %v2777 = vpop.xlane.xlu0 %2776
    %2778 = vmax.xlane.f32.xlu0 %v2707
    %v2779 = vpop.xlane.xlu0 %2778
    %2780 = vmax.xlane.f32.xlu0 %v2708
    %v2781 = vpop.xlane.xlu0 %2780
    %2782 = vmax.xlane.f32.xlu0 %v2709
    %v2783 = vpop.xlane.xlu0 %2782
    %2784 = vmax.xlane.f32.xlu0 %v2710
    %v2785 = vpop.xlane.xlu0 %2784
    %2786 = vmax.xlane.f32.xlu0 %v2711
    %v2787 = vpop.xlane.xlu0 %2786
    %2788 = vmax.xlane.f32.xlu0 %v2712
    %v2789 = vpop.xlane.xlu0 %2788
    %2790 = vmax.xlane.f32.xlu0 %v2713
    %v2791 = vpop.xlane.xlu0 %2790
    %2792 = vmax.xlane.f32.xlu0 %v2714
    %v2793 = vpop.xlane.xlu0 %2792
    %2794 = vmax.xlane.f32.xlu0 %v2715
    %v2795 = vpop.xlane.xlu0 %2794
    %2796 = vmax.xlane.f32.xlu0 %v2716
    %v2797 = vpop.xlane.xlu0 %2796
    %2798 = vmax.xlane.f32.xlu0 %v2717
    %v2799 = vpop.xlane.xlu0 %2798
    %2800 = vmax.xlane.f32.xlu0 %v2718
    %v2801 = vpop.xlane.xlu0 %2800
    %2802 = vmax.xlane.f32.xlu0 %v2719
    %v2803 = vpop.xlane.xlu0 %2802
    %2804 = vmax.xlane.f32.xlu0 %v2720
    %v2805 = vpop.xlane.xlu0 %2804
    %2806 = vmax.xlane.f32.xlu0 %v2721
    %v2807 = vpop.xlane.xlu0 %2806
    %2808 = vmax.xlane.f32.xlu0 %v2722
    %v2809 = vpop.xlane.xlu0 %2808
    %2810 = vmax.xlane.f32.xlu0 %v2723
    %v2811 = vpop.xlane.xlu0 %2810
    %2812 = vmax.xlane.f32.xlu0 %v2724
    %v2813 = vpop.xlane.xlu0 %2812
    %2814 = vmax.xlane.f32.xlu0 %v2725
    %v2815 = vpop.xlane.xlu0 %2814
    %2816 = vmax.xlane.f32.xlu0 %v2726
    %v2817 = vpop.xlane.xlu0 %2816
    %2818 = vmax.xlane.f32.xlu0 %v2727
    %v2819 = vpop.xlane.xlu0 %2818
    %2820 = vmax.xlane.f32.xlu0 %v2728
    %v2821 = vpop.xlane.xlu0 %2820
    %2822 = vmax.xlane.f32.xlu0 %v2729
    %v2823 = vpop.xlane.xlu0 %2822
    %2824 = vmax.xlane.f32.xlu0 %v2730
    %v2825 = vpop.xlane.xlu0 %2824
    %2826 = vmax.xlane.f32.xlu0 %v2731
    %v2827 = vpop.xlane.xlu0 %2826
    %2828 = vmax.xlane.f32.xlu0 %v2732
    %v2829 = vpop.xlane.xlu0 %2828
    %2830 = vmax.xlane.f32.xlu0 %v2733
    %v2831 = vpop.xlane.xlu0 %2830
    %2832 = vmax.xlane.f32.xlu0 %v2734
    %v2833 = vpop.xlane.xlu0 %2832
    %2834 = vmax.xlane.f32.xlu0 %v2735
    %v2835 = vpop.xlane.xlu0 %2834
    %2836 = vmax.xlane.f32.xlu0 %v2736
    %v2837 = vpop.xlane.xlu0 %2836
    %2838 = vmax.xlane.f32.xlu0 %v2737
    %v2839 = vpop.xlane.xlu0 %2838
    %2840 = vmax.xlane.f32.xlu0 %v2738
    %v2841 = vpop.xlane.xlu0 %2840
    %2842 = vmax.xlane.f32.xlu0 %v2739
    %v2843 = vpop.xlane.xlu0 %2842
    %2844 = vmax.xlane.f32.xlu0 %v2740
    %v2845 = vpop.xlane.xlu0 %2844
    %2846 = vmax.xlane.f32.xlu0 %v2741
    %v2847 = vpop.xlane.xlu0 %2846
    %2848 = vmax.xlane.f32.xlu0 %v2742
    %v2849 = vpop.xlane.xlu0 %2848
    %2850 = vmax.xlane.f32.xlu0 %v2743
    %v2851 = vpop.xlane.xlu0 %2850
    %2852 = vmax.xlane.f32.xlu0 %v2744
    %v2853 = vpop.xlane.xlu0 %2852
    %2854 = vmax.xlane.f32.xlu0 %v2745
    %v2855 = vpop.xlane.xlu0 %2854
    %2856 = vmax.xlane.f32.xlu0 %v2746
    %v2857 = vpop.xlane.xlu0 %2856
    %2858 = vmax.xlane.f32.xlu0 %v2747
    %v2859 = vpop.xlane.xlu0 %2858
    %2860 = vmax.xlane.f32.xlu0 %v2748
    %v2861 = vpop.xlane.xlu0 %2860
    %2862 = vmax.xlane.f32.xlu0 %v2749
    %v2863 = vpop.xlane.xlu0 %2862
    %2864 = vmax.xlane.f32.xlu0 %v2750
    %v2865 = vpop.xlane.xlu0 %2864
    %2866 = vmax.xlane.f32.xlu0 %v2751
    %v2867 = vpop.xlane.xlu0 %2866
    %2868 = vmax.xlane.f32.xlu0 %v2752
    %v2869 = vpop.xlane.xlu0 %2868
    %2870 = vmax.xlane.f32.xlu0 %v2753
    %v2871 = vpop.xlane.xlu0 %2870
    %2872 = vmax.xlane.f32.xlu0 %v2754
    %v2873 = vpop.xlane.xlu0 %2872
    %2874 = vmax.xlane.f32.xlu0 %v2755
    %v2875 = vpop.xlane.xlu0 %2874
    %2876 = vmax.xlane.f32.xlu0 %v2756
    %v2877 = vpop.xlane.xlu0 %2876
    %2878 = vmax.xlane.f32.xlu0 %v2757
    %v2879 = vpop.xlane.xlu0 %2878
    %2880 = vmax.xlane.f32.xlu0 %v2758
    %v2881 = vpop.xlane.xlu0 %2880
    %2882 = vmax.xlane.f32.xlu0 %v2759
    %v2883 = vpop.xlane.xlu0 %2882
    %2884 = vmax.xlane.f32.xlu0 %v2760
    %v2885 = vpop.xlane.xlu0 %2884
    %2886 = vmax.xlane.f32.xlu0 %v2761
    %v2887 = vpop.xlane.xlu0 %2886
    %2888 = vmax.xlane.f32.xlu0 %v2762
    %v2889 = vpop.xlane.xlu0 %2888
    %2890 = vmax.xlane.f32.xlu0 %v2763
    %v2891 = vpop.xlane.xlu0 %2890
    %v2892 = vsub.f32 %v2700, %v2765
    %v2893 = vsub.f32 %v2701, %v2767
    %v2894 = vsub.f32 %v2702, %v2769
    %v2895 = vsub.f32 %v2703, %v2771
    %v2896 = vsub.f32 %v2704, %v2773
    %v2897 = vsub.f32 %v2705, %v2775
    %v2898 = vsub.f32 %v2706, %v2777
    %v2899 = vsub.f32 %v2707, %v2779
    %v2900 = vsub.f32 %v2708, %v2781
    %v2901 = vsub.f32 %v2709, %v2783
    %v2902 = vsub.f32 %v2710, %v2785
    %v2903 = vsub.f32 %v2711, %v2787
    %v2904 = vsub.f32 %v2712, %v2789
    %v2905 = vsub.f32 %v2713, %v2791
    %v2906 = vsub.f32 %v2714, %v2793
    %v2907 = vsub.f32 %v2715, %v2795
    %v2908 = vsub.f32 %v2716, %v2797
    %v2909 = vsub.f32 %v2717, %v2799
    %v2910 = vsub.f32 %v2718, %v2801
    %v2911 = vsub.f32 %v2719, %v2803
    %v2912 = vsub.f32 %v2720, %v2805
    %v2913 = vsub.f32 %v2721, %v2807
    %v2914 = vsub.f32 %v2722, %v2809
    %v2915 = vsub.f32 %v2723, %v2811
    %v2916 = vsub.f32 %v2724, %v2813
    %v2917 = vsub.f32 %v2725, %v2815
    %v2918 = vsub.f32 %v2726, %v2817
    %v2919 = vsub.f32 %v2727, %v2819
    %v2920 = vsub.f32 %v2728, %v2821
    %v2921 = vsub.f32 %v2729, %v2823
    %v2922 = vsub.f32 %v2730, %v2825
    %v2923 = vsub.f32 %v2731, %v2827
    %v2924 = vsub.f32 %v2732, %v2829
    %v2925 = vsub.f32 %v2733, %v2831
    %v2926 = vsub.f32 %v2734, %v2833
    %v2927 = vsub.f32 %v2735, %v2835
    %v2928 = vsub.f32 %v2736, %v2837
    %v2929 = vsub.f32 %v2737, %v2839
    %v2930 = vsub.f32 %v2738, %v2841
    %v2931 = vsub.f32 %v2739, %v2843
    %v2932 = vsub.f32 %v2740, %v2845
    %v2933 = vsub.f32 %v2741, %v2847
    %v2934 = vsub.f32 %v2742, %v2849
    %v2935 = vsub.f32 %v2743, %v2851
    %v2936 = vsub.f32 %v2744, %v2853
    %v2937 = vsub.f32 %v2745, %v2855
    %v2938 = vsub.f32 %v2746, %v2857
    %v2939 = vsub.f32 %v2747, %v2859
    %v2940 = vsub.f32 %v2748, %v2861
    %v2941 = vsub.f32 %v2749, %v2863
    %v2942 = vsub.f32 %v2750, %v2865
    %v2943 = vsub.f32 %v2751, %v2867
    %v2944 = vsub.f32 %v2752, %v2869
    %v2945 = vsub.f32 %v2753, %v2871
    %v2946 = vsub.f32 %v2754, %v2873
    %v2947 = vsub.f32 %v2755, %v2875
    %v2948 = vsub.f32 %v2756, %v2877
    %v2949 = vsub.f32 %v2757, %v2879
    %v2950 = vsub.f32 %v2758, %v2881
    %v2951 = vsub.f32 %v2759, %v2883
    %v2952 = vsub.f32 %v2760, %v2885
    %v2953 = vsub.f32 %v2761, %v2887
    %v2954 = vsub.f32 %v2762, %v2889
    %v2955 = vsub.f32 %v2763, %v2891
    %v2956 = vmul.f32 %v2892, 1.442695
    %v2957 = vpow.pop %v2956
    %v2958 = vmul.f32 %v2893, 1.442695
    %v2959 = vpow.pop %v2958
    %v2960 = vmul.f32 %v2894, 1.442695
    %v2961 = vpow.pop %v2960
    %v2962 = vmul.f32 %v2895, 1.442695
    %v2963 = vpow.pop %v2962
    %v2964 = vmul.f32 %v2896, 1.442695
    %v2965 = vpow.pop %v2964
    %v2966 = vmul.f32 %v2897, 1.442695
    %v2967 = vpow.pop %v2966
    %v2968 = vmul.f32 %v2898, 1.442695
    %v2969 = vpow.pop %v2968
    %v2970 = vmul.f32 %v2899, 1.442695
    %v2971 = vpow.pop %v2970
    %v2972 = vmul.f32 %v2900, 1.442695
    %v2973 = vpow.pop %v2972
    %v2974 = vmul.f32 %v2901, 1.442695
    %v2975 = vpow.pop %v2974
    %v2976 = vmul.f32 %v2902, 1.442695
    %v2977 = vpow.pop %v2976
    %v2978 = vmul.f32 %v2903, 1.442695
    %v2979 = vpow.pop %v2978
    %v2980 = vmul.f32 %v2904, 1.442695
    %v2981 = vpow.pop %v2980
    %v2982 = vmul.f32 %v2905, 1.442695
    %v2983 = vpow.pop %v2982
    %v2984 = vmul.f32 %v2906, 1.442695
    %v2985 = vpow.pop %v2984
    %v2986 = vmul.f32 %v2907, 1.442695
    %v2987 = vpow.pop %v2986
    %v2988 = vmul.f32 %v2908, 1.442695
    %v2989 = vpow.pop %v2988
    %v2990 = vmul.f32 %v2909, 1.442695
    %v2991 = vpow.pop %v2990
    %v2992 = vmul.f32 %v2910, 1.442695
    %v2993 = vpow.pop %v2992
    %v2994 = vmul.f32 %v2911, 1.442695
    %v2995 = vpow.pop %v2994
    %v2996 = vmul.f32 %v2912, 1.442695
    %v2997 = vpow.pop %v2996
    %v2998 = vmul.f32 %v2913, 1.442695
    %v2999 = vpow.pop %v2998
    %v3000 = vmul.f32 %v2914, 1.442695
    %v3001 = vpow.pop %v3000
    %v3002 = vmul.f32 %v2915, 1.442695
    %v3003 = vpow.pop %v3002
    %v3004 = vmul.f32 %v2916, 1.442695
    %v3005 = vpow.pop %v3004
    %v3006 = vmul.f32 %v2917, 1.442695
    %v3007 = vpow.pop %v3006
    %v3008 = vmul.f32 %v2918, 1.442695
    %v3009 = vpow.pop %v3008
    %v3010 = vmul.f32 %v2919, 1.442695
    %v3011 = vpow.pop %v3010
    %v3012 = vmul.f32 %v2920, 1.442695
    %v3013 = vpow.pop %v3012
    %v3014 = vmul.f32 %v2921, 1.442695
    %v3015 = vpow.pop %v3014
    %v3016 = vmul.f32 %v2922, 1.442695
    %v3017 = vpow.pop %v3016
    %v3018 = vmul.f32 %v2923, 1.442695
    %v3019 = vpow.pop %v3018
    %v3020 = vmul.f32 %v2924, 1.442695
    %v3021 = vpow.pop %v3020
    %v3022 = vmul.f32 %v2925, 1.442695
    %v3023 = vpow.pop %v3022
    %v3024 = vmul.f32 %v2926, 1.442695
    %v3025 = vpow.pop %v3024
    %v3026 = vmul.f32 %v2927, 1.442695
    %v3027 = vpow.pop %v3026
    %v3028 = vmul.f32 %v2928, 1.442695
    %v3029 = vpow.pop %v3028
    %v3030 = vmul.f32 %v2929, 1.442695
    %v3031 = vpow.pop %v3030
    %v3032 = vmul.f32 %v2930, 1.442695
    %v3033 = vpow.pop %v3032
    %v3034 = vmul.f32 %v2931, 1.442695
    %v3035 = vpow.pop %v3034
    %v3036 = vmul.f32 %v2932, 1.442695
    %v3037 = vpow.pop %v3036
    %v3038 = vmul.f32 %v2933, 1.442695
    %v3039 = vpow.pop %v3038
    %v3040 = vmul.f32 %v2934, 1.442695
    %v3041 = vpow.pop %v3040
    %v3042 = vmul.f32 %v2935, 1.442695
    %v3043 = vpow.pop %v3042
    %v3044 = vmul.f32 %v2936, 1.442695
    %v3045 = vpow.pop %v3044
    %v3046 = vmul.f32 %v2937, 1.442695
    %v3047 = vpow.pop %v3046
    %v3048 = vmul.f32 %v2938, 1.442695
    %v3049 = vpow.pop %v3048
    %v3050 = vmul.f32 %v2939, 1.442695
    %v3051 = vpow.pop %v3050
    %v3052 = vmul.f32 %v2940, 1.442695
    %v3053 = vpow.pop %v3052
    %v3054 = vmul.f32 %v2941, 1.442695
    %v3055 = vpow.pop %v3054
    %v3056 = vmul.f32 %v2942, 1.442695
    %v3057 = vpow.pop %v3056
    %v3058 = vmul.f32 %v2943, 1.442695
    %v3059 = vpow.pop %v3058
    %v3060 = vmul.f32 %v2944, 1.442695
    %v3061 = vpow.pop %v3060
    %v3062 = vmul.f32 %v2945, 1.442695
    %v3063 = vpow.pop %v3062
    %v3064 = vmul.f32 %v2946, 1.442695
    %v3065 = vpow.pop %v3064
    %v3066 = vmul.f32 %v2947, 1.442695
    %v3067 = vpow.pop %v3066
    %v3068 = vmul.f32 %v2948, 1.442695
    %v3069 = vpow.pop %v3068
    %v3070 = vmul.f32 %v2949, 1.442695
    %v3071 = vpow.pop %v3070
    %v3072 = vmul.f32 %v2950, 1.442695
    %v3073 = vpow.pop %v3072
    %v3074 = vmul.f32 %v2951, 1.442695
    %v3075 = vpow.pop %v3074
    %v3076 = vmul.f32 %v2952, 1.442695
    %v3077 = vpow.pop %v3076
    %v3078 = vmul.f32 %v2953, 1.442695
    %v3079 = vpow.pop %v3078
    %v3080 = vmul.f32 %v2954, 1.442695
    %v3081 = vpow.pop %v3080
    %v3082 = vmul.f32 %v2955, 1.442695
    %v3083 = vpow.pop %v3082
    %v3084 = vmul.f32 %v2957, %v50
    %v3085 = vmul.f32 %v2959, %v51
    %v3086 = vmul.f32 %v2961, %v52
    %v3087 = vmul.f32 %v2963, %v53
    %v3088 = vmul.f32 %v2965, %v54
    %v3089 = vmul.f32 %v2967, %v55
    %v3090 = vmul.f32 %v2969, %v56
    %v3091 = vmul.f32 %v2971, %v57
    %v3092 = vmul.f32 %v2973, %v58
    %v3093 = vmul.f32 %v2975, %v59
    %v3094 = vmul.f32 %v2977, %v60
    %v3095 = vmul.f32 %v2979, %v61
    %v3096 = vmul.f32 %v2981, %v62
    %v3097 = vmul.f32 %v2983, %v63
    %v3098 = vmul.f32 %v2985, %v64
    %v3099 = vmul.f32 %v2987, %v65
    %v3100 = vmul.f32 %v2989, %v50
    %v3101 = vmul.f32 %v2991, %v51
    %v3102 = vmul.f32 %v2993, %v52
    %v3103 = vmul.f32 %v2995, %v53
    %v3104 = vmul.f32 %v2997, %v54
    %v3105 = vmul.f32 %v2999, %v55
    %v3106 = vmul.f32 %v3001, %v56
    %v3107 = vmul.f32 %v3003, %v57
    %v3108 = vmul.f32 %v3005, %v58
    %v3109 = vmul.f32 %v3007, %v59
    %v3110 = vmul.f32 %v3009, %v60
    %v3111 = vmul.f32 %v3011, %v61
    %v3112 = vmul.f32 %v3013, %v62
    %v3113 = vmul.f32 %v3015, %v63
    %v3114 = vmul.f32 %v3017, %v64
    %v3115 = vmul.f32 %v3019, %v65
    %v3116 = vmul.f32 %v3021, %v50
    %v3117 = vmul.f32 %v3023, %v51
    %v3118 = vmul.f32 %v3025, %v52
    %v3119 = vmul.f32 %v3027, %v53
    %v3120 = vmul.f32 %v3029, %v54
    %v3121 = vmul.f32 %v3031, %v55
    %v3122 = vmul.f32 %v3033, %v56
    %v3123 = vmul.f32 %v3035, %v57
    %v3124 = vmul.f32 %v3037, %v58
    %v3125 = vmul.f32 %v3039, %v59
    %v3126 = vmul.f32 %v3041, %v60
    %v3127 = vmul.f32 %v3043, %v61
    %v3128 = vmul.f32 %v3045, %v62
    %v3129 = vmul.f32 %v3047, %v63
    %v3130 = vmul.f32 %v3049, %v64
    %v3131 = vmul.f32 %v3051, %v65
    %v3132 = vmul.f32 %v3053, %v50
    %v3133 = vmul.f32 %v3055, %v51
    %v3134 = vmul.f32 %v3057, %v52
    %v3135 = vmul.f32 %v3059, %v53
    %v3136 = vmul.f32 %v3061, %v54
    %v3137 = vmul.f32 %v3063, %v55
    %v3138 = vmul.f32 %v3065, %v56
    %v3139 = vmul.f32 %v3067, %v57
    %v3140 = vmul.f32 %v3069, %v58
    %v3141 = vmul.f32 %v3071, %v59
    %v3142 = vmul.f32 %v3073, %v60
    %v3143 = vmul.f32 %v3075, %v61
    %v3144 = vmul.f32 %v3077, %v62
    %v3145 = vmul.f32 %v3079, %v63
    %v3146 = vmul.f32 %v3081, %v64
    %v3147 = vmul.f32 %v3083, %v65
    %3148 = vadd.xlane.f32.xlu0 %v3084
    %v3149 = vpop.xlane.xlu0 %3148
    %3150 = vadd.xlane.f32.xlu0 %v3085
    %v3151 = vpop.xlane.xlu0 %3150
    %3152 = vadd.xlane.f32.xlu0 %v3086
    %v3153 = vpop.xlane.xlu0 %3152
    %3154 = vadd.xlane.f32.xlu0 %v3087
    %v3155 = vpop.xlane.xlu0 %3154
    %3156 = vadd.xlane.f32.xlu0 %v3088
    %v3157 = vpop.xlane.xlu0 %3156
    %3158 = vadd.xlane.f32.xlu0 %v3089
    %v3159 = vpop.xlane.xlu0 %3158
    %3160 = vadd.xlane.f32.xlu0 %v3090
    %v3161 = vpop.xlane.xlu0 %3160
    %3162 = vadd.xlane.f32.xlu0 %v3091
    %v3163 = vpop.xlane.xlu0 %3162
    %3164 = vadd.xlane.f32.xlu0 %v3092
    %v3165 = vpop.xlane.xlu0 %3164
    %3166 = vadd.xlane.f32.xlu0 %v3093
    %v3167 = vpop.xlane.xlu0 %3166
    %3168 = vadd.xlane.f32.xlu0 %v3094
    %v3169 = vpop.xlane.xlu0 %3168
    %3170 = vadd.xlane.f32.xlu0 %v3095
    %v3171 = vpop.xlane.xlu0 %3170
    %3172 = vadd.xlane.f32.xlu0 %v3096
    %v3173 = vpop.xlane.xlu0 %3172
    %3174 = vadd.xlane.f32.xlu0 %v3097
    %v3175 = vpop.xlane.xlu0 %3174
    %3176 = vadd.xlane.f32.xlu0 %v3098
    %v3177 = vpop.xlane.xlu0 %3176
    %3178 = vadd.xlane.f32.xlu0 %v3099
    %v3179 = vpop.xlane.xlu0 %3178
    %3180 = vadd.xlane.f32.xlu0 %v3100
    %v3181 = vpop.xlane.xlu0 %3180
    %3182 = vadd.xlane.f32.xlu0 %v3101
    %v3183 = vpop.xlane.xlu0 %3182
    %3184 = vadd.xlane.f32.xlu0 %v3102
    %v3185 = vpop.xlane.xlu0 %3184
    %3186 = vadd.xlane.f32.xlu0 %v3103
    %v3187 = vpop.xlane.xlu0 %3186
    %3188 = vadd.xlane.f32.xlu0 %v3104
    %v3189 = vpop.xlane.xlu0 %3188
    %3190 = vadd.xlane.f32.xlu0 %v3105
    %v3191 = vpop.xlane.xlu0 %3190
    %3192 = vadd.xlane.f32.xlu0 %v3106
    %v3193 = vpop.xlane.xlu0 %3192
    %3194 = vadd.xlane.f32.xlu0 %v3107
    %v3195 = vpop.xlane.xlu0 %3194
    %3196 = vadd.xlane.f32.xlu0 %v3108
    %v3197 = vpop.xlane.xlu0 %3196
    %3198 = vadd.xlane.f32.xlu0 %v3109
    %v3199 = vpop.xlane.xlu0 %3198
    %3200 = vadd.xlane.f32.xlu0 %v3110
    %v3201 = vpop.xlane.xlu0 %3200
    %3202 = vadd.xlane.f32.xlu0 %v3111
    %v3203 = vpop.xlane.xlu0 %3202
    %3204 = vadd.xlane.f32.xlu0 %v3112
    %v3205 = vpop.xlane.xlu0 %3204
    %3206 = vadd.xlane.f32.xlu0 %v3113
    %v3207 = vpop.xlane.xlu0 %3206
    %3208 = vadd.xlane.f32.xlu0 %v3114
    %v3209 = vpop.xlane.xlu0 %3208
    %3210 = vadd.xlane.f32.xlu0 %v3115
    %v3211 = vpop.xlane.xlu0 %3210
    %3212 = vadd.xlane.f32.xlu0 %v3116
    %v3213 = vpop.xlane.xlu0 %3212
    %3214 = vadd.xlane.f32.xlu0 %v3117
    %v3215 = vpop.xlane.xlu0 %3214
    %3216 = vadd.xlane.f32.xlu0 %v3118
    %v3217 = vpop.xlane.xlu0 %3216
    %3218 = vadd.xlane.f32.xlu0 %v3119
    %v3219 = vpop.xlane.xlu0 %3218
    %3220 = vadd.xlane.f32.xlu0 %v3120
    %v3221 = vpop.xlane.xlu0 %3220
    %3222 = vadd.xlane.f32.xlu0 %v3121
    %v3223 = vpop.xlane.xlu0 %3222
    %3224 = vadd.xlane.f32.xlu0 %v3122
    %v3225 = vpop.xlane.xlu0 %3224
    %3226 = vadd.xlane.f32.xlu0 %v3123
    %v3227 = vpop.xlane.xlu0 %3226
    %3228 = vadd.xlane.f32.xlu0 %v3124
    %v3229 = vpop.xlane.xlu0 %3228
    %3230 = vadd.xlane.f32.xlu0 %v3125
    %v3231 = vpop.xlane.xlu0 %3230
    %3232 = vadd.xlane.f32.xlu0 %v3126
    %v3233 = vpop.xlane.xlu0 %3232
    %3234 = vadd.xlane.f32.xlu0 %v3127
    %v3235 = vpop.xlane.xlu0 %3234
    %3236 = vadd.xlane.f32.xlu0 %v3128
    %v3237 = vpop.xlane.xlu0 %3236
    %3238 = vadd.xlane.f32.xlu0 %v3129
    %v3239 = vpop.xlane.xlu0 %3238
    %3240 = vadd.xlane.f32.xlu0 %v3130
    %v3241 = vpop.xlane.xlu0 %3240
    %3242 = vadd.xlane.f32.xlu0 %v3131
    %v3243 = vpop.xlane.xlu0 %3242
    %3244 = vadd.xlane.f32.xlu0 %v3132
    %v3245 = vpop.xlane.xlu0 %3244
    %3246 = vadd.xlane.f32.xlu0 %v3133
    %v3247 = vpop.xlane.xlu0 %3246
    %3248 = vadd.xlane.f32.xlu0 %v3134
    %v3249 = vpop.xlane.xlu0 %3248
    %3250 = vadd.xlane.f32.xlu0 %v3135
    %v3251 = vpop.xlane.xlu0 %3250
    %3252 = vadd.xlane.f32.xlu0 %v3136
    %v3253 = vpop.xlane.xlu0 %3252
    %3254 = vadd.xlane.f32.xlu0 %v3137
    %v3255 = vpop.xlane.xlu0 %3254
    %3256 = vadd.xlane.f32.xlu0 %v3138
    %v3257 = vpop.xlane.xlu0 %3256
    %3258 = vadd.xlane.f32.xlu0 %v3139
    %v3259 = vpop.xlane.xlu0 %3258
    %3260 = vadd.xlane.f32.xlu0 %v3140
    %v3261 = vpop.xlane.xlu0 %3260
    %3262 = vadd.xlane.f32.xlu0 %v3141
    %v3263 = vpop.xlane.xlu0 %3262
    %3264 = vadd.xlane.f32.xlu0 %v3142
    %v3265 = vpop.xlane.xlu0 %3264
    %3266 = vadd.xlane.f32.xlu0 %v3143
    %v3267 = vpop.xlane.xlu0 %3266
    %3268 = vadd.xlane.f32.xlu0 %v3144
    %v3269 = vpop.xlane.xlu0 %3268
    %3270 = vadd.xlane.f32.xlu0 %v3145
    %v3271 = vpop.xlane.xlu0 %3270
    %3272 = vadd.xlane.f32.xlu0 %v3146
    %v3273 = vpop.xlane.xlu0 %3272
    %3274 = vadd.xlane.f32.xlu0 %v3147
    %v3275 = vpop.xlane.xlu0 %3274
    %v3276 = vrcp.pop %v3149
    %v3277 = vmul.f32 %v3084, %v3276
    %v3278 = vrcp.pop %v3151
    %v3279 = vmul.f32 %v3085, %v3278
    %v3280 = vrcp.pop %v3153
    %v3281 = vmul.f32 %v3086, %v3280
    %v3282 = vrcp.pop %v3155
    %v3283 = vmul.f32 %v3087, %v3282
    %v3284 = vrcp.pop %v3157
    %v3285 = vmul.f32 %v3088, %v3284
    %v3286 = vrcp.pop %v3159
    %v3287 = vmul.f32 %v3089, %v3286
    %v3288 = vrcp.pop %v3161
    %v3289 = vmul.f32 %v3090, %v3288
    %v3290 = vrcp.pop %v3163
    %v3291 = vmul.f32 %v3091, %v3290
    %v3292 = vrcp.pop %v3165
    %v3293 = vmul.f32 %v3092, %v3292
    %v3294 = vrcp.pop %v3167
    %v3295 = vmul.f32 %v3093, %v3294
    %v3296 = vrcp.pop %v3169
    %v3297 = vmul.f32 %v3094, %v3296
    %v3298 = vrcp.pop %v3171
    %v3299 = vmul.f32 %v3095, %v3298
    %v3300 = vrcp.pop %v3173
    %v3301 = vmul.f32 %v3096, %v3300
    %v3302 = vrcp.pop %v3175
    %v3303 = vmul.f32 %v3097, %v3302
    %v3304 = vrcp.pop %v3177
    %v3305 = vmul.f32 %v3098, %v3304
    %v3306 = vrcp.pop %v3179
    %v3307 = vmul.f32 %v3099, %v3306
    %v3308 = vrcp.pop %v3181
    %v3309 = vmul.f32 %v3100, %v3308
    %v3310 = vrcp.pop %v3183
    %v3311 = vmul.f32 %v3101, %v3310
    %v3312 = vrcp.pop %v3185
    %v3313 = vmul.f32 %v3102, %v3312
    %v3314 = vrcp.pop %v3187
    %v3315 = vmul.f32 %v3103, %v3314
    %v3316 = vrcp.pop %v3189
    %v3317 = vmul.f32 %v3104, %v3316
    %v3318 = vrcp.pop %v3191
    %v3319 = vmul.f32 %v3105, %v3318
    %v3320 = vrcp.pop %v3193
    %v3321 = vmul.f32 %v3106, %v3320
    %v3322 = vrcp.pop %v3195
    %v3323 = vmul.f32 %v3107, %v3322
    %v3324 = vrcp.pop %v3197
    %v3325 = vmul.f32 %v3108, %v3324
    %v3326 = vrcp.pop %v3199
    %v3327 = vmul.f32 %v3109, %v3326
    %v3328 = vrcp.pop %v3201
    %v3329 = vmul.f32 %v3110, %v3328
    %v3330 = vrcp.pop %v3203
    %v3331 = vmul.f32 %v3111, %v3330
    %v3332 = vrcp.pop %v3205
    %v3333 = vmul.f32 %v3112, %v3332
    %v3334 = vrcp.pop %v3207
    %v3335 = vmul.f32 %v3113, %v3334
    %v3336 = vrcp.pop %v3209
    %v3337 = vmul.f32 %v3114, %v3336
    %v3338 = vrcp.pop %v3211
    %v3339 = vmul.f32 %v3115, %v3338
    %v3340 = vrcp.pop %v3213
    %v3341 = vmul.f32 %v3116, %v3340
    %v3342 = vrcp.pop %v3215
    %v3343 = vmul.f32 %v3117, %v3342
    %v3344 = vrcp.pop %v3217
    %v3345 = vmul.f32 %v3118, %v3344
    %v3346 = vrcp.pop %v3219
    %v3347 = vmul.f32 %v3119, %v3346
    %v3348 = vrcp.pop %v3221
    %v3349 = vmul.f32 %v3120, %v3348
    %v3350 = vrcp.pop %v3223
    %v3351 = vmul.f32 %v3121, %v3350
    %v3352 = vrcp.pop %v3225
    %v3353 = vmul.f32 %v3122, %v3352
    %v3354 = vrcp.pop %v3227
    %v3355 = vmul.f32 %v3123, %v3354
    %v3356 = vrcp.pop %v3229
    %v3357 = vmul.f32 %v3124, %v3356
    %v3358 = vrcp.pop %v3231
    %v3359 = vmul.f32 %v3125, %v3358
    %v3360 = vrcp.pop %v3233
    %v3361 = vmul.f32 %v3126, %v3360
    %v3362 = vrcp.pop %v3235
    %v3363 = vmul.f32 %v3127, %v3362
    %v3364 = vrcp.pop %v3237
    %v3365 = vmul.f32 %v3128, %v3364
    %v3366 = vrcp.pop %v3239
    %v3367 = vmul.f32 %v3129, %v3366
    %v3368 = vrcp.pop %v3241
    %v3369 = vmul.f32 %v3130, %v3368
    %v3370 = vrcp.pop %v3243
    %v3371 = vmul.f32 %v3131, %v3370
    %v3372 = vrcp.pop %v3245
    %v3373 = vmul.f32 %v3132, %v3372
    %v3374 = vrcp.pop %v3247
    %v3375 = vmul.f32 %v3133, %v3374
    %v3376 = vrcp.pop %v3249
    %v3377 = vmul.f32 %v3134, %v3376
    %v3378 = vrcp.pop %v3251
    %v3379 = vmul.f32 %v3135, %v3378
    %v3380 = vrcp.pop %v3253
    %v3381 = vmul.f32 %v3136, %v3380
    %v3382 = vrcp.pop %v3255
    %v3383 = vmul.f32 %v3137, %v3382
    %v3384 = vrcp.pop %v3257
    %v3385 = vmul.f32 %v3138, %v3384
    %v3386 = vrcp.pop %v3259
    %v3387 = vmul.f32 %v3139, %v3386
    %v3388 = vrcp.pop %v3261
    %v3389 = vmul.f32 %v3140, %v3388
    %v3390 = vrcp.pop %v3263
    %v3391 = vmul.f32 %v3141, %v3390
    %v3392 = vrcp.pop %v3265
    %v3393 = vmul.f32 %v3142, %v3392
    %v3394 = vrcp.pop %v3267
    %v3395 = vmul.f32 %v3143, %v3394
    %v3396 = vrcp.pop %v3269
    %v3397 = vmul.f32 %v3144, %v3396
    %v3398 = vrcp.pop %v3271
    %v3399 = vmul.f32 %v3145, %v3398
    %v3400 = vrcp.pop %v3273
    %v3401 = vmul.f32 %v3146, %v3400
    %v3402 = vrcp.pop %v3275
    %v3403 = vmul.f32 %v3147, %v3402
    %v3404 = vpack.c.bf16 %v3279, %v3277
    %v3405 = vpack.c.bf16 %v3283, %v3281
    %v3406 = vpack.c.bf16 %v3287, %v3285
    %v3407 = vpack.c.bf16 %v3291, %v3289
    %v3408 = vpack.c.bf16 %v3295, %v3293
    %v3409 = vpack.c.bf16 %v3299, %v3297
    %v3410 = vpack.c.bf16 %v3303, %v3301
    %v3411 = vpack.c.bf16 %v3307, %v3305
    %v3412 = vpack.c.bf16 %v3311, %v3309
    %v3413 = vpack.c.bf16 %v3315, %v3313
    %v3414 = vpack.c.bf16 %v3319, %v3317
    %v3415 = vpack.c.bf16 %v3323, %v3321
    %v3416 = vpack.c.bf16 %v3327, %v3325
    %v3417 = vpack.c.bf16 %v3331, %v3329
    %v3418 = vpack.c.bf16 %v3335, %v3333
    %v3419 = vpack.c.bf16 %v3339, %v3337
    %v3420 = vpack.c.bf16 %v3343, %v3341
    %v3421 = vpack.c.bf16 %v3347, %v3345
    %v3422 = vpack.c.bf16 %v3351, %v3349
    %v3423 = vpack.c.bf16 %v3355, %v3353
    %v3424 = vpack.c.bf16 %v3359, %v3357
    %v3425 = vpack.c.bf16 %v3363, %v3361
    %v3426 = vpack.c.bf16 %v3367, %v3365
    %v3427 = vpack.c.bf16 %v3371, %v3369
    %v3428 = vpack.c.bf16 %v3375, %v3373
    %v3429 = vpack.c.bf16 %v3379, %v3377
    %v3430 = vpack.c.bf16 %v3383, %v3381
    %v3431 = vpack.c.bf16 %v3387, %v3385
    %v3432 = vpack.c.bf16 %v3391, %v3389
    %v3433 = vpack.c.bf16 %v3395, %v3393
    %v3434 = vpack.c.bf16 %v3399, %v3397
    %v3435 = vpack.c.bf16 %v3403, %v3401
    %v3436 = vpack.c.bf16 %v1420, %v1417
    %v3437 = vpack.c.bf16 %v1428, %v1425
    %v3438 = vpack.c.bf16 %v1436, %v1433
    %v3439 = vpack.c.bf16 %v1444, %v1441
    %v3440 = vpack.c.bf16 %v1452, %v1449
    %v3441 = vpack.c.bf16 %v1460, %v1457
    %v3442 = vpack.c.bf16 %v1468, %v1465
    %v3443 = vpack.c.bf16 %v1476, %v1473
    %v3444 = vpack.c.bf16 %v1818, %v1816
    %v3445 = vpack.c.bf16 %v1822, %v1820
    %v3446 = vpack.c.bf16 %v1826, %v1824
    %v3447 = vpack.c.bf16 %v1830, %v1828
    %v3448 = vpack.c.bf16 %v1834, %v1832
    %v3449 = vpack.c.bf16 %v1838, %v1836
    %v3450 = vpack.c.bf16 %v1842, %v1840
    %v3451 = vpack.c.bf16 %v1846, %v1844
    %v3452 = vpack.c.bf16 %v1866, %v1864
    %v3453 = vpack.c.bf16 %v1870, %v1868
    %v3454 = vpack.c.bf16 %v1874, %v1872
    %v3455 = vpack.c.bf16 %v1878, %v1876
    %v3456 = vpack.c.bf16 %v1882, %v1880
    %v3457 = vpack.c.bf16 %v1886, %v1884
    %v3458 = vpack.c.bf16 %v1890, %v1888
    %v3459 = vpack.c.bf16 %v1894, %v1892
    %v3460 = vpack.c.bf16 %v1914, %v1912
    %v3461 = vpack.c.bf16 %v1918, %v1916
    %v3462 = vpack.c.bf16 %v1922, %v1920
    %v3463 = vpack.c.bf16 %v1926, %v1924
    %v3464 = vpack.c.bf16 %v1930, %v1928
    %v3465 = vpack.c.bf16 %v1934, %v1932
    %v3466 = vpack.c.bf16 %v1938, %v1936
    %v3467 = vpack.c.bf16 %v1942, %v1940
    %3468 = vmatprep.subr.bf16.mxu0 0
    %3469 = vmatpush1.bf16.msra.mxu0 %v3436
    %3470 = vmatprep.subr.bf16.mxu0 0
    %3471 = vmatpush1.bf16.msra.mxu0 %v3437
    %3472 = vmatprep.subr.bf16.mxu0 0
    %3473 = vmatpush1.bf16.msra.mxu0 %v3438
    %3474 = vmatprep.subr.bf16.mxu0 0
    %3475 = vmatpush1.bf16.msra.mxu0 %v3439
    %3476 = vmatprep.subr.bf16.mxu0 0
    %3477 = vmatpush1.bf16.msra.mxu0 %v3440
    %3478 = vmatprep.subr.bf16.mxu0 0
    %3479 = vmatpush1.bf16.msra.mxu0 %v3441
    %3480 = vmatprep.subr.bf16.mxu0 0
    %3481 = vmatpush1.bf16.msra.mxu0 %v3442
    %3482 = vmatprep.subr.bf16.mxu0 0
    %3483 = vmatpush1.bf16.msra.mxu0 %v3443
    %3484 = vmatprep.subr.bf16.mxu0 0
    %3485 = vmatpush1.bf16.msra.mxu0 0
    %3486 = vmatprep.subr.bf16.mxu0 0
    %3487 = vmatpush1.bf16.msra.mxu0 0
    %3488 = vmatprep.subr.bf16.mxu0 0
    %3489 = vmatpush1.bf16.msra.mxu0 0
    %3490 = vmatprep.subr.bf16.mxu0 0
    %3491 = vmatpush1.bf16.msra.mxu0 0
    %3492 = vmatprep.subr.bf16.mxu0 0
    %3493 = vmatpush1.bf16.msra.mxu0 0
    %3494 = vmatprep.subr.bf16.mxu0 0
    %3495 = vmatpush1.bf16.msra.mxu0 0
    %3496 = vmatprep.subr.bf16.mxu0 0
    %3497 = vmatpush1.bf16.msra.mxu0 0
    %3498 = vmatprep.subr.bf16.mxu0 0
    %3499 = vmatpush1.bf16.msra.mxu0 0
    %3500 = vmatprep.mubr.bf16.mxu0 0
    %3501 = vmatmul.mubr.bf16.gmra.mrb[0].mxu0 %v3404
    %v3502 = vpop.f32.mrb[0].mxu0
    %v3503 = vadd.f32 0.0, %v3502
    %v3504 = vpop.f32.mrb[0].mxu0
    %v3505 = vpop.f32.mrb[0].mxu0
    %v3506 = vadd.f32 0.0, %v3505
    %v3507 = vpop.f32.mrb[0].mxu0
    %3508 = vmatprep.mubr.bf16.mxu0 0
    %3509 = vmatmul.mubr.bf16.gmra.mrb[0].mxu0 %v3405
    %v3510 = vpop.f32.mrb[0].mxu0
    %v3511 = vadd.f32 0.0, %v3510
    %v3512 = vpop.f32.mrb[0].mxu0
    %v3513 = vpop.f32.mrb[0].mxu0
    %v3514 = vadd.f32 0.0, %v3513
    %v3515 = vpop.f32.mrb[0].mxu0
    %3516 = vmatprep.mubr.bf16.mxu0 0
    %3517 = vmatmul.mubr.bf16.gmra.mrb[0].mxu0 %v3406
    %v3518 = vpop.f32.mrb[0].mxu0
    %v3519 = vadd.f32 0.0, %v3518
    %v3520 = vpop.f32.mrb[0].mxu0
    %v3521 = vpop.f32.mrb[0].mxu0
    %v3522 = vadd.f32 0.0, %v3521
    %v3523 = vpop.f32.mrb[0].mxu0
    %3524 = vmatprep.mubr.bf16.mxu0 0
    %3525 = vmatmul.mubr.bf16.gmra.mrb[0].mxu0 %v3407
    %v3526 = vpop.f32.mrb[0].mxu0
    %v3527 = vadd.f32 0.0, %v3526
    %v3528 = vpop.f32.mrb[0].mxu0
    %v3529 = vpop.f32.mrb[0].mxu0
    %v3530 = vadd.f32 0.0, %v3529
    %v3531 = vpop.f32.mrb[0].mxu0
    %3532 = vmatprep.mubr.bf16.mxu0 0
    %3533 = vmatmul.mubr.bf16.gmra.mrb[0].mxu0 %v3408
    %v3534 = vpop.f32.mrb[0].mxu0
    %v3535 = vadd.f32 0.0, %v3534
    %v3536 = vpop.f32.mrb[0].mxu0
    %v3537 = vpop.f32.mrb[0].mxu0
    %v3538 = vadd.f32 0.0, %v3537
    %v3539 = vpop.f32.mrb[0].mxu0
    %3540 = vmatprep.mubr.bf16.mxu0 0
    %3541 = vmatmul.mubr.bf16.gmra.mrb[0].mxu0 %v3409
    %v3542 = vpop.f32.mrb[0].mxu0
    %v3543 = vadd.f32 0.0, %v3542
    %v3544 = vpop.f32.mrb[0].mxu0
    %v3545 = vpop.f32.mrb[0].mxu0
    %v3546 = vadd.f32 0.0, %v3545
    %v3547 = vpop.f32.mrb[0].mxu0
    %3548 = vmatprep.mubr.bf16.mxu0 0
    %3549 = vmatmul.mubr.bf16.gmra.mrb[0].mxu0 %v3410
    %v3550 = vpop.f32.mrb[0].mxu0
    %v3551 = vadd.f32 0.0, %v3550
    %v3552 = vpop.f32.mrb[0].mxu0
    %v3553 = vpop.f32.mrb[0].mxu0
    %v3554 = vadd.f32 0.0, %v3553
    %v3555 = vpop.f32.mrb[0].mxu0
    %3556 = vmatprep.mubr.bf16.mxu0 0
    %3557 = vmatmul.mubr.bf16.gmra.mrb[0].mxu0 %v3411
    %v3558 = vpop.f32.mrb[0].mxu0
    %v3559 = vadd.f32 0.0, %v3558
    %v3560 = vpop.f32.mrb[0].mxu0
    %v3561 = vpop.f32.mrb[0].mxu0
    %v3562 = vadd.f32 0.0, %v3561
    %v3563 = vpop.f32.mrb[0].mxu0
    %3564 = vdwg.mxu0
    %3565 = vmatprep.subr.bf16.mxu0 0
    %3566 = vmatpush1.bf16.msra.mxu0 %v3444
    %3567 = vmatprep.subr.bf16.mxu0 0
    %3568 = vmatpush1.bf16.msra.mxu0 %v3445
    %3569 = vmatprep.subr.bf16.mxu0 0
    %3570 = vmatpush1.bf16.msra.mxu0 %v3446
    %3571 = vmatprep.subr.bf16.mxu0 0
    %3572 = vmatpush1.bf16.msra.mxu0 %v3447
    %3573 = vmatprep.subr.bf16.mxu0 0
    %3574 = vmatpush1.bf16.msra.mxu0 %v3448
    %3575 = vmatprep.subr.bf16.mxu0 0
    %3576 = vmatpush1.bf16.msra.mxu0 %v3449
    %3577 = vmatprep.subr.bf16.mxu0 0
    %3578 = vmatpush1.bf16.msra.mxu0 %v3450
    %3579 = vmatprep.subr.bf16.mxu0 0
    %3580 = vmatpush1.bf16.msra.mxu0 %v3451
    %3581 = vmatprep.subr.bf16.mxu0 0
    %3582 = vmatpush1.bf16.msra.mxu0 0
    %3583 = vmatprep.subr.bf16.mxu0 0
    %3584 = vmatpush1.bf16.msra.mxu0 0
    %3585 = vmatprep.subr.bf16.mxu0 0
    %3586 = vmatpush1.bf16.msra.mxu0 0
    %3587 = vmatprep.subr.bf16.mxu0 0
    %3588 = vmatpush1.bf16.msra.mxu0 0
    %3589 = vmatprep.subr.bf16.mxu0 0
    %3590 = vmatpush1.bf16.msra.mxu0 0
    %3591 = vmatprep.subr.bf16.mxu0 0
    %3592 = vmatpush1.bf16.msra.mxu0 0
    %3593 = vmatprep.subr.bf16.mxu0 0
    %3594 = vmatpush1.bf16.msra.mxu0 0
    %3595 = vmatprep.subr.bf16.mxu0 0
    %3596 = vmatpush1.bf16.msra.mxu0 0
    %3597 = vmatprep.mubr.bf16.mxu0 0
    %3598 = vmatmul.mubr.bf16.gmra.mrb[0].mxu0 %v3412
    %v3599 = vpop.f32.mrb[0].mxu0
    %v3600 = vadd.f32 0.0, %v3599
    %v3601 = vpop.f32.mrb[0].mxu0
    %v3602 = vpop.f32.mrb[0].mxu0
    %v3603 = vadd.f32 0.0, %v3602
    %v3604 = vpop.f32.mrb[0].mxu0
    %3605 = vmatprep.mubr.bf16.mxu0 0
    %3606 = vmatmul.mubr.bf16.gmra.mrb[0].mxu0 %v3413
    %v3607 = vpop.f32.mrb[0].mxu0
    %v3608 = vadd.f32 0.0, %v3607
    %v3609 = vpop.f32.mrb[0].mxu0
    %v3610 = vpop.f32.mrb[0].mxu0
    %v3611 = vadd.f32 0.0, %v3610
    %v3612 = vpop.f32.mrb[0].mxu0
    %3613 = vmatprep.mubr.bf16.mxu0 0
    %3614 = vmatmul.mubr.bf16.gmra.mrb[0].mxu0 %v3414
    %v3615 = vpop.f32.mrb[0].mxu0
    %v3616 = vadd.f32 0.0, %v3615
    %v3617 = vpop.f32.mrb[0].mxu0
    %v3618 = vpop.f32.mrb[0].mxu0
    %v3619 = vadd.f32 0.0, %v3618
    %v3620 = vpop.f32.mrb[0].mxu0
    %3621 = vmatprep.mubr.bf16.mxu0 0
    %3622 = vmatmul.mubr.bf16.gmra.mrb[0].mxu0 %v3415
    %v3623 = vpop.f32.mrb[0].mxu0
    %v3624 = vadd.f32 0.0, %v3623
    %v3625 = vpop.f32.mrb[0].mxu0
    %v3626 = vpop.f32.mrb[0].mxu0
    %v3627 = vadd.f32 0.0, %v3626
    %v3628 = vpop.f32.mrb[0].mxu0
    %3629 = vmatprep.mubr.bf16.mxu0 0
    %3630 = vmatmul.mubr.bf16.gmra.mrb[0].mxu0 %v3416
    %v3631 = vpop.f32.mrb[0].mxu0
    %v3632 = vadd.f32 0.0, %v3631
    %v3633 = vpop.f32.mrb[0].mxu0
    %v3634 = vpop.f32.mrb[0].mxu0
    %v3635 = vadd.f32 0.0, %v3634
    %v3636 = vpop.f32.mrb[0].mxu0
    %3637 = vmatprep.mubr.bf16.mxu0 0
    %3638 = vmatmul.mubr.bf16.gmra.mrb[0].mxu0 %v3417
    %v3639 = vpop.f32.mrb[0].mxu0
    %v3640 = vadd.f32 0.0, %v3639
    %v3641 = vpop.f32.mrb[0].mxu0
    %v3642 = vpop.f32.mrb[0].mxu0
    %v3643 = vadd.f32 0.0, %v3642
    %v3644 = vpop.f32.mrb[0].mxu0
    %3645 = vmatprep.mubr.bf16.mxu0 0
    %3646 = vmatmul.mubr.bf16.gmra.mrb[0].mxu0 %v3418
    %v3647 = vpop.f32.mrb[0].mxu0
    %v3648 = vadd.f32 0.0, %v3647
    %v3649 = vpop.f32.mrb[0].mxu0
    %v3650 = vpop.f32.mrb[0].mxu0
    %v3651 = vadd.f32 0.0, %v3650
    %v3652 = vpop.f32.mrb[0].mxu0
    %3653 = vmatprep.mubr.bf16.mxu0 0
    %3654 = vmatmul.mubr.bf16.gmra.mrb[0].mxu0 %v3419
    %v3655 = vpop.f32.mrb[0].mxu0
    %v3656 = vadd.f32 0.0, %v3655
    %v3657 = vpop.f32.mrb[0].mxu0
    %v3658 = vpop.f32.mrb[0].mxu0
    %v3659 = vadd.f32 0.0, %v3658
    %v3660 = vpop.f32.mrb[0].mxu0
    %3661 = vdwg.mxu0
    %3662 = vmatprep.subr.bf16.mxu0 0
    %3663 = vmatpush1.bf16.msra.mxu0 %v3452
    %3664 = vmatprep.subr.bf16.mxu0 0
    %3665 = vmatpush1.bf16.msra.mxu0 %v3453
    %3666 = vmatprep.subr.bf16.mxu0 0
    %3667 = vmatpush1.bf16.msra.mxu0 %v3454
    %3668 = vmatprep.subr.bf16.mxu0 0
    %3669 = vmatpush1.bf16.msra.mxu0 %v3455
    %3670 = vmatprep.subr.bf16.mxu0 0
    %3671 = vmatpush1.bf16.msra.mxu0 %v3456
    %3672 = vmatprep.subr.bf16.mxu0 0
    %3673 = vmatpush1.bf16.msra.mxu0 %v3457
    %3674 = vmatprep.subr.bf16.mxu0 0
    %3675 = vmatpush1.bf16.msra.mxu0 %v3458
    %3676 = vmatprep.subr.bf16.mxu0 0
    %3677 = vmatpush1.bf16.msra.mxu0 %v3459
    %3678 = vmatprep.subr.bf16.mxu0 0
    %3679 = vmatpush1.bf16.msra.mxu0 0
    %3680 = vmatprep.subr.bf16.mxu0 0
    %3681 = vmatpush1.bf16.msra.mxu0 0
    %3682 = vmatprep.subr.bf16.mxu0 0
    %3683 = vmatpush1.bf16.msra.mxu0 0
    %3684 = vmatprep.subr.bf16.mxu0 0
    %3685 = vmatpush1.bf16.msra.mxu0 0
    %3686 = vmatprep.subr.bf16.mxu0 0
    %3687 = vmatpush1.bf16.msra.mxu0 0
    %3688 = vmatprep.subr.bf16.mxu0 0
    %3689 = vmatpush1.bf16.msra.mxu0 0
    %3690 = vmatprep.subr.bf16.mxu0 0
    %3691 = vmatpush1.bf16.msra.mxu0 0
    %3692 = vmatprep.subr.bf16.mxu0 0
    %3693 = vmatpush1.bf16.msra.mxu0 0
    %3694 = vmatprep.mubr.bf16.mxu0 0
    %3695 = vmatmul.mubr.bf16.gmra.mrb[0].mxu0 %v3420
    %v3696 = vpop.f32.mrb[0].mxu0
    %v3697 = vadd.f32 0.0, %v3696
    %v3698 = vpop.f32.mrb[0].mxu0
    %v3699 = vpop.f32.mrb[0].mxu0
    %v3700 = vadd.f32 0.0, %v3699
    %v3701 = vpop.f32.mrb[0].mxu0
    %3702 = vmatprep.mubr.bf16.mxu0 0
    %3703 = vmatmul.mubr.bf16.gmra.mrb[0].mxu0 %v3421
    %v3704 = vpop.f32.mrb[0].mxu0
    %v3705 = vadd.f32 0.0, %v3704
    %v3706 = vpop.f32.mrb[0].mxu0
    %v3707 = vpop.f32.mrb[0].mxu0
    %v3708 = vadd.f32 0.0, %v3707
    %v3709 = vpop.f32.mrb[0].mxu0
    %3710 = vmatprep.mubr.bf16.mxu0 0
    %3711 = vmatmul.mubr.bf16.gmra.mrb[0].mxu0 %v3422
    %v3712 = vpop.f32.mrb[0].mxu0
    %v3713 = vadd.f32 0.0, %v3712
    %v3714 = vpop.f32.mrb[0].mxu0
    %v3715 = vpop.f32.mrb[0].mxu0
    %v3716 = vadd.f32 0.0, %v3715
    %v3717 = vpop.f32.mrb[0].mxu0
    %3718 = vmatprep.mubr.bf16.mxu0 0
    %3719 = vmatmul.mubr.bf16.gmra.mrb[0].mxu0 %v3423
    %v3720 = vpop.f32.mrb[0].mxu0
    %v3721 = vadd.f32 0.0, %v3720
    %v3722 = vpop.f32.mrb[0].mxu0
    %v3723 = vpop.f32.mrb[0].mxu0
    %v3724 = vadd.f32 0.0, %v3723
    %v3725 = vpop.f32.mrb[0].mxu0
    %3726 = vmatprep.mubr.bf16.mxu0 0
    %3727 = vmatmul.mubr.bf16.gmra.mrb[0].mxu0 %v3424
    %v3728 = vpop.f32.mrb[0].mxu0
    %v3729 = vadd.f32 0.0, %v3728
    %v3730 = vpop.f32.mrb[0].mxu0
    %v3731 = vpop.f32.mrb[0].mxu0
    %v3732 = vadd.f32 0.0, %v3731
    %v3733 = vpop.f32.mrb[0].mxu0
    %3734 = vmatprep.mubr.bf16.mxu0 0
    %3735 = vmatmul.mubr.bf16.gmra.mrb[0].mxu0 %v3425
    %v3736 = vpop.f32.mrb[0].mxu0
    %v3737 = vadd.f32 0.0, %v3736
    %v3738 = vpop.f32.mrb[0].mxu0
    %v3739 = vpop.f32.mrb[0].mxu0
    %v3740 = vadd.f32 0.0, %v3739
    %v3741 = vpop.f32.mrb[0].mxu0
    %3742 = vmatprep.mubr.bf16.mxu0 0
    %3743 = vmatmul.mubr.bf16.gmra.mrb[0].mxu0 %v3426
    %v3744 = vpop.f32.mrb[0].mxu0
    %v3745 = vadd.f32 0.0, %v3744
    %v3746 = vpop.f32.mrb[0].mxu0
    %v3747 = vpop.f32.mrb[0].mxu0
    %v3748 = vadd.f32 0.0, %v3747
    %v3749 = vpop.f32.mrb[0].mxu0
    %3750 = vmatprep.mubr.bf16.mxu0 0
    %3751 = vmatmul.mubr.bf16.gmra.mrb[0].mxu0 %v3427
    %v3752 = vpop.f32.mrb[0].mxu0
    %v3753 = vadd.f32 0.0, %v3752
    %v3754 = vpop.f32.mrb[0].mxu0
    %v3755 = vpop.f32.mrb[0].mxu0
    %v3756 = vadd.f32 0.0, %v3755
    %v3757 = vpop.f32.mrb[0].mxu0
    %3758 = vdwg.mxu0
    %3759 = vmatprep.subr.bf16.mxu0 0
    %3760 = vmatpush1.bf16.msra.mxu0 %v3460
    %3761 = vmatprep.subr.bf16.mxu0 0
    %3762 = vmatpush1.bf16.msra.mxu0 %v3461
    %3763 = vmatprep.subr.bf16.mxu0 0
    %3764 = vmatpush1.bf16.msra.mxu0 %v3462
    %3765 = vmatprep.subr.bf16.mxu0 0
    %3766 = vmatpush1.bf16.msra.mxu0 %v3463
    %3767 = vmatprep.subr.bf16.mxu0 0
    %3768 = vmatpush1.bf16.msra.mxu0 %v3464
    %3769 = vmatprep.subr.bf16.mxu0 0
    %3770 = vmatpush1.bf16.msra.mxu0 %v3465
    %3771 = vmatprep.subr.bf16.mxu0 0
    %3772 = vmatpush1.bf16.msra.mxu0 %v3466
    %3773 = vmatprep.subr.bf16.mxu0 0
    %3774 = vmatpush1.bf16.msra.mxu0 %v3467
    %3775 = vmatprep.subr.bf16.mxu0 0
    %3776 = vmatpush1.bf16.msra.mxu0 0
    %3777 = vmatprep.subr.bf16.mxu0 0
    %3778 = vmatpush1.bf16.msra.mxu0 0
    %3779 = vmatprep.subr.bf16.mxu0 0
    %3780 = vmatpush1.bf16.msra.mxu0 0
    %3781 = vmatprep.subr.bf16.mxu0 0
    %3782 = vmatpush1.bf16.msra.mxu0 0
    %3783 = vmatprep.subr.bf16.mxu0 0
    %3784 = vmatpush1.bf16.msra.mxu0 0
    %3785 = vmatprep.subr.bf16.mxu0 0
    %3786 = vmatpush1.bf16.msra.mxu0 0
    %3787 = vmatprep.subr.bf16.mxu0 0
    %3788 = vmatpush1.bf16.msra.mxu0 0
    %3789 = vmatprep.subr.bf16.mxu0 0
    %3790 = vmatpush1.bf16.msra.mxu0 0
    %3791 = vmatprep.mubr.bf16.mxu0 0
    %3792 = vmatmul.mubr.bf16.gmra.mrb[0].mxu0 %v3428
    %v3793 = vpop.f32.mrb[0].mxu0
    %v3794 = vadd.f32 0.0, %v3793
    %v3795 = vpop.f32.mrb[0].mxu0
    %v3796 = vpop.f32.mrb[0].mxu0
    %v3797 = vadd.f32 0.0, %v3796
    %v3798 = vpop.f32.mrb[0].mxu0
    %3799 = vmatprep.mubr.bf16.mxu0 0
    %3800 = vmatmul.mubr.bf16.gmra.mrb[0].mxu0 %v3429
    %v3801 = vpop.f32.mrb[0].mxu0
    %v3802 = vadd.f32 0.0, %v3801
    %v3803 = vpop.f32.mrb[0].mxu0
    %v3804 = vpop.f32.mrb[0].mxu0
    %v3805 = vadd.f32 0.0, %v3804
    %v3806 = vpop.f32.mrb[0].mxu0
    %3807 = vmatprep.mubr.bf16.mxu0 0
    %3808 = vmatmul.mubr.bf16.gmra.mrb[0].mxu0 %v3430
    %v3809 = vpop.f32.mrb[0].mxu0
    %v3810 = vadd.f32 0.0, %v3809
    %v3811 = vpop.f32.mrb[0].mxu0
    %v3812 = vpop.f32.mrb[0].mxu0
    %v3813 = vadd.f32 0.0, %v3812
    %v3814 = vpop.f32.mrb[0].mxu0
    %3815 = vmatprep.mubr.bf16.mxu0 0
    %3816 = vmatmul.mubr.bf16.gmra.mrb[0].mxu0 %v3431
    %v3817 = vpop.f32.mrb[0].mxu0
    %v3818 = vadd.f32 0.0, %v3817
    %v3819 = vpop.f32.mrb[0].mxu0
    %v3820 = vpop.f32.mrb[0].mxu0
    %v3821 = vadd.f32 0.0, %v3820
    %v3822 = vpop.f32.mrb[0].mxu0
    %3823 = vmatprep.mubr.bf16.mxu0 0
    %3824 = vmatmul.mubr.bf16.gmra.mrb[0].mxu0 %v3432
    %v3825 = vpop.f32.mrb[0].mxu0
    %v3826 = vadd.f32 0.0, %v3825
    %v3827 = vpop.f32.mrb[0].mxu0
    %v3828 = vpop.f32.mrb[0].mxu0
    %v3829 = vadd.f32 0.0, %v3828
    %v3830 = vpop.f32.mrb[0].mxu0
    %3831 = vmatprep.mubr.bf16.mxu0 0
    %3832 = vmatmul.mubr.bf16.gmra.mrb[0].mxu0 %v3433
    %v3833 = vpop.f32.mrb[0].mxu0
    %v3834 = vadd.f32 0.0, %v3833
    %v3835 = vpop.f32.mrb[0].mxu0
    %v3836 = vpop.f32.mrb[0].mxu0
    %v3837 = vadd.f32 0.0, %v3836
    %v3838 = vpop.f32.mrb[0].mxu0
    %3839 = vmatprep.mubr.bf16.mxu0 0
    %3840 = vmatmul.mubr.bf16.gmra.mrb[0].mxu0 %v3434
    %v3841 = vpop.f32.mrb[0].mxu0
    %v3842 = vadd.f32 0.0, %v3841
    %v3843 = vpop.f32.mrb[0].mxu0
    %v3844 = vpop.f32.mrb[0].mxu0
    %v3845 = vadd.f32 0.0, %v3844
    %v3846 = vpop.f32.mrb[0].mxu0
    %3847 = vmatprep.mubr.bf16.mxu0 0
    %3848 = vmatmul.mubr.bf16.gmra.mrb[0].mxu0 %v3435
    %v3849 = vpop.f32.mrb[0].mxu0
    %v3850 = vadd.f32 0.0, %v3849
    %v3851 = vpop.f32.mrb[0].mxu0
    %v3852 = vpop.f32.mrb[0].mxu0
    %v3853 = vadd.f32 0.0, %v3852
    %v3854 = vpop.f32.mrb[0].mxu0
    %3855 = vdwg.mxu0
    %3872 = vrot.lane.b32.xlu0 %v3600, 4
    %v3873 = vpop.permute.xlu0 %3872
    %3874 = vrot.lane.b32.xlu0 %v3603, 4
    %v3875 = vpop.permute.xlu0 %3874
    %3876 = vrot.lane.b32.xlu0 %v3608, 4
    %v3877 = vpop.permute.xlu0 %3876
    %3878 = vrot.lane.b32.xlu0 %v3611, 4
    %v3879 = vpop.permute.xlu0 %3878
    %3880 = vrot.lane.b32.xlu0 %v3616, 4
    %v3881 = vpop.permute.xlu0 %3880
    %3882 = vrot.lane.b32.xlu0 %v3619, 4
    %v3883 = vpop.permute.xlu0 %3882
    %3884 = vrot.lane.b32.xlu0 %v3624, 4
    %v3885 = vpop.permute.xlu0 %3884
    %3886 = vrot.lane.b32.xlu0 %v3627, 4
    %v3887 = vpop.permute.xlu0 %3886
    %3888 = vrot.lane.b32.xlu0 %v3632, 4
    %v3889 = vpop.permute.xlu0 %3888
    %3890 = vrot.lane.b32.xlu0 %v3635, 4
    %v3891 = vpop.permute.xlu0 %3890
    %3892 = vrot.lane.b32.xlu0 %v3640, 4
    %v3893 = vpop.permute.xlu0 %3892
    %3894 = vrot.lane.b32.xlu0 %v3643, 4
    %v3895 = vpop.permute.xlu0 %3894
    %3896 = vrot.lane.b32.xlu0 %v3648, 4
    %v3897 = vpop.permute.xlu0 %3896
    %3898 = vrot.lane.b32.xlu0 %v3651, 4
    %v3899 = vpop.permute.xlu0 %3898
    %3900 = vrot.lane.b32.xlu0 %v3656, 4
    %v3901 = vpop.permute.xlu0 %3900
    %3902 = vrot.lane.b32.xlu0 %v3659, 4
    %v3903 = vpop.permute.xlu0 %3902
    %3936 = vrot.lane.b32.xlu0 %v3697, 8
    %v3937 = vpop.permute.xlu0 %3936
    %3938 = vrot.lane.b32.xlu0 %v3700, 8
    %v3939 = vpop.permute.xlu0 %3938
    %3940 = vrot.lane.b32.xlu0 %v3705, 8
    %v3941 = vpop.permute.xlu0 %3940
    %3942 = vrot.lane.b32.xlu0 %v3708, 8
    %v3943 = vpop.permute.xlu0 %3942
    %3944 = vrot.lane.b32.xlu0 %v3713, 8
    %v3945 = vpop.permute.xlu0 %3944
    %3946 = vrot.lane.b32.xlu0 %v3716, 8
    %v3947 = vpop.permute.xlu0 %3946
    %3948 = vrot.lane.b32.xlu0 %v3721, 8
    %v3949 = vpop.permute.xlu0 %3948
    %3950 = vrot.lane.b32.xlu0 %v3724, 8
    %v3951 = vpop.permute.xlu0 %3950
    %3952 = vrot.lane.b32.xlu0 %v3729, 8
    %v3953 = vpop.permute.xlu0 %3952
    %3954 = vrot.lane.b32.xlu0 %v3732, 8
    %v3955 = vpop.permute.xlu0 %3954
    %3956 = vrot.lane.b32.xlu0 %v3737, 8
    %v3957 = vpop.permute.xlu0 %3956
    %3958 = vrot.lane.b32.xlu0 %v3740, 8
    %v3959 = vpop.permute.xlu0 %3958
    %3960 = vrot.lane.b32.xlu0 %v3745, 8
    %v3961 = vpop.permute.xlu0 %3960
    %3962 = vrot.lane.b32.xlu0 %v3748, 8
    %v3963 = vpop.permute.xlu0 %3962
    %3964 = vrot.lane.b32.xlu0 %v3753, 8
    %v3965 = vpop.permute.xlu0 %3964
    %3966 = vrot.lane.b32.xlu0 %v3756, 8
    %v3967 = vpop.permute.xlu0 %3966
    %4000 = vrot.lane.b32.xlu0 %v3794, 12
    %v4001 = vpop.permute.xlu0 %4000
    %4002 = vrot.lane.b32.xlu0 %v3797, 12
    %v4003 = vpop.permute.xlu0 %4002
    %4004 = vrot.lane.b32.xlu0 %v3802, 12
    %v4005 = vpop.permute.xlu0 %4004
    %4006 = vrot.lane.b32.xlu0 %v3805, 12
    %v4007 = vpop.permute.xlu0 %4006
    %4008 = vrot.lane.b32.xlu0 %v3810, 12
    %v4009 = vpop.permute.xlu0 %4008
    %4010 = vrot.lane.b32.xlu0 %v3813, 12
    %v4011 = vpop.permute.xlu0 %4010
    %4012 = vrot.lane.b32.xlu0 %v3818, 12
    %v4013 = vpop.permute.xlu0 %4012
    %4014 = vrot.lane.b32.xlu0 %v3821, 12
    %v4015 = vpop.permute.xlu0 %4014
    %4016 = vrot.lane.b32.xlu0 %v3826, 12
    %v4017 = vpop.permute.xlu0 %4016
    %4018 = vrot.lane.b32.xlu0 %v3829, 12
    %v4019 = vpop.permute.xlu0 %4018
    %4020 = vrot.lane.b32.xlu0 %v3834, 12
    %v4021 = vpop.permute.xlu0 %4020
    %4022 = vrot.lane.b32.xlu0 %v3837, 12
    %v4023 = vpop.permute.xlu0 %4022
    %4024 = vrot.lane.b32.xlu0 %v3842, 12
    %v4025 = vpop.permute.xlu0 %4024
    %4026 = vrot.lane.b32.xlu0 %v3845, 12
    %v4027 = vpop.permute.xlu0 %4026
    %4028 = vrot.lane.b32.xlu0 %v3850, 12
    %v4029 = vpop.permute.xlu0 %4028
    %4030 = vrot.lane.b32.xlu0 %v3853, 12
    %v4031 = vpop.permute.xlu0 %4030
    %v4048 = vsel %vm2055, %v3503, %v3873
    %v4049 = vsel %vm2055, %v3506, %v3875
    %v4050 = vsel %vm2055, %v3511, %v3877
    %v4051 = vsel %vm2055, %v3514, %v3879
    %v4052 = vsel %vm2055, %v3519, %v3881
    %v4053 = vsel %vm2055, %v3522, %v3883
    %v4054 = vsel %vm2055, %v3527, %v3885
    %v4055 = vsel %vm2055, %v3530, %v3887
    %v4056 = vsel %vm2055, %v3535, %v3889
    %v4057 = vsel %vm2055, %v3538, %v3891
    %v4058 = vsel %vm2055, %v3543, %v3893
    %v4059 = vsel %vm2055, %v3546, %v3895
    %v4060 = vsel %vm2055, %v3551, %v3897
    %v4061 = vsel %vm2055, %v3554, %v3899
    %v4062 = vsel %vm2055, %v3559, %v3901
    %v4063 = vsel %vm2055, %v3562, %v3903
    %v4064 = vsel %vm224, %v4048, %v3937
    %v4065 = vsel %vm224, %v4049, %v3939
    %v4066 = vsel %vm224, %v4050, %v3941
    %v4067 = vsel %vm224, %v4051, %v3943
    %v4068 = vsel %vm224, %v4052, %v3945
    %v4069 = vsel %vm224, %v4053, %v3947
    %v4070 = vsel %vm224, %v4054, %v3949
    %v4071 = vsel %vm224, %v4055, %v3951
    %v4072 = vsel %vm224, %v4056, %v3953
    %v4073 = vsel %vm224, %v4057, %v3955
    %v4074 = vsel %vm224, %v4058, %v3957
    %v4075 = vsel %vm224, %v4059, %v3959
    %v4076 = vsel %vm224, %v4060, %v3961
    %v4077 = vsel %vm224, %v4061, %v3963
    %v4078 = vsel %vm224, %v4062, %v3965
    %v4079 = vsel %vm224, %v4063, %v3967
    %vm4080 = vcmask 97280
    %v4081 = vsel %vm4080, %v4064, %v4001
    %v4082 = vsel %vm4080, %v4065, %v4003
    %v4083 = vsel %vm4080, %v4066, %v4005
    %v4084 = vsel %vm4080, %v4067, %v4007
    %v4085 = vsel %vm4080, %v4068, %v4009
    %v4086 = vsel %vm4080, %v4069, %v4011
    %v4087 = vsel %vm4080, %v4070, %v4013
    %v4088 = vsel %vm4080, %v4071, %v4015
    %v4089 = vsel %vm4080, %v4072, %v4017
    %v4090 = vsel %vm4080, %v4073, %v4019
    %v4091 = vsel %vm4080, %v4074, %v4021
    %v4092 = vsel %vm4080, %v4075, %v4023
    %v4093 = vsel %vm4080, %v4076, %v4025
    %v4094 = vsel %vm4080, %v4077, %v4027
    %v4095 = vsel %vm4080, %v4078, %v4029
    %v4096 = vsel %vm4080, %v4079, %v4031
    %v4097 = vld [vmem:[%s1 + $0x40] sm:$0xf]
    %v4098 = vld [vmem:[%s1 + $0x44] sm:$0xf]
    %v4099 = vpack.c.bf16 %v4082, %v4081
    %v4100 = vpack.c.bf16 %v4084, %v4083
    %v4101 = vpack.c.bf16 %v4086, %v4085
    %v4102 = vpack.c.bf16 %v4088, %v4087
    %v4103 = vpack.c.bf16 %v4090, %v4089
    %v4104 = vpack.c.bf16 %v4092, %v4091
    %v4105 = vpack.c.bf16 %v4094, %v4093
    %v4106 = vpack.c.bf16 %v4096, %v4095
    %v4107 = vlaneseq
    %v4108 = vshrl.u32 %v4107, 7
    %v4109 = vsub.s32 3, %v4108
    %v4110 = vrot.slane %v922, %v4109
    %v4113 = vunpack.c.l.b16 %v4097
    %v4114 = vunpack.c.l.b16 %v4098
    %v4115 = vpack.c.b16 %v4114, %v4113
    %v4118 = vsel %vm987, %v4099, 0
    %v4121 = vsel %vm987, %v4100, 0
    %v4124 = vsel %vm987, %v4101, 0
    %v4127 = vsel %vm987, %v4102, 0
    %v4130 = vsel %vm987, %v4103, 0
    %v4133 = vsel %vm987, %v4104, 0
    %v4136 = vsel %vm987, %v4105, 0
    %v4139 = vsel %vm987, %v4106, 0
    %4141 = vmatprep.subr.bf16.mxu0 0
    %4142 = vmatpush1.bf16.msra.mxu0 %v4115
    %4143 = vmatprep.subr.bf16.mxu0 0
    %4144 = vmatpush1.bf16.msra.mxu0 0
    %4145 = vmatprep.subr.bf16.mxu0 0
    %4146 = vmatpush1.bf16.msra.mxu0 0
    %4147 = vmatprep.subr.bf16.mxu0 0
    %4148 = vmatpush1.bf16.msra.mxu0 0
    %4149 = vmatprep.subr.bf16.mxu0 0
    %4150 = vmatpush1.bf16.msra.mxu0 0
    %4151 = vmatprep.subr.bf16.mxu0 0
    %4152 = vmatpush1.bf16.msra.mxu0 0
    %4153 = vmatprep.subr.bf16.mxu0 0
    %4154 = vmatpush1.bf16.msra.mxu0 0
    %4155 = vmatprep.subr.bf16.mxu0 0
    %4156 = vmatpush1.bf16.msra.mxu0 0
    %4157 = vmatprep.subr.bf16.mxu0 0
    %4158 = vmatpush1.bf16.msra.mxu0 0
    %4159 = vmatprep.subr.bf16.mxu0 0
    %4160 = vmatpush1.bf16.msra.mxu0 0
    %4161 = vmatprep.subr.bf16.mxu0 0
    %4162 = vmatpush1.bf16.msra.mxu0 0
    %4163 = vmatprep.subr.bf16.mxu0 0
    %4164 = vmatpush1.bf16.msra.mxu0 0
    %4165 = vmatprep.subr.bf16.mxu0 0
    %4166 = vmatpush1.bf16.msra.mxu0 0
    %4167 = vmatprep.subr.bf16.mxu0 0
    %4168 = vmatpush1.bf16.msra.mxu0 0
    %4169 = vmatprep.subr.bf16.mxu0 0
    %4170 = vmatpush1.bf16.msra.mxu0 0
    %4171 = vmatprep.subr.bf16.mxu0 0
    %4172 = vmatpush1.bf16.msra.mxu0 0
    %4173 = vmatprep.mubr.bf16.mxu0 0
    %4174 = vmatmul.mubr.bf16.gmra.mrb[0].mxu0 %v4118
    %v4175 = vpop.f32.mrb[0].mxu0
    %v4176 = vadd.f32 %v4110, %v4175
    %v4177 = vpop.f32.mrb[0].mxu0
    %v4178 = vpop.f32.mrb[0].mxu0
    %v4179 = vadd.f32 %v4110, %v4178
    %v4180 = vpop.f32.mrb[0].mxu0
    %4181 = vmatprep.mubr.bf16.mxu0 0
    %4182 = vmatmul.mubr.bf16.gmra.mrb[0].mxu0 %v4121
    %v4183 = vpop.f32.mrb[0].mxu0
    %v4184 = vadd.f32 %v4110, %v4183
    %v4185 = vpop.f32.mrb[0].mxu0
    %v4186 = vpop.f32.mrb[0].mxu0
    %v4187 = vadd.f32 %v4110, %v4186
    %v4188 = vpop.f32.mrb[0].mxu0
    %4189 = vmatprep.mubr.bf16.mxu0 0
    %4190 = vmatmul.mubr.bf16.gmra.mrb[0].mxu0 %v4124
    %v4191 = vpop.f32.mrb[0].mxu0
    %v4192 = vadd.f32 %v4110, %v4191
    %v4193 = vpop.f32.mrb[0].mxu0
    %v4194 = vpop.f32.mrb[0].mxu0
    %v4195 = vadd.f32 %v4110, %v4194
    %v4196 = vpop.f32.mrb[0].mxu0
    %4197 = vmatprep.mubr.bf16.mxu0 0
    %4198 = vmatmul.mubr.bf16.gmra.mrb[0].mxu0 %v4127
    %v4199 = vpop.f32.mrb[0].mxu0
    %v4200 = vadd.f32 %v4110, %v4199
    %v4201 = vpop.f32.mrb[0].mxu0
    %v4202 = vpop.f32.mrb[0].mxu0
    %v4203 = vadd.f32 %v4110, %v4202
    %v4204 = vpop.f32.mrb[0].mxu0
    %4205 = vmatprep.mubr.bf16.mxu0 0
    %4206 = vmatmul.mubr.bf16.gmra.mrb[0].mxu0 %v4130
    %v4207 = vpop.f32.mrb[0].mxu0
    %v4208 = vadd.f32 %v4110, %v4207
    %v4209 = vpop.f32.mrb[0].mxu0
    %v4210 = vpop.f32.mrb[0].mxu0
    %v4211 = vadd.f32 %v4110, %v4210
    %v4212 = vpop.f32.mrb[0].mxu0
    %4213 = vmatprep.mubr.bf16.mxu0 0
    %4214 = vmatmul.mubr.bf16.gmra.mrb[0].mxu0 %v4133
    %v4215 = vpop.f32.mrb[0].mxu0
    %v4216 = vadd.f32 %v4110, %v4215
    %v4217 = vpop.f32.mrb[0].mxu0
    %v4218 = vpop.f32.mrb[0].mxu0
    %v4219 = vadd.f32 %v4110, %v4218
    %v4220 = vpop.f32.mrb[0].mxu0
    %4221 = vmatprep.mubr.bf16.mxu0 0
    %4222 = vmatmul.mubr.bf16.gmra.mrb[0].mxu0 %v4136
    %v4223 = vpop.f32.mrb[0].mxu0
    %v4224 = vadd.f32 %v4110, %v4223
    %v4225 = vpop.f32.mrb[0].mxu0
    %v4226 = vpop.f32.mrb[0].mxu0
    %v4227 = vadd.f32 %v4110, %v4226
    %v4228 = vpop.f32.mrb[0].mxu0
    %4229 = vmatprep.mubr.bf16.mxu0 0
    %4230 = vmatmul.mubr.bf16.gmra.mrb[0].mxu0 %v4139
    %v4231 = vpop.f32.mrb[0].mxu0
    %v4232 = vadd.f32 %v4110, %v4231
    %v4233 = vpop.f32.mrb[0].mxu0
    %v4234 = vpop.f32.mrb[0].mxu0
    %v4235 = vadd.f32 %v4110, %v4234
    %v4236 = vpop.f32.mrb[0].mxu0
    %4237 = vdwg.mxu0
    %4240 = vrot.lane.b32.xlu0 %v4184, 16
    %v4241 = vpop.permute.xlu0 %4240
    %4242 = vrot.lane.b32.xlu0 %v4187, 16
    %v4243 = vpop.permute.xlu0 %4242
    %4248 = vrot.lane.b32.xlu0 %v4192, 32
    %v4249 = vpop.permute.xlu0 %4248
    %4250 = vrot.lane.b32.xlu0 %v4195, 32
    %v4251 = vpop.permute.xlu0 %4250
    %4256 = vrot.lane.b32.xlu0 %v4200, 48
    %v4257 = vpop.permute.xlu0 %4256
    %4258 = vrot.lane.b32.xlu0 %v4203, 48
    %v4259 = vpop.permute.xlu0 %4258
    %4264 = vrot.lane.b32.xlu0 %v4208, 64
    %v4265 = vpop.permute.xlu0 %4264
    %4266 = vrot.lane.b32.xlu0 %v4211, 64
    %v4267 = vpop.permute.xlu0 %4266
    %4272 = vrot.lane.b32.xlu0 %v4216, 80
    %v4273 = vpop.permute.xlu0 %4272
    %4274 = vrot.lane.b32.xlu0 %v4219, 80
    %v4275 = vpop.permute.xlu0 %4274
    %4280 = vrot.lane.b32.xlu0 %v4224, 96
    %v4281 = vpop.permute.xlu0 %4280
    %4282 = vrot.lane.b32.xlu0 %v4227, 96
    %v4283 = vpop.permute.xlu0 %4282
    %4288 = vrot.lane.b32.xlu0 %v4232, 112
    %v4289 = vpop.permute.xlu0 %4288
    %4290 = vrot.lane.b32.xlu0 %v4235, 112
    %v4291 = vpop.permute.xlu0 %4290
    %v4294 = vsel %vm987, %v4176, %v4241
    %v4295 = vsel %vm987, %v4179, %v4243
    %vm4296 = vcmask 261120
    %v4297 = vsel %vm4296, %v4294, %v4249
    %v4298 = vsel %vm4296, %v4295, %v4251
    %vm4299 = vcmask 392192
    %v4300 = vsel %vm4299, %v4297, %v4257
    %v4301 = vsel %vm4299, %v4298, %v4259
    %vm4302 = vcmask 523264
    %v4303 = vsel %vm4302, %v4300, %v4265
    %v4304 = vsel %vm4302, %v4301, %v4267
    %vm4305 = vcmask 654336
    %v4306 = vsel %vm4305, %v4303, %v4273
    %v4307 = vsel %vm4305, %v4304, %v4275
    %vm4308 = vcmask 785408
    %v4309 = vsel %vm4308, %v4306, %v4281
    %v4310 = vsel %vm4308, %v4307, %v4283
    %vm4311 = vcmask 916480
    %v4312 = vsel %vm4311, %v4309, %v4289
    %v4313 = vsel %vm4311, %v4310, %v4291
    %v4314 = vld [vmem:[%s1 + $0x48] sm:$0xf]
    %v4315 = vpack.c.bf16 %v4313, %v4312
    %v4316 = vld [vmem:[#allocation2 + $0x10] sm:$0x7f]
    %4318 = vset.pattern.permute.xlu0 0
    %4319 = vperm.xlu0 %4318, %v4316
    %v4320 = vpop.permute.xlu0 %4319
    %v4323 = vsel %vm987, %v4314, 0
    %4325 = vmatprep.subr.bf16.mxu0 0
    %4326 = vmatpush1.bf16.msra.mxu0 %v4315
    %4327 = vmatprep.subr.bf16.mxu0 0
    %4328 = vmatpush1.bf16.msra.mxu0 0
    %4329 = vmatprep.subr.bf16.mxu0 0
    %4330 = vmatpush1.bf16.msra.mxu0 0
    %4331 = vmatprep.subr.bf16.mxu0 0
    %4332 = vmatpush1.bf16.msra.mxu0 0
    %4333 = vmatprep.subr.bf16.mxu0 0
    %4334 = vmatpush1.bf16.msra.mxu0 0
    %4335 = vmatprep.subr.bf16.mxu0 0
    %4336 = vmatpush1.bf16.msra.mxu0 0
    %4337 = vmatprep.subr.bf16.mxu0 0
    %4338 = vmatpush1.bf16.msra.mxu0 0
    %4339 = vmatprep.subr.bf16.mxu0 0
    %4340 = vmatpush1.bf16.msra.mxu0 0
    %4341 = vmatprep.subr.bf16.mxu0 0
    %4342 = vmatpush1.bf16.msra.mxu0 0
    %4343 = vmatprep.subr.bf16.mxu0 0
    %4344 = vmatpush1.bf16.msra.mxu0 0
    %4345 = vmatprep.subr.bf16.mxu0 0
    %4346 = vmatpush1.bf16.msra.mxu0 0
    %4347 = vmatprep.subr.bf16.mxu0 0
    %4348 = vmatpush1.bf16.msra.mxu0 0
    %4349 = vmatprep.subr.bf16.mxu0 0
    %4350 = vmatpush1.bf16.msra.mxu0 0
    %4351 = vmatprep.subr.bf16.mxu0 0
    %4352 = vmatpush1.bf16.msra.mxu0 0
    %4353 = vmatprep.subr.bf16.mxu0 0
    %4354 = vmatpush1.bf16.msra.mxu0 0
    %4355 = vmatprep.subr.bf16.mxu0 0
    %4356 = vmatpush1.bf16.msra.mxu0 0
    %4357 = vmatprep.mubr.bf16.mxu0 0
    %4358 = vmatmul.mubr.bf16.gmra.mrb[0].mxu0 %v4323
    %v4359 = vpop.f32.mrb[0].mxu0
    %v4360 = vadd.f32 %v4320, %v4359
    %v4361 = vpop.f32.mrb[0].mxu0
    %v4362 = vpop.f32.mrb[0].mxu0
    %v4363 = vpop.f32.mrb[0].mxu0
    %4364 = vdwg.mxu0
    %v4365 = vadd.f32 %v4360, %v522
    %vm4366 = vcmask 1046528
    %v4367 = vsel %vm4366, %v4365, 0.0
    %4368 = vrot.lane.b32.xlu0 %v4367, 2
    %v4369 = vpop.permute.xlu0 %4368
    %v4370 = vmul.f32 %v4369, %v73
    %4371 = vrot.lane.b32.xlu0 %v4367, 1
    %v4372 = vpop.permute.xlu0 %4371
    %v4373 = vmul.f32 %v4372, %v80
    %4374 = vrot.lane.b32.xlu0 %v4367, 127
    %v4375 = vpop.permute.xlu0 %4374
    %v4376 = vmul.f32 %v4375, %v87
    %4377 = vrot.lane.b32.xlu0 %v4367, 126
    %v4378 = vpop.permute.xlu0 %4377
    %v4379 = vmul.f32 %v4378, %v94
    %v4380 = vld [vmem:[%s1 + $0x50] sm:$0xf]
    %v4381 = vpack.c.bf16 %v4373, %v4370
    %v4382 = vpack.c.bf16 %v4376, %v4367
    %v4383 = vpack.c.bf16 %v4379, %v4379
    %v4384 = vld [vmem:[#allocation2 + $0x18] sm:$0xff]
    %4386 = vset.pattern.permute.xlu0 0
    %4387 = vperm.xlu0 %4386, %v4384
    %v4388 = vpop.permute.xlu0 %4387
    %v4391 = vsel %vm106, %v4380, 0
    %v4394 = vsel %vm66, %v4383, 0
    %4396 = vmatprep.subr.bf16.mxu0 0
    %4397 = vmatpush1.bf16.msra.mxu0 %v4381
    %4398 = vmatprep.subr.bf16.mxu0 0
    %4399 = vmatpush1.bf16.msra.mxu0 %v4382
    %4400 = vmatprep.subr.bf16.mxu0 0
    %4401 = vmatpush1.bf16.msra.mxu0 %v4394
    %4402 = vmatprep.subr.bf16.mxu0 0
    %4403 = vmatpush1.bf16.msra.mxu0 0
    %4404 = vmatprep.subr.bf16.mxu0 0
    %4405 = vmatpush1.bf16.msra.mxu0 0
    %4406 = vmatprep.subr.bf16.mxu0 0
    %4407 = vmatpush1.bf16.msra.mxu0 0
    %4408 = vmatprep.subr.bf16.mxu0 0
    %4409 = vmatpush1.bf16.msra.mxu0 0
    %4410 = vmatprep.subr.bf16.mxu0 0
    %4411 = vmatpush1.bf16.msra.mxu0 0
    %4412 = vmatprep.subr.bf16.mxu0 0
    %4413 = vmatpush1.bf16.msra.mxu0 0
    %4414 = vmatprep.subr.bf16.mxu0 0
    %4415 = vmatpush1.bf16.msra.mxu0 0
    %4416 = vmatprep.subr.bf16.mxu0 0
    %4417 = vmatpush1.bf16.msra.mxu0 0
    %4418 = vmatprep.subr.bf16.mxu0 0
    %4419 = vmatpush1.bf16.msra.mxu0 0
    %4420 = vmatprep.subr.bf16.mxu0 0
    %4421 = vmatpush1.bf16.msra.mxu0 0
    %4422 = vmatprep.subr.bf16.mxu0 0
    %4423 = vmatpush1.bf16.msra.mxu0 0
    %4424 = vmatprep.subr.bf16.mxu0 0
    %4425 = vmatpush1.bf16.msra.mxu0 0
    %4426 = vmatprep.subr.bf16.mxu0 0
    %4427 = vmatpush1.bf16.msra.mxu0 0
    %4428 = vmatprep.mubr.bf16.mxu0 0
    %4429 = vmatmul.mubr.bf16.gmra.mrb[0].mxu0 %v4391
    %v4430 = vpop.f32.mrb[0].mxu0
    %v4431 = vadd.f32 %v4388, %v4430
    %v4432 = vpop.f32.mrb[0].mxu0
    %v4433 = vpop.f32.mrb[0].mxu0
    %v4434 = vpop.f32.mrb[0].mxu0
    %4435 = vdwg.mxu0
    %v4436 = vld [vmem:[#allocation2 + $0x40] sm:$0x3]
    %4437 = vmatprep.subr.mxu0 0.0
    %4438 = vmatpush1.msra.mxu0 %v34
    %4439 = vmatprep.subr.mxu0 0.0
    %4440 = vmatpush1.msra.mxu0 %v35
    %4441 = vmatprep.subr.mxu0 0.0
    %4442 = vmatpush1.msra.mxu0 %v36
    %4443 = vmatprep.subr.mxu0 0.0
    %4444 = vmatpush1.msra.mxu0 %v37
    %4445 = vmatprep.subr.mxu0 0.0
    %4446 = vmatpush1.msra.mxu0 %v38
    %4447 = vmatprep.subr.mxu0 0.0
    %4448 = vmatpush1.msra.mxu0 %v39
    %4449 = vmatprep.subr.mxu0 0.0
    %4450 = vmatpush1.msra.mxu0 %v40
    %4451 = vmatprep.subr.mxu0 0.0
    %4452 = vmatpush1.msra.mxu0 %v41
    %4453 = vmatprep.subr.mxu0 0.0
    %4454 = vmatpush1.msra.mxu0 %v42
    %4455 = vmatprep.subr.mxu0 0.0
    %4456 = vmatpush1.msra.mxu0 %v43
    %4457 = vmatprep.subr.mxu0 0.0
    %4458 = vmatpush1.msra.mxu0 %v44
    %4459 = vmatprep.subr.mxu0 0.0
    %4460 = vmatpush1.msra.mxu0 %v45
    %4461 = vmatprep.subr.mxu0 0.0
    %4462 = vmatpush1.msra.mxu0 %v46
    %4463 = vmatprep.subr.mxu0 0.0
    %4464 = vmatpush1.msra.mxu0 %v47
    %4465 = vmatprep.subr.mxu0 0.0
    %4466 = vmatpush1.msra.mxu0 %v48
    %4467 = vmatprep.subr.mxu0 0.0
    %4468 = vmatpush1.msra.mxu0 %v49
    %4469 = vmatprep.subr.mxu0 0.0
    %4470 = vmatpush1.msra.mxu0 0.0
    %4471 = vmatprep.subr.mxu0 0.0
    %4472 = vmatpush1.msra.mxu0 0.0
    %4473 = vmatprep.subr.mxu0 0.0
    %4474 = vmatpush1.msra.mxu0 0.0
    %4475 = vmatprep.subr.mxu0 0.0
    %4476 = vmatpush1.msra.mxu0 0.0
    %4477 = vmatprep.subr.mxu0 0.0
    %4478 = vmatpush1.msra.mxu0 0.0
    %4479 = vmatprep.subr.mxu0 0.0
    %4480 = vmatpush1.msra.mxu0 0.0
    %4481 = vmatprep.subr.mxu0 0.0
    %4482 = vmatpush1.msra.mxu0 0.0
    %4483 = vmatprep.subr.mxu0 0.0
    %4484 = vmatpush1.msra.mxu0 0.0
    %4485 = vmatprep.subr.mxu0 0.0
    %4486 = vmatpush1.msra.mxu0 0.0
    %4487 = vmatprep.subr.mxu0 0.0
    %4488 = vmatpush1.msra.mxu0 0.0
    %4489 = vmatprep.subr.mxu0 0.0
    %4490 = vmatpush1.msra.mxu0 0.0
    %4491 = vmatprep.subr.mxu0 0.0
    %4492 = vmatpush1.msra.mxu0 0.0
    %4493 = vmatprep.subr.mxu0 0.0
    %4494 = vmatpush1.msra.mxu0 0.0
    %4495 = vmatprep.subr.mxu0 0.0
    %4496 = vmatpush1.msra.mxu0 0.0
    %4497 = vmatprep.subr.mxu0 0.0
    %4498 = vmatpush1.msra.mxu0 0.0
    %4499 = vmatprep.subr.mxu0 0.0
    %4500 = vmatpush1.msra.mxu0 0.0
    %4501 = vmatprep.mubr.f32.mxu0 0.0
    %4502 = vmatmul.mubr.f32.gmra.mrb[0].mxu0 %v4431
    %v4503 = vpop.f32.mrb[0].mxu0
    %v4504 = vadd.f32 0.0, %v4503
    %v4505 = vpop.f32.mrb[0].mxu0
    %4506 = vdwg.mxu0
    %v4508 = vsel %vm224, %v4504, 0
    %4510 = vmatprep.subr.mxu0 0.0
    %4511 = vmatpush1.msra.mxu0 %v33
    %4512 = vmatprep.subr.mxu0 0.0
    %4513 = vmatpush1.msra.mxu0 0.0
    %4514 = vmatprep.subr.mxu0 0.0
    %4515 = vmatpush1.msra.mxu0 0.0
    %4516 = vmatprep.subr.mxu0 0.0
    %4517 = vmatpush1.msra.mxu0 0.0
    %4518 = vmatprep.subr.mxu0 0.0
    %4519 = vmatpush1.msra.mxu0 0.0
    %4520 = vmatprep.subr.mxu0 0.0
    %4521 = vmatpush1.msra.mxu0 0.0
    %4522 = vmatprep.subr.mxu0 0.0
    %4523 = vmatpush1.msra.mxu0 0.0
    %4524 = vmatprep.subr.mxu0 0.0
    %4525 = vmatpush1.msra.mxu0 0.0
    %4526 = vmatprep.subr.mxu0 0.0
    %4527 = vmatpush1.msra.mxu0 0.0
    %4528 = vmatprep.subr.mxu0 0.0
    %4529 = vmatpush1.msra.mxu0 0.0
    %4530 = vmatprep.subr.mxu0 0.0
    %4531 = vmatpush1.msra.mxu0 0.0
    %4532 = vmatprep.subr.mxu0 0.0
    %4533 = vmatpush1.msra.mxu0 0.0
    %4534 = vmatprep.subr.mxu0 0.0
    %4535 = vmatpush1.msra.mxu0 0.0
    %4536 = vmatprep.subr.mxu0 0.0
    %4537 = vmatpush1.msra.mxu0 0.0
    %4538 = vmatprep.subr.mxu0 0.0
    %4539 = vmatpush1.msra.mxu0 0.0
    %4540 = vmatprep.subr.mxu0 0.0
    %4541 = vmatpush1.msra.mxu0 0.0
    %4542 = vmatprep.subr.mxu0 0.0
    %4543 = vmatpush1.msra.mxu0 0.0
    %4544 = vmatprep.subr.mxu0 0.0
    %4545 = vmatpush1.msra.mxu0 0.0
    %4546 = vmatprep.subr.mxu0 0.0
    %4547 = vmatpush1.msra.mxu0 0.0
    %4548 = vmatprep.subr.mxu0 0.0
    %4549 = vmatpush1.msra.mxu0 0.0
    %4550 = vmatprep.subr.mxu0 0.0
    %4551 = vmatpush1.msra.mxu0 0.0
    %4552 = vmatprep.subr.mxu0 0.0
    %4553 = vmatpush1.msra.mxu0 0.0
    %4554 = vmatprep.subr.mxu0 0.0
    %4555 = vmatpush1.msra.mxu0 0.0
    %4556 = vmatprep.subr.mxu0 0.0
    %4557 = vmatpush1.msra.mxu0 0.0
    %4558 = vmatprep.subr.mxu0 0.0
    %4559 = vmatpush1.msra.mxu0 0.0
    %4560 = vmatprep.subr.mxu0 0.0
    %4561 = vmatpush1.msra.mxu0 0.0
    %4562 = vmatprep.subr.mxu0 0.0
    %4563 = vmatpush1.msra.mxu0 0.0
    %4564 = vmatprep.subr.mxu0 0.0
    %4565 = vmatpush1.msra.mxu0 0.0
    %4566 = vmatprep.subr.mxu0 0.0
    %4567 = vmatpush1.msra.mxu0 0.0
    %4568 = vmatprep.subr.mxu0 0.0
    %4569 = vmatpush1.msra.mxu0 0.0
    %4570 = vmatprep.subr.mxu0 0.0
    %4571 = vmatpush1.msra.mxu0 0.0
    %4572 = vmatprep.subr.mxu0 0.0
    %4573 = vmatpush1.msra.mxu0 0.0
    %4574 = vmatprep.mubr.f32.mxu0 0.0
    %4575 = vmatmul.mubr.f32.gmra.mrb[0].mxu0 %v4508
    %v4576 = vpop.f32.mrb[0].mxu0
    %v4577 = vadd.f32 0.0, %v4576
    %v4578 = vpop.f32.mrb[0].mxu0
    %4579 = vdwg.mxu0
    %v4580 = vmul.f32 %v4577, 0.0625
    %v4581 = vsub.f32 %v4431, %v4580
    %v4582 = vmul.f32 %v4581, %v4581
    %4583 = vmatprep.subr.mxu0 0.0
    %4584 = vmatpush1.msra.mxu0 %v34
    %4585 = vmatprep.subr.mxu0 0.0
    %4586 = vmatpush1.msra.mxu0 %v35
    %4587 = vmatprep.subr.mxu0 0.0
    %4588 = vmatpush1.msra.mxu0 %v36
    %4589 = vmatprep.subr.mxu0 0.0
    %4590 = vmatpush1.msra.mxu0 %v37
    %4591 = vmatprep.subr.mxu0 0.0
    %4592 = vmatpush1.msra.mxu0 %v38
    %4593 = vmatprep.subr.mxu0 0.0
    %4594 = vmatpush1.msra.mxu0 %v39
    %4595 = vmatprep.subr.mxu0 0.0
    %4596 = vmatpush1.msra.mxu0 %v40
    %4597 = vmatprep.subr.mxu0 0.0
    %4598 = vmatpush1.msra.mxu0 %v41
    %4599 = vmatprep.subr.mxu0 0.0
    %4600 = vmatpush1.msra.mxu0 %v42
    %4601 = vmatprep.subr.mxu0 0.0
    %4602 = vmatpush1.msra.mxu0 %v43
    %4603 = vmatprep.subr.mxu0 0.0
    %4604 = vmatpush1.msra.mxu0 %v44
    %4605 = vmatprep.subr.mxu0 0.0
    %4606 = vmatpush1.msra.mxu0 %v45
    %4607 = vmatprep.subr.mxu0 0.0
    %4608 = vmatpush1.msra.mxu0 %v46
    %4609 = vmatprep.subr.mxu0 0.0
    %4610 = vmatpush1.msra.mxu0 %v47
    %4611 = vmatprep.subr.mxu0 0.0
    %4612 = vmatpush1.msra.mxu0 %v48
    %4613 = vmatprep.subr.mxu0 0.0
    %4614 = vmatpush1.msra.mxu0 %v49
    %4615 = vmatprep.subr.mxu0 0.0
    %4616 = vmatpush1.msra.mxu0 0.0
    %4617 = vmatprep.subr.mxu0 0.0
    %4618 = vmatpush1.msra.mxu0 0.0
    %4619 = vmatprep.subr.mxu0 0.0
    %4620 = vmatpush1.msra.mxu0 0.0
    %4621 = vmatprep.subr.mxu0 0.0
    %4622 = vmatpush1.msra.mxu0 0.0
    %4623 = vmatprep.subr.mxu0 0.0
    %4624 = vmatpush1.msra.mxu0 0.0
    %4625 = vmatprep.subr.mxu0 0.0
    %4626 = vmatpush1.msra.mxu0 0.0
    %4627 = vmatprep.subr.mxu0 0.0
    %4628 = vmatpush1.msra.mxu0 0.0
    %4629 = vmatprep.subr.mxu0 0.0
    %4630 = vmatpush1.msra.mxu0 0.0
    %4631 = vmatprep.subr.mxu0 0.0
    %4632 = vmatpush1.msra.mxu0 0.0
    %4633 = vmatprep.subr.mxu0 0.0
    %4634 = vmatpush1.msra.mxu0 0.0
    %4635 = vmatprep.subr.mxu0 0.0
    %4636 = vmatpush1.msra.mxu0 0.0
    %4637 = vmatprep.subr.mxu0 0.0
    %4638 = vmatpush1.msra.mxu0 0.0
    %4639 = vmatprep.subr.mxu0 0.0
    %4640 = vmatpush1.msra.mxu0 0.0
    %4641 = vmatprep.subr.mxu0 0.0
    %4642 = vmatpush1.msra.mxu0 0.0
    %4643 = vmatprep.subr.mxu0 0.0
    %4644 = vmatpush1.msra.mxu0 0.0
    %4645 = vmatprep.subr.mxu0 0.0
    %4646 = vmatpush1.msra.mxu0 0.0
    %4647 = vmatprep.mubr.f32.mxu0 0.0
    %4648 = vmatmul.mubr.f32.gmra.mrb[0].mxu0 %v4582
    %v4649 = vpop.f32.mrb[0].mxu0
    %v4650 = vadd.f32 0.0, %v4649
    %v4651 = vpop.f32.mrb[0].mxu0
    %4652 = vdwg.mxu0
    %v4654 = vsel %vm224, %v4650, 0
    %4656 = vmatprep.subr.mxu0 0.0
    %4657 = vmatpush1.msra.mxu0 %v33
    %4658 = vmatprep.subr.mxu0 0.0
    %4659 = vmatpush1.msra.mxu0 0.0
    %4660 = vmatprep.subr.mxu0 0.0
    %4661 = vmatpush1.msra.mxu0 0.0
    %4662 = vmatprep.subr.mxu0 0.0
    %4663 = vmatpush1.msra.mxu0 0.0
    %4664 = vmatprep.subr.mxu0 0.0
    %4665 = vmatpush1.msra.mxu0 0.0
    %4666 = vmatprep.subr.mxu0 0.0
    %4667 = vmatpush1.msra.mxu0 0.0
    %4668 = vmatprep.subr.mxu0 0.0
    %4669 = vmatpush1.msra.mxu0 0.0
    %4670 = vmatprep.subr.mxu0 0.0
    %4671 = vmatpush1.msra.mxu0 0.0
    %4672 = vmatprep.subr.mxu0 0.0
    %4673 = vmatpush1.msra.mxu0 0.0
    %4674 = vmatprep.subr.mxu0 0.0
    %4675 = vmatpush1.msra.mxu0 0.0
    %4676 = vmatprep.subr.mxu0 0.0
    %4677 = vmatpush1.msra.mxu0 0.0
    %4678 = vmatprep.subr.mxu0 0.0
    %4679 = vmatpush1.msra.mxu0 0.0
    %4680 = vmatprep.subr.mxu0 0.0
    %4681 = vmatpush1.msra.mxu0 0.0
    %4682 = vmatprep.subr.mxu0 0.0
    %4683 = vmatpush1.msra.mxu0 0.0
    %4684 = vmatprep.subr.mxu0 0.0
    %4685 = vmatpush1.msra.mxu0 0.0
    %4686 = vmatprep.subr.mxu0 0.0
    %4687 = vmatpush1.msra.mxu0 0.0
    %4688 = vmatprep.subr.mxu0 0.0
    %4689 = vmatpush1.msra.mxu0 0.0
    %4690 = vmatprep.subr.mxu0 0.0
    %4691 = vmatpush1.msra.mxu0 0.0
    %4692 = vmatprep.subr.mxu0 0.0
    %4693 = vmatpush1.msra.mxu0 0.0
    %4694 = vmatprep.subr.mxu0 0.0
    %4695 = vmatpush1.msra.mxu0 0.0
    %4696 = vmatprep.subr.mxu0 0.0
    %4697 = vmatpush1.msra.mxu0 0.0
    %4698 = vmatprep.subr.mxu0 0.0
    %4699 = vmatpush1.msra.mxu0 0.0
    %4700 = vmatprep.subr.mxu0 0.0
    %4701 = vmatpush1.msra.mxu0 0.0
    %4702 = vmatprep.subr.mxu0 0.0
    %4703 = vmatpush1.msra.mxu0 0.0
    %4704 = vmatprep.subr.mxu0 0.0
    %4705 = vmatpush1.msra.mxu0 0.0
    %4706 = vmatprep.subr.mxu0 0.0
    %4707 = vmatpush1.msra.mxu0 0.0
    %4708 = vmatprep.subr.mxu0 0.0
    %4709 = vmatpush1.msra.mxu0 0.0
    %4710 = vmatprep.subr.mxu0 0.0
    %4711 = vmatpush1.msra.mxu0 0.0
    %4712 = vmatprep.subr.mxu0 0.0
    %4713 = vmatpush1.msra.mxu0 0.0
    %4714 = vmatprep.subr.mxu0 0.0
    %4715 = vmatpush1.msra.mxu0 0.0
    %4716 = vmatprep.subr.mxu0 0.0
    %4717 = vmatpush1.msra.mxu0 0.0
    %4718 = vmatprep.subr.mxu0 0.0
    %4719 = vmatpush1.msra.mxu0 0.0
    %4720 = vmatprep.mubr.f32.mxu0 0.0
    %4721 = vmatmul.mubr.f32.gmra.mrb[0].mxu0 %v4654
    %v4722 = vpop.f32.mrb[0].mxu0
    %v4723 = vadd.f32 0.0, %v4722
    %v4724 = vpop.f32.mrb[0].mxu0
    %4725 = vdwg.mxu0
    %v4726 = vmul.f32 %v4723, 0.0625
    %v4727 = vadd.f32 %v4726, 1e-05
    %v4728 = vrsqrt.pop %v4727
    %v4729 = vmul.f32 %v4581, %v4728
    %v4730 = vlaneseq
    %v4731 = vshrl.u32 %v4730, 7
    %v4732 = vsub.s32 0, %v4731
    %v4733 = vrot.slane %v4436, %v4732
    %v4734 = vmul.f32 %v4729, %v4733
    %v4735 = vlaneseq
    %v4736 = vshrl.u32 %v4735, 7
    %v4737 = vsub.s32 1, %v4736
    %v4738 = vrot.slane %v4436, %v4737
    %v4739 = vadd.f32 %v4734, %v4738
    %v4740 = vmax.f32 %v4739, 0.0
    %v4741 = vand.u32 2147483647, %v4739
    %v4742 = vsub.f32 0.0, %v4741
    %v4743 = vmul.f32 %v4742, 1.442695
    %v4744 = vpow.pop %v4743
    %v4745 = vadd.f32 %v4744, 1.0
    %v4746 = vlog2.pop %v4745
    %v4747 = vmul.f32 %v4746, 0.6931472
    %v4748 = vadd.f32 %v4740, %v4747
    %v4749 = vtanh.pop %v4748
    %v4750 = vmul.f32 %v4739, %v4749
    %v4751 = vld [vmem:[%s1 + $0x58] sm:$0xf]
    %v4752 = vpack.c.bf16 %v31, %v31
    %v4754 = vsel %vm2055, %v4751, 0
    %vm4756 = vcmask 1041408
    %v4758 = vsel %vm4756, %v4752, 0
    %4760 = vmatprep.subr.bf16.mxu0 0
    %4761 = vmatpush1.bf16.msra.mxu0 %v4758
    %4762 = vmatprep.subr.bf16.mxu0 0
    %4763 = vmatpush1.bf16.msra.mxu0 0
    %4764 = vmatprep.subr.bf16.mxu0 0
    %4765 = vmatpush1.bf16.msra.mxu0 0
    %4766 = vmatprep.subr.bf16.mxu0 0
    %4767 = vmatpush1.bf16.msra.mxu0 0
    %4768 = vmatprep.subr.bf16.mxu0 0
    %4769 = vmatpush1.bf16.msra.mxu0 0
    %4770 = vmatprep.subr.bf16.mxu0 0
    %4771 = vmatpush1.bf16.msra.mxu0 0
    %4772 = vmatprep.subr.bf16.mxu0 0
    %4773 = vmatpush1.bf16.msra.mxu0 0
    %4774 = vmatprep.subr.bf16.mxu0 0
    %4775 = vmatpush1.bf16.msra.mxu0 0
    %4776 = vmatprep.subr.bf16.mxu0 0
    %4777 = vmatpush1.bf16.msra.mxu0 0
    %4778 = vmatprep.subr.bf16.mxu0 0
    %4779 = vmatpush1.bf16.msra.mxu0 0
    %4780 = vmatprep.subr.bf16.mxu0 0
    %4781 = vmatpush1.bf16.msra.mxu0 0
    %4782 = vmatprep.subr.bf16.mxu0 0
    %4783 = vmatpush1.bf16.msra.mxu0 0
    %4784 = vmatprep.subr.bf16.mxu0 0
    %4785 = vmatpush1.bf16.msra.mxu0 0
    %4786 = vmatprep.subr.bf16.mxu0 0
    %4787 = vmatpush1.bf16.msra.mxu0 0
    %4788 = vmatprep.subr.bf16.mxu0 0
    %4789 = vmatpush1.bf16.msra.mxu0 0
    %4790 = vmatprep.subr.bf16.mxu0 0
    %4791 = vmatpush1.bf16.msra.mxu0 0
    %4792 = vmatprep.mubr.bf16.mxu0 0
    %4793 = vmatmul.mubr.bf16.gmra.mrb[0].mxu0 %v4754
    %v4794 = vpop.f32.mrb[0].mxu0
    %v4795 = vadd.f32 0.0, %v4794
    %v4796 = vpop.f32.mrb[0].mxu0
    %v4797 = vpop.f32.mrb[0].mxu0
    %v4798 = vpop.f32.mrb[0].mxu0
    %4799 = vdwg.mxu0
    %v4800 = vadd.f32 %v4750, %v4795
    %v4801 = vld [vmem:[#allocation2 + $0x20] sm:$0xff]
    %4803 = vset.pattern.permute.xlu0 0
    %4804 = vperm.xlu0 %4803, %v4801
    %v4805 = vpop.permute.xlu0 %4804
    %v4807 = vadd.f32 %v4800, %v4805
    %4808 = vst [vmem:[%s3] sm:$0xff] %v4807
    %4809 = vrot.lane.b32.xlu0 %v4807, 1
    %v4810 = vpop.permute.xlu0 %4809
    %v4811 = vmul.f32 %v4810, %v80
    %4812 = vrot.lane.b32.xlu0 %v4807, 127
    %v4813 = vpop.permute.xlu0 %4812
    %v4814 = vmul.f32 %v4813, %v87
    %v4815 = vld [vmem:[%s1 + $0x60] sm:$0xf]
    %v4816 = vpack.c.bf16 %v4807, %v4811
    %v4817 = vpack.c.bf16 %v4814, %v4814
    %v4818 = vld [vmem:[#allocation2 + $0x28] sm:$0xff]
    %4820 = vset.pattern.permute.xlu0 0
    %4821 = vperm.xlu0 %4820, %v4818
    %v4822 = vpop.permute.xlu0 %4821
    %vm4824 = vcmask 195584
    %v4826 = vsel %vm4824, %v4815, 0
    %v4829 = vsel %vm66, %v4817, 0
    %4831 = vmatprep.subr.bf16.mxu0 0
    %4832 = vmatpush1.bf16.msra.mxu0 %v4816
    %4833 = vmatprep.subr.bf16.mxu0 0
    %4834 = vmatpush1.bf16.msra.mxu0 %v4829
    %4835 = vmatprep.subr.bf16.mxu0 0
    %4836 = vmatpush1.bf16.msra.mxu0 0
    %4837 = vmatprep.subr.bf16.mxu0 0
    %4838 = vmatpush1.bf16.msra.mxu0 0
    %4839 = vmatprep.subr.bf16.mxu0 0
    %4840 = vmatpush1.bf16.msra.mxu0 0
    %4841 = vmatprep.subr.bf16.mxu0 0
    %4842 = vmatpush1.bf16.msra.mxu0 0
    %4843 = vmatprep.subr.bf16.mxu0 0
    %4844 = vmatpush1.bf16.msra.mxu0 0
    %4845 = vmatprep.subr.bf16.mxu0 0
    %4846 = vmatpush1.bf16.msra.mxu0 0
    %4847 = vmatprep.subr.bf16.mxu0 0
    %4848 = vmatpush1.bf16.msra.mxu0 0
    %4849 = vmatprep.subr.bf16.mxu0 0
    %4850 = vmatpush1.bf16.msra.mxu0 0
    %4851 = vmatprep.subr.bf16.mxu0 0
    %4852 = vmatpush1.bf16.msra.mxu0 0
    %4853 = vmatprep.subr.bf16.mxu0 0
    %4854 = vmatpush1.bf16.msra.mxu0 0
    %4855 = vmatprep.subr.bf16.mxu0 0
    %4856 = vmatpush1.bf16.msra.mxu0 0
    %4857 = vmatprep.subr.bf16.mxu0 0
    %4858 = vmatpush1.bf16.msra.mxu0 0
    %4859 = vmatprep.subr.bf16.mxu0 0
    %4860 = vmatpush1.bf16.msra.mxu0 0
    %4861 = vmatprep.subr.bf16.mxu0 0
    %4862 = vmatpush1.bf16.msra.mxu0 0
    %4863 = vmatprep.mubr.bf16.mxu0 0
    %4864 = vmatmul.mubr.bf16.gmra.mrb[0].mxu0 %v4826
    %v4865 = vpop.f32.mrb[0].mxu0
    %v4866 = vadd.f32 %v4822, %v4865
    %v4867 = vpop.f32.mrb[0].mxu0
    %v4868 = vpop.f32.mrb[0].mxu0
    %v4869 = vpop.f32.mrb[0].mxu0
    %4870 = vdwg.mxu0
    %4871 = vst [vmem:[%s4] sm:$0xff] %v4866
    // Predicated region
    $region18: #{forward.1} parent=1 // pred_check
      _
    $region19: #{forward.1} parent=1 // pred_check_branch
      %4873 = sbr.rel (0) target = $region21
    $region20: #{forward.1} parent=1 // pred_region
      _
    $region21: #{forward.1} parent=1 // pred_fallthru
      _
    // Predicated region
    $region22: #{forward.1} parent=1 // pred_check
      _
    $region23: #{forward.1} parent=1 // pred_check_branch
      %4875 = sbr.rel (0) target = $region25
    $region24: #{forward.1} parent=1 // pred_region
      _
    $region25: #{forward.1} parent=1 // pred_fallthru
      _
    // Predicated region
    $region26: #{forward.1} parent=1 // pred_check
      _
    $region27: #{forward.1} parent=1 // pred_check_branch
      %4877 = sbr.rel (0) target = $region29
    $region28: #{forward.1} parent=1 // pred_region
      _
    $region29: #{forward.1} parent=1 // pred_fallthru
      _
    // Predicated region
    $region30: #{forward.1} parent=1 // pred_check
      _
    $region31: #{forward.1} parent=1 // pred_check_branch
      %4879 = sbr.rel (0) target = $region33
    $region32: #{forward.1} parent=1 // pred_region
      _
    $region33: #{forward.1} parent=1 // pred_fallthru
      _
    %4880 = vsyncpa [#allocation3], 1

</llo_original>
